<compile_context>
chip_gen: v5e
topology: v5e:2x2
jax: 0.10.0
libtpu: 0.0.40
codegen_flags: <defaults>
</compile_context>

<pallas_src>
import functools

import jax
import jax.numpy as jnp
from jax.experimental import pallas as pl
from jax.experimental.pallas import tpu as pltpu

IN_FEATURES = 1290
F_PAD = 1408            # 11 * 128, lane/K aligned
HEAD_PAD = 128          # heads padded to a full lane width (cols 0/1 = valence/arousal)
BN_EPS = 1e-5
LEAKY_SLOPE = 0.01      # nn.LeakyReLU default


def _round_up(x, m):
    return ((x + m - 1) // m) * m


def _va_kernel(x_ref, wh_ref, bh_ref, whd_ref, bhd_ref, out_ref):
    # hidden Linear with BN already folded into (wh, bh); f32 MXU accumulation.
    h = jnp.dot(x_ref[...], wh_ref[...], preferred_element_type=jnp.float32)
    h = h + bh_ref[...]
    # LeakyReLU
    h = jnp.where(h >= 0, h, LEAKY_SLOPE * h)
    # Dropout(p=0.55): identity in eval mode.
    # TODO(synk): training-mode dropout (random mask + 1/(1-p) scale) not implemented.

    # fused valence/arousal heads (single matmul, tanh once).
    h = h.astype(whd_ref.dtype)
    y = jnp.dot(h, whd_ref[...], preferred_element_type=jnp.float32) + bhd_ref[...]
    out_ref[...] = jnp.tanh(y).astype(out_ref.dtype)


def prepare_params(params, compute_dtype=jnp.bfloat16):
    """One-time param prep: fold BN, fuse heads, pad to 128-aligned shapes, cast."""
    F = IN_FEATURES
    scale = params["bn_gamma"] * jax.lax.rsqrt(params["bn_running_var"] + BN_EPS)   # (F,)

    # y_bn = (x @ W.T + b - mean) * scale + beta  ==  x @ (W.T * scale) + ((b - mean)*scale + beta)
    wh_t = params["hidden_w"].T * scale[None, :]                                     # (F_in, F_out)
    bh = (params["hidden_b"] - params["bn_running_mean"]) * scale + params["bn_beta"]  # (F,)

    # fuse the two (1, F) heads into one (F, 2) weight / (2,) bias.
    w_heads = jnp.concatenate([params["valence_w"], params["arousal_w"]], axis=0).T  # (F, 2)
    b_heads = jnp.concatenate([params["valence_b"], params["arousal_b"]], axis=0)    # (2,)

    # zero-pad to 128-aligned shapes (padded hidden cols -> 0 bias, zero head rows -> no effect).
    wh_t = jnp.pad(wh_t, ((0, F_PAD - F), (0, F_PAD - F)))
    bh = jnp.pad(bh, (0, F_PAD - F)).reshape(1, F_PAD)
    w_heads = jnp.pad(w_heads, ((0, F_PAD - F), (0, HEAD_PAD - 2)))
    b_heads = jnp.pad(b_heads, (0, HEAD_PAD - 2)).reshape(1, HEAD_PAD)

    return {
        "wh": wh_t.astype(compute_dtype),       # matmul operands in compute dtype
        "bh": bh.astype(jnp.float32),           # biases stay f32 (added to f32 accumulators)
        "wheads": w_heads.astype(compute_dtype),
        "bheads": b_heads.astype(jnp.float32),
    }


@functools.partial(jax.jit, static_argnames=("block_b",))
def valence_arousal(x, prepared, block_b=256):
    B, F = x.shape
    assert F == IN_FEATURES
    compute_dtype = prepared["wh"].dtype

    # effective batch tile: multiple of 8, no larger than (padded) B.
    bb = min(block_b, _round_up(B, 8))
    bb = max(_round_up(bb, 8), 8)
    B_pad = _round_up(B, bb)

    x_pad = jnp.pad(x, ((0, B_pad - B), (0, F_PAD - F))).astype(compute_dtype)

    grid = (B_pad // bb,)

    row_spec = pl.BlockSpec((bb, F_PAD), lambda i: (i, 0))
    full = lambda shape: pl.BlockSpec(shape, lambda i: (0, 0))   # grid-invariant params
    out_spec = pl.BlockSpec((bb, HEAD_PAD), lambda i: (i, 0))

    # VMEM budget computed from the actual (double-buffered) block sizes, capped for v7x.
    # NOTE: the (F_PAD, F_PAD) weight is grid-invariant; Pallas only DMAs it once, the
    # second buffer is just headroom (kept default-buffered for compile robustness).
    itemsize = jnp.dtype(compute_dtype).itemsize
    vmem_need = 2 * (
        bb * F_PAD * itemsize              # x tile
        + F_PAD * F_PAD * itemsize         # hidden weight (BN folded)
        + 8 * F_PAD * 4                    # hidden bias (sublane-padded)
        + F_PAD * HEAD_PAD * itemsize      # fused head weight
        + 8 * HEAD_PAD * 4                 # fused head bias
        + bb * HEAD_PAD * 4                # output tile
    )
    vmem_limit = min(48 * 1024 * 1024, int(1.5 * vmem_need) + (4 << 20))

    out = pl.pallas_call(
        _va_kernel,
        grid=grid,
        in_specs=[
            row_spec,                        # x
            full((F_PAD, F_PAD)),            # hidden weight (transposed, BN folded)
            full((1, F_PAD)),                # hidden bias (BN folded)
            full((F_PAD, HEAD_PAD)),         # fused head weight
            full((1, HEAD_PAD)),             # fused head bias
        ],
        out_specs=out_spec,
        out_shape=jax.ShapeDtypeStruct((B_pad, HEAD_PAD), jnp.float32),
        compiler_params=pltpu.CompilerParams(
            dimension_semantics=("parallel",),
            vmem_limit_bytes=vmem_limit,
        ),
    )(x_pad, prepared["wh"], prepared["bh"], prepared["wheads"], prepared["bheads"])

    valence = out[:B, 0:1]
    arousal = out[:B, 1:2]
    return valence, arousal


def init_params(key):
    """Deterministic parameter init mimicking PyTorch nn.Linear / BatchNorm1d defaults."""
    F = IN_FEATURES
    keys = jax.random.split(key, 6)
    bound_h = 1.0 / jnp.sqrt(F)
    return {
        "hidden_w": jax.random.uniform(keys[0], (F, F), jnp.float32, -bound_h, bound_h),
        "hidden_b": jax.random.uniform(keys[1], (F,), jnp.float32, -bound_h, bound_h),
        "bn_gamma": jnp.ones((F,), jnp.float32),
        "bn_beta": jnp.zeros((F,), jnp.float32),
        "bn_running_mean": jnp.zeros((F,), jnp.float32),
        "bn_running_var": jnp.ones((F,), jnp.float32),
        "valence_w": jax.random.uniform(keys[2], (1, F), jnp.float32, -bound_h, bound_h),
        "valence_b": jax.random.uniform(keys[3], (1,), jnp.float32, -bound_h, bound_h),
        "arousal_w": jax.random.uniform(keys[4], (1, F), jnp.float32, -bound_h, bound_h),
        "arousal_b": jax.random.uniform(keys[5], (1,), jnp.float32, -bound_h, bound_h),
    }


def reference_forward(x, params):
    """Plain-JAX reference (eval mode) for sanity check."""
    h = jnp.dot(x, params["hidden_w"].T, precision="highest") + params["hidden_b"]
    h = (h - params["bn_running_mean"]) * jax.lax.rsqrt(params["bn_running_var"] + BN_EPS)
    h = h * params["bn_gamma"] + params["bn_beta"]
    h = jnp.where(h >= 0, h, LEAKY_SLOPE * h)
    v = jnp.tanh(jnp.dot(h, params["valence_w"].T, precision="highest") + params["valence_b"])
    a = jnp.tanh(jnp.dot(h, params["arousal_w"].T, precision="highest") + params["arousal_b"])
    return v, a


if __name__ == "__main__":
    key = jax.random.PRNGKey(0)
    k_x, k_p = jax.random.split(key)

    B = 8
    x = jax.random.normal(k_x, (B, IN_FEATURES), jnp.float32)
    params = init_params(k_p)
    v_ref, a_ref = reference_forward(x, params)

    # f32 compute path (tight tolerance; recommended on v5e).
    prep_f32 = prepare_params(params, compute_dtype=jnp.float32)
    val, aro = valence_arousal(x, prep_f32, block_b=128)
    jax.block_until_ready((val, aro))
    assert val.shape == (B, 1) and aro.shape == (B, 1)
    assert jnp.allclose(val, v_ref, atol=1e-4, rtol=1e-4)
    assert jnp.allclose(aro, a_ref, atol=1e-4, rtol=1e-4)

    # bf16 compute path (recommended on v6e/v7x MXU) — f32 accumulation, looser tolerance.
    prep_bf16 = prepare_params(params, compute_dtype=jnp.bfloat16)
    val16, aro16 = valence_arousal(x, prep_bf16, block_b=256)
    jax.block_until_ready((val16, aro16))
    assert val16.shape == (B, 1) and aro16.shape == (B, 1)
    assert jnp.allclose(val16, v_ref, atol=3e-2, rtol=3e-2)
    assert jnp.allclose(aro16, a_ref, atol=3e-2, rtol=3e-2)

    print("KERNEL_OK")
</pallas_src>

<mosaic_0001>
module attributes {stable_mosaic.version = 11 : i64} {
  func.func @_va_kernel(%arg0: i32, %arg1: memref<8x1408xf32, #tpu.memory_space<vmem>>, %arg2: memref<1408x1408xf32, #tpu.memory_space<vmem>>, %arg3: memref<1x1408xf32, #tpu.memory_space<vmem>>, %arg4: memref<1408x128xf32, #tpu.memory_space<vmem>>, %arg5: memref<1x128xf32, #tpu.memory_space<vmem>>, %arg6: memref<8x128xf32, #tpu.memory_space<vmem>>) attributes {dimension_semantics = [#tpu.dimension_semantics<parallel>], iteration_bounds = array<i64: 1>, scalar_prefetch = 0 : i64, scratch_operands = 0 : i64, tpu.core_type = #tpu.core_type<tc>, window_params = [{transform_indices = @transform_0, window_bounds = array<i64: 8, 1408>}, {pipeline_mode = #tpu.pipeline_mode<synchronous>, transform_indices = @transform_1, window_bounds = array<i64: 1408, 1408>}, {pipeline_mode = #tpu.pipeline_mode<synchronous>, transform_indices = @transform_2, window_bounds = array<i64: 1, 1408>}, {pipeline_mode = #tpu.pipeline_mode<synchronous>, transform_indices = @transform_3, window_bounds = array<i64: 1408, 128>}, {pipeline_mode = #tpu.pipeline_mode<synchronous>, transform_indices = @transform_4, window_bounds = array<i64: 1, 128>}, {transform_indices = @transform_5, window_bounds = array<i64: 8, 128>}]} {
    %c0 = arith.constant 0 : index
    %c0_0 = arith.constant 0 : index
    %0 = vector.load %arg1[%c0, %c0_0] : memref<8x1408xf32, #tpu.memory_space<vmem>>, vector<8x1408xf32>
    %c0_1 = arith.constant 0 : index
    %c0_2 = arith.constant 0 : index
    %1 = vector.load %arg2[%c0_1, %c0_2] : memref<1408x1408xf32, #tpu.memory_space<vmem>>, vector<1408x1408xf32>
    %cst = arith.constant dense<0.000000e+00> : vector<8x1408xf32>
    %2 = tpu.matmul %0, %1, %cst {dimension_numbers = #tpu.dot_dimension_numbers<[1], [0], [0], [1], [0, 0, 1, 1], [], []>} : vector<8x1408xf32>, vector<1408x1408xf32>, vector<8x1408xf32> -> vector<8x1408xf32>
    %c0_3 = arith.constant 0 : index
    %c0_4 = arith.constant 0 : index
    %3 = vector.load %arg3[%c0_3, %c0_4] : memref<1x1408xf32, #tpu.memory_space<vmem>>, vector<1x1408xf32>
    %4 = vector.broadcast %3 : vector<1x1408xf32> to vector<8x1408xf32>
    %5 = arith.addf %2, %4 : vector<8x1408xf32>
    %cst_5 = arith.constant 0.000000e+00 : f32
    %6 = vector.broadcast %cst_5 : f32 to vector<8x1408xf32>
    %7 = arith.cmpf oge, %5, %6 : vector<8x1408xf32>
    %cst_6 = arith.constant 0.00999999977 : f32
    %8 = vector.broadcast %cst_6 : f32 to vector<8x1408xf32>
    %9 = arith.mulf %8, %5 : vector<8x1408xf32>
    %10 = arith.select %7, %5, %9 : vector<8x1408xi1>, vector<8x1408xf32>
    %c0_7 = arith.constant 0 : index
    %c0_8 = arith.constant 0 : index
    %11 = vector.load %arg4[%c0_7, %c0_8] : memref<1408x128xf32, #tpu.memory_space<vmem>>, vector<1408x128xf32>
    %cst_9 = arith.constant dense<0.000000e+00> : vector<8x128xf32>
    %12 = tpu.matmul %10, %11, %cst_9 {dimension_numbers = #tpu.dot_dimension_numbers<[1], [0], [0], [1], [0, 0, 1, 1], [], []>} : vector<8x1408xf32>, vector<1408x128xf32>, vector<8x128xf32> -> vector<8x128xf32>
    %c0_10 = arith.constant 0 : index
    %c0_11 = arith.constant 0 : index
    %13 = vector.load %arg5[%c0_10, %c0_11] : memref<1x128xf32, #tpu.memory_space<vmem>>, vector<1x128xf32>
    %14 = vector.broadcast %13 : vector<1x128xf32> to vector<8x128xf32>
    %15 = arith.addf %12, %14 : vector<8x128xf32>
    %16 = math.tanh %15 : vector<8x128xf32>
    %c0_12 = arith.constant 0 : index
    %c0_13 = arith.constant 0 : index
    %17 = vector.load %arg6[%c0_12, %c0_13] : memref<8x128xf32, #tpu.memory_space<vmem>>, vector<8x128xf32>
    tpu.vector_store %arg6[%c0_12, %c0_13], %16 {strides = array<i32>} : memref<8x128xf32, #tpu.memory_space<vmem>>, vector<8x128xf32>,
    return
  }
  func.func @transform_0(%arg0: i32) -> (i32, i32) {
    %c0_i32 = arith.constant 0 : i32
    %c0_i32_0 = arith.constant 0 : i32
    return %arg0, %c0_i32 : i32, i32
  }
  func.func @transform_1(%arg0: i32) -> (i32, i32) {
    %c0_i32 = arith.constant 0 : i32
    %c0_i32_0 = arith.constant 0 : i32
    %c0_i32_1 = arith.constant 0 : i32
    return %c0_i32, %c0_i32_0 : i32, i32
  }
  func.func @transform_2(%arg0: i32) -> (i32, i32) {
    %c0_i32 = arith.constant 0 : i32
    %c0_i32_0 = arith.constant 0 : i32
    %c0_i32_1 = arith.constant 0 : i32
    return %c0_i32, %c0_i32_0 : i32, i32
  }
  func.func @transform_3(%arg0: i32) -> (i32, i32) {
    %c0_i32 = arith.constant 0 : i32
    %c0_i32_0 = arith.constant 0 : i32
    %c0_i32_1 = arith.constant 0 : i32
    return %c0_i32, %c0_i32_0 : i32, i32
  }
  func.func @transform_4(%arg0: i32) -> (i32, i32) {
    %c0_i32 = arith.constant 0 : i32
    %c0_i32_0 = arith.constant 0 : i32
    %c0_i32_1 = arith.constant 0 : i32
    return %c0_i32, %c0_i32_0 : i32, i32
  }
  func.func @transform_5(%arg0: i32) -> (i32, i32) {
    %c0_i32 = arith.constant 0 : i32
    %c0_i32_0 = arith.constant 0 : i32
    return %arg0, %c0_i32 : i32, i32
  }
}

</mosaic_0001>

<llo_original>
// kernel: valence_arousal.1
$region0: #{valence_arousal.1}
  #allocation0 [shape = 'u32[]', space=smem, size = 0x4, offset = 0x4, fixed_abs, tag = 'smem constant byte address 0x4 - core index']
  #allocation1 [shape = 'u32[72,128]{1,0:T(1,128)}', space=vmem, size = 0x9000, scoped, tag = 'internal scratch']
  %s0 = inlined_call_operand.vmem [shape: f32[8,1408], index: 0, kind: input, shape index: {}]
  %s1 = inlined_call_operand.hbm [shape: f32[1408,1408], index: 1, kind: input, shape index: {}]
  %s2 = inlined_call_operand.hbm [shape: f32[1,1408], index: 2, kind: input, shape index: {}]
  %s3 = inlined_call_operand.hbm [shape: f32[1408,128], index: 3, kind: input, shape index: {}]
  %s4 = inlined_call_operand.hbm [shape: f32[1,128], index: 4, kind: input, shape index: {}]
  %s5 = inlined_call_operand.vmem [shape: f32[8,128], index: 5, kind: output, shape index: {}]
  %s6 = sld [smem:[#allocation0]]
  $region46: #{valence_arousal.1} parent=0
    _
  %s8 = ssub.s32 1, %s6
  %s9 = scalar_select 0, %s8, %s6
  $region1: #{valence_arousal.1} parent=0
    #allocation2 [shape = 'u8[7929856]{0}', space=vmem, size = 0x790000, scoped, tag = 'input window, operand 1, single buffered']
    #allocation3 [shape = 's32[1]{0}', space=sflag, size = 0x4, scoped, tag = 'scoped memory for valence_arousal.1']
    #allocation4 [shape = 'u8[5632]{0}', space=vmem, size = 0x1800, scoped, tag = 'input window, operand 2, single buffered']
    #allocation5 [shape = 's32[1]{0}', space=sflag, size = 0x4, scoped, tag = 'scoped memory for valence_arousal.1']
    #allocation6 [shape = 'u8[720896]{0}', space=vmem, size = 0xb0000, scoped, tag = 'input window, operand 3, single buffered']
    #allocation7 [shape = 'u8[512]{0}', space=vmem, size = 0x400, scoped, tag = 'input window, operand 4, single buffered']
    #allocation8 [shape = 's32[1]{0}', space=sflag, size = 0x4, scoped, tag = 'scoped memory for valence_arousal.1']
    %10 = vsyncpa [#allocation3], 0
    %11 = vsyncpa [#allocation5], 0
    %12 = vsyncpa [#allocation8], 0
    // Predicated region
    $region2: #{valence_arousal.1} parent=1 // pred_check
      _
    $region3: #{valence_arousal.1} parent=1 // pred_check_branch
      %14 = sbr.rel (0) target = $region5
    $region4: #{valence_arousal.1} parent=1 // pred_region
      _
    $region5: #{valence_arousal.1} parent=1 // pred_fallthru
      _
    // Predicated region
    $region6: #{valence_arousal.1} parent=1 // pred_check
      _
    $region7: #{valence_arousal.1} parent=1 // pred_check_branch
      %16 = sbr.rel (0) target = $region9
    $region8: #{valence_arousal.1} parent=1 // pred_region
      %18 = vsyncadd [#allocation3], 0
      %s19 = sshll.u32 %s1, 4
      %s20 = int_to_ptr.hbm [resolvable:$true] %s19
      %s21 = sshll.u32 [#allocation2], 4
      %s22 = int_to_ptr.vmem [resolvable:$true] %s21
      %27 = dma.hbm_to_vmem [thread:$0]  %s20, 247808, %s22, [#allocation3], 1408, 1408, 88
    $region9: #{valence_arousal.1} parent=1 // pred_fallthru
      _
    // Predicated region
    $region10: #{valence_arousal.1} parent=1 // pred_check
      _
    $region11: #{valence_arousal.1} parent=1 // pred_check_branch
      %29 = sbr.rel (0) target = $region13
    $region12: #{valence_arousal.1} parent=1 // pred_region
      %31 = vsyncadd [#allocation5], 0
      %s33 = sshll.u32 %s2, 4
      %s34 = int_to_ptr.hbm [resolvable:$true] %s33
      %s35 = sshll.u32 [#allocation4], 4
      %s36 = int_to_ptr.vmem [resolvable:$true] %s35
      %38 = dma.hbm_to_vmem [thread:$0]  %s34, 176, %s36, [#allocation5]
    $region13: #{valence_arousal.1} parent=1 // pred_fallthru
      _
    // Predicated region
    $region14: #{valence_arousal.1} parent=1 // pred_check
      _
    $region15: #{valence_arousal.1} parent=1 // pred_check_branch
      %40 = sbr.rel (0) target = $region17
    $region16: #{valence_arousal.1} parent=1 // pred_region
      %42 = vsyncadd [#allocation5], 0
      %s43 = sshll.u32 %s3, 4
      %s44 = int_to_ptr.hbm [resolvable:$true] %s43
      %s45 = sshll.u32 [#allocation6], 4
      %s46 = int_to_ptr.vmem [resolvable:$true] %s45
      %51 = dma.hbm_to_vmem [thread:$0]  %s44, 22528, %s46, [#allocation5], 128, 128, 8
    $region17: #{valence_arousal.1} parent=1 // pred_fallthru
      _
    // Predicated region
    $region18: #{valence_arousal.1} parent=1 // pred_check
      _
    $region19: #{valence_arousal.1} parent=1 // pred_check_branch
      %53 = sbr.rel (0) target = $region21
    $region20: #{valence_arousal.1} parent=1 // pred_region
      %55 = vsyncadd [#allocation8], 0
      %s57 = sshll.u32 %s4, 4
      %s58 = int_to_ptr.hbm [resolvable:$true] %s57
      %s59 = sshll.u32 [#allocation7], 4
      %s60 = int_to_ptr.vmem [resolvable:$true] %s59
      %62 = dma.hbm_to_vmem [thread:$0]  %s58, 16, %s60, [#allocation8]
    $region21: #{valence_arousal.1} parent=1 // pred_fallthru
      _
    // Predicated region
    $region22: #{valence_arousal.1} parent=1 // pred_check
      _
    $region23: #{valence_arousal.1} parent=1 // pred_check_branch
      %64 = sbr.rel (0) target = $region25
    $region24: #{valence_arousal.1} parent=1 // pred_region
      %66 = dma.done [#allocation3], 247808
    $region25: #{valence_arousal.1} parent=1 // pred_fallthru
      _
    // Predicated region
    $region26: #{valence_arousal.1} parent=1 // pred_check
      _
    $region27: #{valence_arousal.1} parent=1 // pred_check_branch
      %68 = sbr.rel (0) target = $region29
    $region28: #{valence_arousal.1} parent=1 // pred_region
      %70 = dma.done [#allocation5], 176
    $region29: #{valence_arousal.1} parent=1 // pred_fallthru
      _
    // Predicated region
    $region30: #{valence_arousal.1} parent=1 // pred_check
      _
    $region31: #{valence_arousal.1} parent=1 // pred_check_branch
      %72 = sbr.rel (0) target = $region33
    $region32: #{valence_arousal.1} parent=1 // pred_region
      %74 = dma.done [#allocation5], 22528
    $region33: #{valence_arousal.1} parent=1 // pred_fallthru
      _
    // Predicated region
    $region34: #{valence_arousal.1} parent=1 // pred_check
      _
    $region35: #{valence_arousal.1} parent=1 // pred_check_branch
      %76 = sbr.rel (0) target = $region37
    $region36: #{valence_arousal.1} parent=1 // pred_region
      %78 = dma.done [#allocation8], 16
    $region37: #{valence_arousal.1} parent=1 // pred_fallthru
      _
    %v79 = vld [vmem:[%s0] sm:$0xff]
    %v80 = vld [vmem:[%s0 + $0x8] sm:$0xff]
    %v81 = vld [vmem:[%s0 + $0x10] sm:$0xff]
    %v82 = vld [vmem:[%s0 + $0x18] sm:$0xff]
    %v83 = vld [vmem:[%s0 + $0x20] sm:$0xff]
    %v84 = vld [vmem:[%s0 + $0x28] sm:$0xff]
    %v85 = vld [vmem:[%s0 + $0x30] sm:$0xff]
    %v86 = vld [vmem:[%s0 + $0x38] sm:$0xff]
    %v87 = vld [vmem:[%s0 + $0x40] sm:$0xff]
    %v88 = vld [vmem:[%s0 + $0x48] sm:$0xff]
    %v89 = vld [vmem:[%s0 + $0x50] sm:$0xff]
    %v90 = vld [vmem:[#allocation2] sm:$0xff]
    %v91 = vld [vmem:[#allocation2 + $0x8] sm:$0xff]
    %v92 = vld [vmem:[#allocation2 + $0x10] sm:$0xff]
    %v93 = vld [vmem:[#allocation2 + $0x18] sm:$0xff]
    %v94 = vld [vmem:[#allocation2 + $0x20] sm:$0xff]
    %v95 = vld [vmem:[#allocation2 + $0x28] sm:$0xff]
    %v96 = vld [vmem:[#allocation2 + $0x30] sm:$0xff]
    %v97 = vld [vmem:[#allocation2 + $0x38] sm:$0xff]
    %v98 = vld [vmem:[#allocation2 + $0x40] sm:$0xff]
    %v99 = vld [vmem:[#allocation2 + $0x48] sm:$0xff]
    %v100 = vld [vmem:[#allocation2 + $0x50] sm:$0xff]
    %v101 = vld [vmem:[#allocation2 + $0x58] sm:$0xff]
    %v102 = vld [vmem:[#allocation2 + $0x60] sm:$0xff]
    %v103 = vld [vmem:[#allocation2 + $0x68] sm:$0xff]
    %v104 = vld [vmem:[#allocation2 + $0x70] sm:$0xff]
    %v105 = vld [vmem:[#allocation2 + $0x78] sm:$0xff]
    %v106 = vld [vmem:[#allocation2 + $0x80] sm:$0xff]
    %v107 = vld [vmem:[#allocation2 + $0x88] sm:$0xff]
    %v108 = vld [vmem:[#allocation2 + $0x90] sm:$0xff]
    %v109 = vld [vmem:[#allocation2 + $0x98] sm:$0xff]
    %v110 = vld [vmem:[#allocation2 + $0xa0] sm:$0xff]
    %v111 = vld [vmem:[#allocation2 + $0xa8] sm:$0xff]
    %v112 = vld [vmem:[#allocation2 + $0xb0] sm:$0xff]
    %v113 = vld [vmem:[#allocation2 + $0xb8] sm:$0xff]
    %v114 = vld [vmem:[#allocation2 + $0xc0] sm:$0xff]
    %v115 = vld [vmem:[#allocation2 + $0xc8] sm:$0xff]
    %v116 = vld [vmem:[#allocation2 + $0xd0] sm:$0xff]
    %v117 = vld [vmem:[#allocation2 + $0xd8] sm:$0xff]
    %v118 = vld [vmem:[#allocation2 + $0xe0] sm:$0xff]
    %v119 = vld [vmem:[#allocation2 + $0xe8] sm:$0xff]
    %v120 = vld [vmem:[#allocation2 + $0xf0] sm:$0xff]
    %v121 = vld [vmem:[#allocation2 + $0xf8] sm:$0xff]
    %v122 = vld [vmem:[#allocation2 + $0x100] sm:$0xff]
    %v123 = vld [vmem:[#allocation2 + $0x108] sm:$0xff]
    %v124 = vld [vmem:[#allocation2 + $0x110] sm:$0xff]
    %v125 = vld [vmem:[#allocation2 + $0x118] sm:$0xff]
    %v126 = vld [vmem:[#allocation2 + $0x120] sm:$0xff]
    %v127 = vld [vmem:[#allocation2 + $0x128] sm:$0xff]
    %v128 = vld [vmem:[#allocation2 + $0x130] sm:$0xff]
    %v129 = vld [vmem:[#allocation2 + $0x138] sm:$0xff]
    %v130 = vld [vmem:[#allocation2 + $0x140] sm:$0xff]
    %v131 = vld [vmem:[#allocation2 + $0x148] sm:$0xff]
    %v132 = vld [vmem:[#allocation2 + $0x150] sm:$0xff]
    %v133 = vld [vmem:[#allocation2 + $0x158] sm:$0xff]
    %v134 = vld [vmem:[#allocation2 + $0x160] sm:$0xff]
    %v135 = vld [vmem:[#allocation2 + $0x168] sm:$0xff]
    %v136 = vld [vmem:[#allocation2 + $0x170] sm:$0xff]
    %v137 = vld [vmem:[#allocation2 + $0x178] sm:$0xff]
    %v138 = vld [vmem:[#allocation2 + $0x180] sm:$0xff]
    %v139 = vld [vmem:[#allocation2 + $0x188] sm:$0xff]
    %v140 = vld [vmem:[#allocation2 + $0x190] sm:$0xff]
    %v141 = vld [vmem:[#allocation2 + $0x198] sm:$0xff]
    %v142 = vld [vmem:[#allocation2 + $0x1a0] sm:$0xff]
    %v143 = vld [vmem:[#allocation2 + $0x1a8] sm:$0xff]
    %v144 = vld [vmem:[#allocation2 + $0x1b0] sm:$0xff]
    %v145 = vld [vmem:[#allocation2 + $0x1b8] sm:$0xff]
    %v146 = vld [vmem:[#allocation2 + $0x1c0] sm:$0xff]
    %v147 = vld [vmem:[#allocation2 + $0x1c8] sm:$0xff]
    %v148 = vld [vmem:[#allocation2 + $0x1d0] sm:$0xff]
    %v149 = vld [vmem:[#allocation2 + $0x1d8] sm:$0xff]
    %v150 = vld [vmem:[#allocation2 + $0x1e0] sm:$0xff]
    %v151 = vld [vmem:[#allocation2 + $0x1e8] sm:$0xff]
    %v152 = vld [vmem:[#allocation2 + $0x1f0] sm:$0xff]
    %v153 = vld [vmem:[#allocation2 + $0x1f8] sm:$0xff]
    %v154 = vld [vmem:[#allocation2 + $0x200] sm:$0xff]
    %v155 = vld [vmem:[#allocation2 + $0x208] sm:$0xff]
    %v156 = vld [vmem:[#allocation2 + $0x210] sm:$0xff]
    %v157 = vld [vmem:[#allocation2 + $0x218] sm:$0xff]
    %v158 = vld [vmem:[#allocation2 + $0x220] sm:$0xff]
    %v159 = vld [vmem:[#allocation2 + $0x228] sm:$0xff]
    %v160 = vld [vmem:[#allocation2 + $0x230] sm:$0xff]
    %v161 = vld [vmem:[#allocation2 + $0x238] sm:$0xff]
    %v162 = vld [vmem:[#allocation2 + $0x240] sm:$0xff]
    %v163 = vld [vmem:[#allocation2 + $0x248] sm:$0xff]
    %v164 = vld [vmem:[#allocation2 + $0x250] sm:$0xff]
    %v165 = vld [vmem:[#allocation2 + $0x258] sm:$0xff]
    %v166 = vld [vmem:[#allocation2 + $0x260] sm:$0xff]
    %v167 = vld [vmem:[#allocation2 + $0x268] sm:$0xff]
    %v168 = vld [vmem:[#allocation2 + $0x270] sm:$0xff]
    %v169 = vld [vmem:[#allocation2 + $0x278] sm:$0xff]
    %v170 = vld [vmem:[#allocation2 + $0x280] sm:$0xff]
    %v171 = vld [vmem:[#allocation2 + $0x288] sm:$0xff]
    %v172 = vld [vmem:[#allocation2 + $0x290] sm:$0xff]
    %v173 = vld [vmem:[#allocation2 + $0x298] sm:$0xff]
    %v174 = vld [vmem:[#allocation2 + $0x2a0] sm:$0xff]
    %v175 = vld [vmem:[#allocation2 + $0x2a8] sm:$0xff]
    %v176 = vld [vmem:[#allocation2 + $0x2b0] sm:$0xff]
    %v177 = vld [vmem:[#allocation2 + $0x2b8] sm:$0xff]
    %v178 = vld [vmem:[#allocation2 + $0x2c0] sm:$0xff]
    %v179 = vld [vmem:[#allocation2 + $0x2c8] sm:$0xff]
    %v180 = vld [vmem:[#allocation2 + $0x2d0] sm:$0xff]
    %v181 = vld [vmem:[#allocation2 + $0x2d8] sm:$0xff]
    %v182 = vld [vmem:[#allocation2 + $0x2e0] sm:$0xff]
    %v183 = vld [vmem:[#allocation2 + $0x2e8] sm:$0xff]
    %v184 = vld [vmem:[#allocation2 + $0x2f0] sm:$0xff]
    %v185 = vld [vmem:[#allocation2 + $0x2f8] sm:$0xff]
    %v186 = vld [vmem:[#allocation2 + $0x300] sm:$0xff]
    %v187 = vld [vmem:[#allocation2 + $0x308] sm:$0xff]
    %v188 = vld [vmem:[#allocation2 + $0x310] sm:$0xff]
    %v189 = vld [vmem:[#allocation2 + $0x318] sm:$0xff]
    %v190 = vld [vmem:[#allocation2 + $0x320] sm:$0xff]
    %v191 = vld [vmem:[#allocation2 + $0x328] sm:$0xff]
    %v192 = vld [vmem:[#allocation2 + $0x330] sm:$0xff]
    %v193 = vld [vmem:[#allocation2 + $0x338] sm:$0xff]
    %v194 = vld [vmem:[#allocation2 + $0x340] sm:$0xff]
    %v195 = vld [vmem:[#allocation2 + $0x348] sm:$0xff]
    %v196 = vld [vmem:[#allocation2 + $0x350] sm:$0xff]
    %v197 = vld [vmem:[#allocation2 + $0x358] sm:$0xff]
    %v198 = vld [vmem:[#allocation2 + $0x360] sm:$0xff]
    %v199 = vld [vmem:[#allocation2 + $0x368] sm:$0xff]
    %v200 = vld [vmem:[#allocation2 + $0x370] sm:$0xff]
    %v201 = vld [vmem:[#allocation2 + $0x378] sm:$0xff]
    %v202 = vld [vmem:[#allocation2 + $0x380] sm:$0xff]
    %v203 = vld [vmem:[#allocation2 + $0x388] sm:$0xff]
    %v204 = vld [vmem:[#allocation2 + $0x390] sm:$0xff]
    %v205 = vld [vmem:[#allocation2 + $0x398] sm:$0xff]
    %v206 = vld [vmem:[#allocation2 + $0x3a0] sm:$0xff]
    %v207 = vld [vmem:[#allocation2 + $0x3a8] sm:$0xff]
    %v208 = vld [vmem:[#allocation2 + $0x3b0] sm:$0xff]
    %v209 = vld [vmem:[#allocation2 + $0x3b8] sm:$0xff]
    %v210 = vld [vmem:[#allocation2 + $0x3c0] sm:$0xff]
    %v211 = vld [vmem:[#allocation2 + $0x3c8] sm:$0xff]
    %v212 = vld [vmem:[#allocation2 + $0x3d0] sm:$0xff]
    %v213 = vld [vmem:[#allocation2 + $0x3d8] sm:$0xff]
    %v214 = vld [vmem:[#allocation2 + $0x3e0] sm:$0xff]
    %v215 = vld [vmem:[#allocation2 + $0x3e8] sm:$0xff]
    %v216 = vld [vmem:[#allocation2 + $0x3f0] sm:$0xff]
    %v217 = vld [vmem:[#allocation2 + $0x3f8] sm:$0xff]
    %v218 = vld [vmem:[#allocation2 + $0x400] sm:$0xff]
    %v219 = vld [vmem:[#allocation2 + $0x408] sm:$0xff]
    %v220 = vld [vmem:[#allocation2 + $0x410] sm:$0xff]
    %v221 = vld [vmem:[#allocation2 + $0x418] sm:$0xff]
    %v222 = vld [vmem:[#allocation2 + $0x420] sm:$0xff]
    %v223 = vld [vmem:[#allocation2 + $0x428] sm:$0xff]
    %v224 = vld [vmem:[#allocation2 + $0x430] sm:$0xff]
    %v225 = vld [vmem:[#allocation2 + $0x438] sm:$0xff]
    %v226 = vld [vmem:[#allocation2 + $0x440] sm:$0xff]
    %v227 = vld [vmem:[#allocation2 + $0x448] sm:$0xff]
    %v228 = vld [vmem:[#allocation2 + $0x450] sm:$0xff]
    %v229 = vld [vmem:[#allocation2 + $0x458] sm:$0xff]
    %v230 = vld [vmem:[#allocation2 + $0x460] sm:$0xff]
    %v231 = vld [vmem:[#allocation2 + $0x468] sm:$0xff]
    %v232 = vld [vmem:[#allocation2 + $0x470] sm:$0xff]
    %v233 = vld [vmem:[#allocation2 + $0x478] sm:$0xff]
    %v234 = vld [vmem:[#allocation2 + $0x480] sm:$0xff]
    %v235 = vld [vmem:[#allocation2 + $0x488] sm:$0xff]
    %v236 = vld [vmem:[#allocation2 + $0x490] sm:$0xff]
    %v237 = vld [vmem:[#allocation2 + $0x498] sm:$0xff]
    %v238 = vld [vmem:[#allocation2 + $0x4a0] sm:$0xff]
    %v239 = vld [vmem:[#allocation2 + $0x4a8] sm:$0xff]
    %v240 = vld [vmem:[#allocation2 + $0x4b0] sm:$0xff]
    %v241 = vld [vmem:[#allocation2 + $0x4b8] sm:$0xff]
    %v242 = vld [vmem:[#allocation2 + $0x4c0] sm:$0xff]
    %v243 = vld [vmem:[#allocation2 + $0x4c8] sm:$0xff]
    %v244 = vld [vmem:[#allocation2 + $0x4d0] sm:$0xff]
    %v245 = vld [vmem:[#allocation2 + $0x4d8] sm:$0xff]
    %v246 = vld [vmem:[#allocation2 + $0x4e0] sm:$0xff]
    %v247 = vld [vmem:[#allocation2 + $0x4e8] sm:$0xff]
    %v248 = vld [vmem:[#allocation2 + $0x4f0] sm:$0xff]
    %v249 = vld [vmem:[#allocation2 + $0x4f8] sm:$0xff]
    %v250 = vld [vmem:[#allocation2 + $0x500] sm:$0xff]
    %v251 = vld [vmem:[#allocation2 + $0x508] sm:$0xff]
    %v252 = vld [vmem:[#allocation2 + $0x510] sm:$0xff]
    %v253 = vld [vmem:[#allocation2 + $0x518] sm:$0xff]
    %v254 = vld [vmem:[#allocation2 + $0x520] sm:$0xff]
    %v255 = vld [vmem:[#allocation2 + $0x528] sm:$0xff]
    %v256 = vld [vmem:[#allocation2 + $0x530] sm:$0xff]
    %v257 = vld [vmem:[#allocation2 + $0x538] sm:$0xff]
    %v258 = vld [vmem:[#allocation2 + $0x540] sm:$0xff]
    %v259 = vld [vmem:[#allocation2 + $0x548] sm:$0xff]
    %v260 = vld [vmem:[#allocation2 + $0x550] sm:$0xff]
    %v261 = vld [vmem:[#allocation2 + $0x558] sm:$0xff]
    %v262 = vld [vmem:[#allocation2 + $0x560] sm:$0xff]
    %v263 = vld [vmem:[#allocation2 + $0x568] sm:$0xff]
    %v264 = vld [vmem:[#allocation2 + $0x570] sm:$0xff]
    %v265 = vld [vmem:[#allocation2 + $0x578] sm:$0xff]
    %v266 = vld [vmem:[#allocation2 + $0x580] sm:$0xff]
    %v267 = vld [vmem:[#allocation2 + $0x588] sm:$0xff]
    %v268 = vld [vmem:[#allocation2 + $0x590] sm:$0xff]
    %v269 = vld [vmem:[#allocation2 + $0x598] sm:$0xff]
    %v270 = vld [vmem:[#allocation2 + $0x5a0] sm:$0xff]
    %v271 = vld [vmem:[#allocation2 + $0x5a8] sm:$0xff]
    %v272 = vld [vmem:[#allocation2 + $0x5b0] sm:$0xff]
    %v273 = vld [vmem:[#allocation2 + $0x5b8] sm:$0xff]
    %v274 = vld [vmem:[#allocation2 + $0x5c0] sm:$0xff]
    %v275 = vld [vmem:[#allocation2 + $0x5c8] sm:$0xff]
    %v276 = vld [vmem:[#allocation2 + $0x5d0] sm:$0xff]
    %v277 = vld [vmem:[#allocation2 + $0x5d8] sm:$0xff]
    %v278 = vld [vmem:[#allocation2 + $0x5e0] sm:$0xff]
    %v279 = vld [vmem:[#allocation2 + $0x5e8] sm:$0xff]
    %v280 = vld [vmem:[#allocation2 + $0x5f0] sm:$0xff]
    %v281 = vld [vmem:[#allocation2 + $0x5f8] sm:$0xff]
    %v282 = vld [vmem:[#allocation2 + $0x600] sm:$0xff]
    %v283 = vld [vmem:[#allocation2 + $0x608] sm:$0xff]
    %v284 = vld [vmem:[#allocation2 + $0x610] sm:$0xff]
    %v285 = vld [vmem:[#allocation2 + $0x618] sm:$0xff]
    %v286 = vld [vmem:[#allocation2 + $0x620] sm:$0xff]
    %v287 = vld [vmem:[#allocation2 + $0x628] sm:$0xff]
    %v288 = vld [vmem:[#allocation2 + $0x630] sm:$0xff]
    %v289 = vld [vmem:[#allocation2 + $0x638] sm:$0xff]
    %v290 = vld [vmem:[#allocation2 + $0x640] sm:$0xff]
    %v291 = vld [vmem:[#allocation2 + $0x648] sm:$0xff]
    %v292 = vld [vmem:[#allocation2 + $0x650] sm:$0xff]
    %v293 = vld [vmem:[#allocation2 + $0x658] sm:$0xff]
    %v294 = vld [vmem:[#allocation2 + $0x660] sm:$0xff]
    %v295 = vld [vmem:[#allocation2 + $0x668] sm:$0xff]
    %v296 = vld [vmem:[#allocation2 + $0x670] sm:$0xff]
    %v297 = vld [vmem:[#allocation2 + $0x678] sm:$0xff]
    %v298 = vld [vmem:[#allocation2 + $0x680] sm:$0xff]
    %v299 = vld [vmem:[#allocation2 + $0x688] sm:$0xff]
    %v300 = vld [vmem:[#allocation2 + $0x690] sm:$0xff]
    %v301 = vld [vmem:[#allocation2 + $0x698] sm:$0xff]
    %v302 = vld [vmem:[#allocation2 + $0x6a0] sm:$0xff]
    %v303 = vld [vmem:[#allocation2 + $0x6a8] sm:$0xff]
    %v304 = vld [vmem:[#allocation2 + $0x6b0] sm:$0xff]
    %v305 = vld [vmem:[#allocation2 + $0x6b8] sm:$0xff]
    %v306 = vld [vmem:[#allocation2 + $0x6c0] sm:$0xff]
    %v307 = vld [vmem:[#allocation2 + $0x6c8] sm:$0xff]
    %v308 = vld [vmem:[#allocation2 + $0x6d0] sm:$0xff]
    %v309 = vld [vmem:[#allocation2 + $0x6d8] sm:$0xff]
    %v310 = vld [vmem:[#allocation2 + $0x6e0] sm:$0xff]
    %v311 = vld [vmem:[#allocation2 + $0x6e8] sm:$0xff]
    %v312 = vld [vmem:[#allocation2 + $0x6f0] sm:$0xff]
    %v313 = vld [vmem:[#allocation2 + $0x6f8] sm:$0xff]
    %v314 = vld [vmem:[#allocation2 + $0x700] sm:$0xff]
    %v315 = vld [vmem:[#allocation2 + $0x708] sm:$0xff]
    %v316 = vld [vmem:[#allocation2 + $0x710] sm:$0xff]
    %v317 = vld [vmem:[#allocation2 + $0x718] sm:$0xff]
    %v318 = vld [vmem:[#allocation2 + $0x720] sm:$0xff]
    %v319 = vld [vmem:[#allocation2 + $0x728] sm:$0xff]
    %v320 = vld [vmem:[#allocation2 + $0x730] sm:$0xff]
    %v321 = vld [vmem:[#allocation2 + $0x738] sm:$0xff]
    %v322 = vld [vmem:[#allocation2 + $0x740] sm:$0xff]
    %v323 = vld [vmem:[#allocation2 + $0x748] sm:$0xff]
    %v324 = vld [vmem:[#allocation2 + $0x750] sm:$0xff]
    %v325 = vld [vmem:[#allocation2 + $0x758] sm:$0xff]
    %v326 = vld [vmem:[#allocation2 + $0x760] sm:$0xff]
    %v327 = vld [vmem:[#allocation2 + $0x768] sm:$0xff]
    %v328 = vld [vmem:[#allocation2 + $0x770] sm:$0xff]
    %v329 = vld [vmem:[#allocation2 + $0x778] sm:$0xff]
    %v330 = vld [vmem:[#allocation2 + $0x780] sm:$0xff]
    %v331 = vld [vmem:[#allocation2 + $0x788] sm:$0xff]
    %v332 = vld [vmem:[#allocation2 + $0x790] sm:$0xff]
    %v333 = vld [vmem:[#allocation2 + $0x798] sm:$0xff]
    %v334 = vld [vmem:[#allocation2 + $0x7a0] sm:$0xff]
    %v335 = vld [vmem:[#allocation2 + $0x7a8] sm:$0xff]
    %v336 = vld [vmem:[#allocation2 + $0x7b0] sm:$0xff]
    %v337 = vld [vmem:[#allocation2 + $0x7b8] sm:$0xff]
    %v338 = vld [vmem:[#allocation2 + $0x7c0] sm:$0xff]
    %v339 = vld [vmem:[#allocation2 + $0x7c8] sm:$0xff]
    %v340 = vld [vmem:[#allocation2 + $0x7d0] sm:$0xff]
    %v341 = vld [vmem:[#allocation2 + $0x7d8] sm:$0xff]
    %v342 = vld [vmem:[#allocation2 + $0x7e0] sm:$0xff]
    %v343 = vld [vmem:[#allocation2 + $0x7e8] sm:$0xff]
    %v344 = vld [vmem:[#allocation2 + $0x7f0] sm:$0xff]
    %v345 = vld [vmem:[#allocation2 + $0x7f8] sm:$0xff]
    %v346 = vld [vmem:[#allocation2 + $0x800] sm:$0xff]
    %v347 = vld [vmem:[#allocation2 + $0x808] sm:$0xff]
    %v348 = vld [vmem:[#allocation2 + $0x810] sm:$0xff]
    %v349 = vld [vmem:[#allocation2 + $0x818] sm:$0xff]
    %v350 = vld [vmem:[#allocation2 + $0x820] sm:$0xff]
    %v351 = vld [vmem:[#allocation2 + $0x828] sm:$0xff]
    %v352 = vld [vmem:[#allocation2 + $0x830] sm:$0xff]
    %v353 = vld [vmem:[#allocation2 + $0x838] sm:$0xff]
    %v354 = vld [vmem:[#allocation2 + $0x840] sm:$0xff]
    %v355 = vld [vmem:[#allocation2 + $0x848] sm:$0xff]
    %v356 = vld [vmem:[#allocation2 + $0x850] sm:$0xff]
    %v357 = vld [vmem:[#allocation2 + $0x858] sm:$0xff]
    %v358 = vld [vmem:[#allocation2 + $0x860] sm:$0xff]
    %v359 = vld [vmem:[#allocation2 + $0x868] sm:$0xff]
    %v360 = vld [vmem:[#allocation2 + $0x870] sm:$0xff]
    %v361 = vld [vmem:[#allocation2 + $0x878] sm:$0xff]
    %v362 = vld [vmem:[#allocation2 + $0x880] sm:$0xff]
    %v363 = vld [vmem:[#allocation2 + $0x888] sm:$0xff]
    %v364 = vld [vmem:[#allocation2 + $0x890] sm:$0xff]
    %v365 = vld [vmem:[#allocation2 + $0x898] sm:$0xff]
    %v366 = vld [vmem:[#allocation2 + $0x8a0] sm:$0xff]
    %v367 = vld [vmem:[#allocation2 + $0x8a8] sm:$0xff]
    %v368 = vld [vmem:[#allocation2 + $0x8b0] sm:$0xff]
    %v369 = vld [vmem:[#allocation2 + $0x8b8] sm:$0xff]
    %v370 = vld [vmem:[#allocation2 + $0x8c0] sm:$0xff]
    %v371 = vld [vmem:[#allocation2 + $0x8c8] sm:$0xff]
    %v372 = vld [vmem:[#allocation2 + $0x8d0] sm:$0xff]
    %v373 = vld [vmem:[#allocation2 + $0x8d8] sm:$0xff]
    %v374 = vld [vmem:[#allocation2 + $0x8e0] sm:$0xff]
    %v375 = vld [vmem:[#allocation2 + $0x8e8] sm:$0xff]
    %v376 = vld [vmem:[#allocation2 + $0x8f0] sm:$0xff]
    %v377 = vld [vmem:[#allocation2 + $0x8f8] sm:$0xff]
    %v378 = vld [vmem:[#allocation2 + $0x900] sm:$0xff]
    %v379 = vld [vmem:[#allocation2 + $0x908] sm:$0xff]
    %v380 = vld [vmem:[#allocation2 + $0x910] sm:$0xff]
    %v381 = vld [vmem:[#allocation2 + $0x918] sm:$0xff]
    %v382 = vld [vmem:[#allocation2 + $0x920] sm:$0xff]
    %v383 = vld [vmem:[#allocation2 + $0x928] sm:$0xff]
    %v384 = vld [vmem:[#allocation2 + $0x930] sm:$0xff]
    %v385 = vld [vmem:[#allocation2 + $0x938] sm:$0xff]
    %v386 = vld [vmem:[#allocation2 + $0x940] sm:$0xff]
    %v387 = vld [vmem:[#allocation2 + $0x948] sm:$0xff]
    %v388 = vld [vmem:[#allocation2 + $0x950] sm:$0xff]
    %v389 = vld [vmem:[#allocation2 + $0x958] sm:$0xff]
    %v390 = vld [vmem:[#allocation2 + $0x960] sm:$0xff]
    %v391 = vld [vmem:[#allocation2 + $0x968] sm:$0xff]
    %v392 = vld [vmem:[#allocation2 + $0x970] sm:$0xff]
    %v393 = vld [vmem:[#allocation2 + $0x978] sm:$0xff]
    %v394 = vld [vmem:[#allocation2 + $0x980] sm:$0xff]
    %v395 = vld [vmem:[#allocation2 + $0x988] sm:$0xff]
    %v396 = vld [vmem:[#allocation2 + $0x990] sm:$0xff]
    %v397 = vld [vmem:[#allocation2 + $0x998] sm:$0xff]
    %v398 = vld [vmem:[#allocation2 + $0x9a0] sm:$0xff]
    %v399 = vld [vmem:[#allocation2 + $0x9a8] sm:$0xff]
    %v400 = vld [vmem:[#allocation2 + $0x9b0] sm:$0xff]
    %v401 = vld [vmem:[#allocation2 + $0x9b8] sm:$0xff]
    %v402 = vld [vmem:[#allocation2 + $0x9c0] sm:$0xff]
    %v403 = vld [vmem:[#allocation2 + $0x9c8] sm:$0xff]
    %v404 = vld [vmem:[#allocation2 + $0x9d0] sm:$0xff]
    %v405 = vld [vmem:[#allocation2 + $0x9d8] sm:$0xff]
    %v406 = vld [vmem:[#allocation2 + $0x9e0] sm:$0xff]
    %v407 = vld [vmem:[#allocation2 + $0x9e8] sm:$0xff]
    %v408 = vld [vmem:[#allocation2 + $0x9f0] sm:$0xff]
    %v409 = vld [vmem:[#allocation2 + $0x9f8] sm:$0xff]
    %v410 = vld [vmem:[#allocation2 + $0xa00] sm:$0xff]
    %v411 = vld [vmem:[#allocation2 + $0xa08] sm:$0xff]
    %v412 = vld [vmem:[#allocation2 + $0xa10] sm:$0xff]
    %v413 = vld [vmem:[#allocation2 + $0xa18] sm:$0xff]
    %v414 = vld [vmem:[#allocation2 + $0xa20] sm:$0xff]
    %v415 = vld [vmem:[#allocation2 + $0xa28] sm:$0xff]
    %v416 = vld [vmem:[#allocation2 + $0xa30] sm:$0xff]
    %v417 = vld [vmem:[#allocation2 + $0xa38] sm:$0xff]
    %v418 = vld [vmem:[#allocation2 + $0xa40] sm:$0xff]
    %v419 = vld [vmem:[#allocation2 + $0xa48] sm:$0xff]
    %v420 = vld [vmem:[#allocation2 + $0xa50] sm:$0xff]
    %v421 = vld [vmem:[#allocation2 + $0xa58] sm:$0xff]
    %v422 = vld [vmem:[#allocation2 + $0xa60] sm:$0xff]
    %v423 = vld [vmem:[#allocation2 + $0xa68] sm:$0xff]
    %v424 = vld [vmem:[#allocation2 + $0xa70] sm:$0xff]
    %v425 = vld [vmem:[#allocation2 + $0xa78] sm:$0xff]
    %v426 = vld [vmem:[#allocation2 + $0xa80] sm:$0xff]
    %v427 = vld [vmem:[#allocation2 + $0xa88] sm:$0xff]
    %v428 = vld [vmem:[#allocation2 + $0xa90] sm:$0xff]
    %v429 = vld [vmem:[#allocation2 + $0xa98] sm:$0xff]
    %v430 = vld [vmem:[#allocation2 + $0xaa0] sm:$0xff]
    %v431 = vld [vmem:[#allocation2 + $0xaa8] sm:$0xff]
    %v432 = vld [vmem:[#allocation2 + $0xab0] sm:$0xff]
    %v433 = vld [vmem:[#allocation2 + $0xab8] sm:$0xff]
    %v434 = vld [vmem:[#allocation2 + $0xac0] sm:$0xff]
    %v435 = vld [vmem:[#allocation2 + $0xac8] sm:$0xff]
    %v436 = vld [vmem:[#allocation2 + $0xad0] sm:$0xff]
    %v437 = vld [vmem:[#allocation2 + $0xad8] sm:$0xff]
    %v438 = vld [vmem:[#allocation2 + $0xae0] sm:$0xff]
    %v439 = vld [vmem:[#allocation2 + $0xae8] sm:$0xff]
    %v440 = vld [vmem:[#allocation2 + $0xaf0] sm:$0xff]
    %v441 = vld [vmem:[#allocation2 + $0xaf8] sm:$0xff]
    %v442 = vld [vmem:[#allocation2 + $0xb00] sm:$0xff]
    %v443 = vld [vmem:[#allocation2 + $0xb08] sm:$0xff]
    %v444 = vld [vmem:[#allocation2 + $0xb10] sm:$0xff]
    %v445 = vld [vmem:[#allocation2 + $0xb18] sm:$0xff]
    %v446 = vld [vmem:[#allocation2 + $0xb20] sm:$0xff]
    %v447 = vld [vmem:[#allocation2 + $0xb28] sm:$0xff]
    %v448 = vld [vmem:[#allocation2 + $0xb30] sm:$0xff]
    %v449 = vld [vmem:[#allocation2 + $0xb38] sm:$0xff]
    %v450 = vld [vmem:[#allocation2 + $0xb40] sm:$0xff]
    %v451 = vld [vmem:[#allocation2 + $0xb48] sm:$0xff]
    %v452 = vld [vmem:[#allocation2 + $0xb50] sm:$0xff]
    %v453 = vld [vmem:[#allocation2 + $0xb58] sm:$0xff]
    %v454 = vld [vmem:[#allocation2 + $0xb60] sm:$0xff]
    %v455 = vld [vmem:[#allocation2 + $0xb68] sm:$0xff]
    %v456 = vld [vmem:[#allocation2 + $0xb70] sm:$0xff]
    %v457 = vld [vmem:[#allocation2 + $0xb78] sm:$0xff]
    %v458 = vld [vmem:[#allocation2 + $0xb80] sm:$0xff]
    %v459 = vld [vmem:[#allocation2 + $0xb88] sm:$0xff]
    %v460 = vld [vmem:[#allocation2 + $0xb90] sm:$0xff]
    %v461 = vld [vmem:[#allocation2 + $0xb98] sm:$0xff]
    %v462 = vld [vmem:[#allocation2 + $0xba0] sm:$0xff]
    %v463 = vld [vmem:[#allocation2 + $0xba8] sm:$0xff]
    %v464 = vld [vmem:[#allocation2 + $0xbb0] sm:$0xff]
    %v465 = vld [vmem:[#allocation2 + $0xbb8] sm:$0xff]
    %v466 = vld [vmem:[#allocation2 + $0xbc0] sm:$0xff]
    %v467 = vld [vmem:[#allocation2 + $0xbc8] sm:$0xff]
    %v468 = vld [vmem:[#allocation2 + $0xbd0] sm:$0xff]
    %v469 = vld [vmem:[#allocation2 + $0xbd8] sm:$0xff]
    %v470 = vld [vmem:[#allocation2 + $0xbe0] sm:$0xff]
    %v471 = vld [vmem:[#allocation2 + $0xbe8] sm:$0xff]
    %v472 = vld [vmem:[#allocation2 + $0xbf0] sm:$0xff]
    %v473 = vld [vmem:[#allocation2 + $0xbf8] sm:$0xff]
    %v474 = vld [vmem:[#allocation2 + $0xc00] sm:$0xff]
    %v475 = vld [vmem:[#allocation2 + $0xc08] sm:$0xff]
    %v476 = vld [vmem:[#allocation2 + $0xc10] sm:$0xff]
    %v477 = vld [vmem:[#allocation2 + $0xc18] sm:$0xff]
    %v478 = vld [vmem:[#allocation2 + $0xc20] sm:$0xff]
    %v479 = vld [vmem:[#allocation2 + $0xc28] sm:$0xff]
    %v480 = vld [vmem:[#allocation2 + $0xc30] sm:$0xff]
    %v481 = vld [vmem:[#allocation2 + $0xc38] sm:$0xff]
    %v482 = vld [vmem:[#allocation2 + $0xc40] sm:$0xff]
    %v483 = vld [vmem:[#allocation2 + $0xc48] sm:$0xff]
    %v484 = vld [vmem:[#allocation2 + $0xc50] sm:$0xff]
    %v485 = vld [vmem:[#allocation2 + $0xc58] sm:$0xff]
    %v486 = vld [vmem:[#allocation2 + $0xc60] sm:$0xff]
    %v487 = vld [vmem:[#allocation2 + $0xc68] sm:$0xff]
    %v488 = vld [vmem:[#allocation2 + $0xc70] sm:$0xff]
    %v489 = vld [vmem:[#allocation2 + $0xc78] sm:$0xff]
    %v490 = vld [vmem:[#allocation2 + $0xc80] sm:$0xff]
    %v491 = vld [vmem:[#allocation2 + $0xc88] sm:$0xff]
    %v492 = vld [vmem:[#allocation2 + $0xc90] sm:$0xff]
    %v493 = vld [vmem:[#allocation2 + $0xc98] sm:$0xff]
    %v494 = vld [vmem:[#allocation2 + $0xca0] sm:$0xff]
    %v495 = vld [vmem:[#allocation2 + $0xca8] sm:$0xff]
    %v496 = vld [vmem:[#allocation2 + $0xcb0] sm:$0xff]
    %v497 = vld [vmem:[#allocation2 + $0xcb8] sm:$0xff]
    %v498 = vld [vmem:[#allocation2 + $0xcc0] sm:$0xff]
    %v499 = vld [vmem:[#allocation2 + $0xcc8] sm:$0xff]
    %v500 = vld [vmem:[#allocation2 + $0xcd0] sm:$0xff]
    %v501 = vld [vmem:[#allocation2 + $0xcd8] sm:$0xff]
    %v502 = vld [vmem:[#allocation2 + $0xce0] sm:$0xff]
    %v503 = vld [vmem:[#allocation2 + $0xce8] sm:$0xff]
    %v504 = vld [vmem:[#allocation2 + $0xcf0] sm:$0xff]
    %v505 = vld [vmem:[#allocation2 + $0xcf8] sm:$0xff]
    %v506 = vld [vmem:[#allocation2 + $0xd00] sm:$0xff]
    %v507 = vld [vmem:[#allocation2 + $0xd08] sm:$0xff]
    %v508 = vld [vmem:[#allocation2 + $0xd10] sm:$0xff]
    %v509 = vld [vmem:[#allocation2 + $0xd18] sm:$0xff]
    %v510 = vld [vmem:[#allocation2 + $0xd20] sm:$0xff]
    %v511 = vld [vmem:[#allocation2 + $0xd28] sm:$0xff]
    %v512 = vld [vmem:[#allocation2 + $0xd30] sm:$0xff]
    %v513 = vld [vmem:[#allocation2 + $0xd38] sm:$0xff]
    %v514 = vld [vmem:[#allocation2 + $0xd40] sm:$0xff]
    %v515 = vld [vmem:[#allocation2 + $0xd48] sm:$0xff]
    %v516 = vld [vmem:[#allocation2 + $0xd50] sm:$0xff]
    %v517 = vld [vmem:[#allocation2 + $0xd58] sm:$0xff]
    %v518 = vld [vmem:[#allocation2 + $0xd60] sm:$0xff]
    %v519 = vld [vmem:[#allocation2 + $0xd68] sm:$0xff]
    %v520 = vld [vmem:[#allocation2 + $0xd70] sm:$0xff]
    %v521 = vld [vmem:[#allocation2 + $0xd78] sm:$0xff]
    %v522 = vld [vmem:[#allocation2 + $0xd80] sm:$0xff]
    %v523 = vld [vmem:[#allocation2 + $0xd88] sm:$0xff]
    %v524 = vld [vmem:[#allocation2 + $0xd90] sm:$0xff]
    %v525 = vld [vmem:[#allocation2 + $0xd98] sm:$0xff]
    %v526 = vld [vmem:[#allocation2 + $0xda0] sm:$0xff]
    %v527 = vld [vmem:[#allocation2 + $0xda8] sm:$0xff]
    %v528 = vld [vmem:[#allocation2 + $0xdb0] sm:$0xff]
    %v529 = vld [vmem:[#allocation2 + $0xdb8] sm:$0xff]
    %v530 = vld [vmem:[#allocation2 + $0xdc0] sm:$0xff]
    %v531 = vld [vmem:[#allocation2 + $0xdc8] sm:$0xff]
    %v532 = vld [vmem:[#allocation2 + $0xdd0] sm:$0xff]
    %v533 = vld [vmem:[#allocation2 + $0xdd8] sm:$0xff]
    %v534 = vld [vmem:[#allocation2 + $0xde0] sm:$0xff]
    %v535 = vld [vmem:[#allocation2 + $0xde8] sm:$0xff]
    %v536 = vld [vmem:[#allocation2 + $0xdf0] sm:$0xff]
    %v537 = vld [vmem:[#allocation2 + $0xdf8] sm:$0xff]
    %v538 = vld [vmem:[#allocation2 + $0xe00] sm:$0xff]
    %v539 = vld [vmem:[#allocation2 + $0xe08] sm:$0xff]
    %v540 = vld [vmem:[#allocation2 + $0xe10] sm:$0xff]
    %v541 = vld [vmem:[#allocation2 + $0xe18] sm:$0xff]
    %v542 = vld [vmem:[#allocation2 + $0xe20] sm:$0xff]
    %v543 = vld [vmem:[#allocation2 + $0xe28] sm:$0xff]
    %v544 = vld [vmem:[#allocation2 + $0xe30] sm:$0xff]
    %v545 = vld [vmem:[#allocation2 + $0xe38] sm:$0xff]
    %v546 = vld [vmem:[#allocation2 + $0xe40] sm:$0xff]
    %v547 = vld [vmem:[#allocation2 + $0xe48] sm:$0xff]
    %v548 = vld [vmem:[#allocation2 + $0xe50] sm:$0xff]
    %v549 = vld [vmem:[#allocation2 + $0xe58] sm:$0xff]
    %v550 = vld [vmem:[#allocation2 + $0xe60] sm:$0xff]
    %v551 = vld [vmem:[#allocation2 + $0xe68] sm:$0xff]
    %v552 = vld [vmem:[#allocation2 + $0xe70] sm:$0xff]
    %v553 = vld [vmem:[#allocation2 + $0xe78] sm:$0xff]
    %v554 = vld [vmem:[#allocation2 + $0xe80] sm:$0xff]
    %v555 = vld [vmem:[#allocation2 + $0xe88] sm:$0xff]
    %v556 = vld [vmem:[#allocation2 + $0xe90] sm:$0xff]
    %v557 = vld [vmem:[#allocation2 + $0xe98] sm:$0xff]
    %v558 = vld [vmem:[#allocation2 + $0xea0] sm:$0xff]
    %v559 = vld [vmem:[#allocation2 + $0xea8] sm:$0xff]
    %v560 = vld [vmem:[#allocation2 + $0xeb0] sm:$0xff]
    %v561 = vld [vmem:[#allocation2 + $0xeb8] sm:$0xff]
    %v562 = vld [vmem:[#allocation2 + $0xec0] sm:$0xff]
    %v563 = vld [vmem:[#allocation2 + $0xec8] sm:$0xff]
    %v564 = vld [vmem:[#allocation2 + $0xed0] sm:$0xff]
    %v565 = vld [vmem:[#allocation2 + $0xed8] sm:$0xff]
    %v566 = vld [vmem:[#allocation2 + $0xee0] sm:$0xff]
    %v567 = vld [vmem:[#allocation2 + $0xee8] sm:$0xff]
    %v568 = vld [vmem:[#allocation2 + $0xef0] sm:$0xff]
    %v569 = vld [vmem:[#allocation2 + $0xef8] sm:$0xff]
    %v570 = vld [vmem:[#allocation2 + $0xf00] sm:$0xff]
    %v571 = vld [vmem:[#allocation2 + $0xf08] sm:$0xff]
    %v572 = vld [vmem:[#allocation2 + $0xf10] sm:$0xff]
    %v573 = vld [vmem:[#allocation2 + $0xf18] sm:$0xff]
    %v574 = vld [vmem:[#allocation2 + $0xf20] sm:$0xff]
    %v575 = vld [vmem:[#allocation2 + $0xf28] sm:$0xff]
    %v576 = vld [vmem:[#allocation2 + $0xf30] sm:$0xff]
    %v577 = vld [vmem:[#allocation2 + $0xf38] sm:$0xff]
    %v578 = vld [vmem:[#allocation2 + $0xf40] sm:$0xff]
    %v579 = vld [vmem:[#allocation2 + $0xf48] sm:$0xff]
    %v580 = vld [vmem:[#allocation2 + $0xf50] sm:$0xff]
    %v581 = vld [vmem:[#allocation2 + $0xf58] sm:$0xff]
    %v582 = vld [vmem:[#allocation2 + $0xf60] sm:$0xff]
    %v583 = vld [vmem:[#allocation2 + $0xf68] sm:$0xff]
    %v584 = vld [vmem:[#allocation2 + $0xf70] sm:$0xff]
    %v585 = vld [vmem:[#allocation2 + $0xf78] sm:$0xff]
    %v586 = vld [vmem:[#allocation2 + $0xf80] sm:$0xff]
    %v587 = vld [vmem:[#allocation2 + $0xf88] sm:$0xff]
    %v588 = vld [vmem:[#allocation2 + $0xf90] sm:$0xff]
    %v589 = vld [vmem:[#allocation2 + $0xf98] sm:$0xff]
    %v590 = vld [vmem:[#allocation2 + $0xfa0] sm:$0xff]
    %v591 = vld [vmem:[#allocation2 + $0xfa8] sm:$0xff]
    %v592 = vld [vmem:[#allocation2 + $0xfb0] sm:$0xff]
    %v593 = vld [vmem:[#allocation2 + $0xfb8] sm:$0xff]
    %v594 = vld [vmem:[#allocation2 + $0xfc0] sm:$0xff]
    %v595 = vld [vmem:[#allocation2 + $0xfc8] sm:$0xff]
    %v596 = vld [vmem:[#allocation2 + $0xfd0] sm:$0xff]
    %v597 = vld [vmem:[#allocation2 + $0xfd8] sm:$0xff]
    %v598 = vld [vmem:[#allocation2 + $0xfe0] sm:$0xff]
    %v599 = vld [vmem:[#allocation2 + $0xfe8] sm:$0xff]
    %v600 = vld [vmem:[#allocation2 + $0xff0] sm:$0xff]
    %v601 = vld [vmem:[#allocation2 + $0xff8] sm:$0xff]
    %v602 = vld [vmem:[#allocation2 + $0x1000] sm:$0xff]
    %v603 = vld [vmem:[#allocation2 + $0x1008] sm:$0xff]
    %v604 = vld [vmem:[#allocation2 + $0x1010] sm:$0xff]
    %v605 = vld [vmem:[#allocation2 + $0x1018] sm:$0xff]
    %v606 = vld [vmem:[#allocation2 + $0x1020] sm:$0xff]
    %v607 = vld [vmem:[#allocation2 + $0x1028] sm:$0xff]
    %v608 = vld [vmem:[#allocation2 + $0x1030] sm:$0xff]
    %v609 = vld [vmem:[#allocation2 + $0x1038] sm:$0xff]
    %v610 = vld [vmem:[#allocation2 + $0x1040] sm:$0xff]
    %v611 = vld [vmem:[#allocation2 + $0x1048] sm:$0xff]
    %v612 = vld [vmem:[#allocation2 + $0x1050] sm:$0xff]
    %v613 = vld [vmem:[#allocation2 + $0x1058] sm:$0xff]
    %v614 = vld [vmem:[#allocation2 + $0x1060] sm:$0xff]
    %v615 = vld [vmem:[#allocation2 + $0x1068] sm:$0xff]
    %v616 = vld [vmem:[#allocation2 + $0x1070] sm:$0xff]
    %v617 = vld [vmem:[#allocation2 + $0x1078] sm:$0xff]
    %v618 = vld [vmem:[#allocation2 + $0x1080] sm:$0xff]
    %v619 = vld [vmem:[#allocation2 + $0x1088] sm:$0xff]
    %v620 = vld [vmem:[#allocation2 + $0x1090] sm:$0xff]
    %v621 = vld [vmem:[#allocation2 + $0x1098] sm:$0xff]
    %v622 = vld [vmem:[#allocation2 + $0x10a0] sm:$0xff]
    %v623 = vld [vmem:[#allocation2 + $0x10a8] sm:$0xff]
    %v624 = vld [vmem:[#allocation2 + $0x10b0] sm:$0xff]
    %v625 = vld [vmem:[#allocation2 + $0x10b8] sm:$0xff]
    %v626 = vld [vmem:[#allocation2 + $0x10c0] sm:$0xff]
    %v627 = vld [vmem:[#allocation2 + $0x10c8] sm:$0xff]
    %v628 = vld [vmem:[#allocation2 + $0x10d0] sm:$0xff]
    %v629 = vld [vmem:[#allocation2 + $0x10d8] sm:$0xff]
    %v630 = vld [vmem:[#allocation2 + $0x10e0] sm:$0xff]
    %v631 = vld [vmem:[#allocation2 + $0x10e8] sm:$0xff]
    %v632 = vld [vmem:[#allocation2 + $0x10f0] sm:$0xff]
    %v633 = vld [vmem:[#allocation2 + $0x10f8] sm:$0xff]
    %v634 = vld [vmem:[#allocation2 + $0x1100] sm:$0xff]
    %v635 = vld [vmem:[#allocation2 + $0x1108] sm:$0xff]
    %v636 = vld [vmem:[#allocation2 + $0x1110] sm:$0xff]
    %v637 = vld [vmem:[#allocation2 + $0x1118] sm:$0xff]
    %v638 = vld [vmem:[#allocation2 + $0x1120] sm:$0xff]
    %v639 = vld [vmem:[#allocation2 + $0x1128] sm:$0xff]
    %v640 = vld [vmem:[#allocation2 + $0x1130] sm:$0xff]
    %v641 = vld [vmem:[#allocation2 + $0x1138] sm:$0xff]
    %v642 = vld [vmem:[#allocation2 + $0x1140] sm:$0xff]
    %v643 = vld [vmem:[#allocation2 + $0x1148] sm:$0xff]
    %v644 = vld [vmem:[#allocation2 + $0x1150] sm:$0xff]
    %v645 = vld [vmem:[#allocation2 + $0x1158] sm:$0xff]
    %v646 = vld [vmem:[#allocation2 + $0x1160] sm:$0xff]
    %v647 = vld [vmem:[#allocation2 + $0x1168] sm:$0xff]
    %v648 = vld [vmem:[#allocation2 + $0x1170] sm:$0xff]
    %v649 = vld [vmem:[#allocation2 + $0x1178] sm:$0xff]
    %v650 = vld [vmem:[#allocation2 + $0x1180] sm:$0xff]
    %v651 = vld [vmem:[#allocation2 + $0x1188] sm:$0xff]
    %v652 = vld [vmem:[#allocation2 + $0x1190] sm:$0xff]
    %v653 = vld [vmem:[#allocation2 + $0x1198] sm:$0xff]
    %v654 = vld [vmem:[#allocation2 + $0x11a0] sm:$0xff]
    %v655 = vld [vmem:[#allocation2 + $0x11a8] sm:$0xff]
    %v656 = vld [vmem:[#allocation2 + $0x11b0] sm:$0xff]
    %v657 = vld [vmem:[#allocation2 + $0x11b8] sm:$0xff]
    %v658 = vld [vmem:[#allocation2 + $0x11c0] sm:$0xff]
    %v659 = vld [vmem:[#allocation2 + $0x11c8] sm:$0xff]
    %v660 = vld [vmem:[#allocation2 + $0x11d0] sm:$0xff]
    %v661 = vld [vmem:[#allocation2 + $0x11d8] sm:$0xff]
    %v662 = vld [vmem:[#allocation2 + $0x11e0] sm:$0xff]
    %v663 = vld [vmem:[#allocation2 + $0x11e8] sm:$0xff]
    %v664 = vld [vmem:[#allocation2 + $0x11f0] sm:$0xff]
    %v665 = vld [vmem:[#allocation2 + $0x11f8] sm:$0xff]
    %v666 = vld [vmem:[#allocation2 + $0x1200] sm:$0xff]
    %v667 = vld [vmem:[#allocation2 + $0x1208] sm:$0xff]
    %v668 = vld [vmem:[#allocation2 + $0x1210] sm:$0xff]
    %v669 = vld [vmem:[#allocation2 + $0x1218] sm:$0xff]
    %v670 = vld [vmem:[#allocation2 + $0x1220] sm:$0xff]
    %v671 = vld [vmem:[#allocation2 + $0x1228] sm:$0xff]
    %v672 = vld [vmem:[#allocation2 + $0x1230] sm:$0xff]
    %v673 = vld [vmem:[#allocation2 + $0x1238] sm:$0xff]
    %v674 = vld [vmem:[#allocation2 + $0x1240] sm:$0xff]
    %v675 = vld [vmem:[#allocation2 + $0x1248] sm:$0xff]
    %v676 = vld [vmem:[#allocation2 + $0x1250] sm:$0xff]
    %v677 = vld [vmem:[#allocation2 + $0x1258] sm:$0xff]
    %v678 = vld [vmem:[#allocation2 + $0x1260] sm:$0xff]
    %v679 = vld [vmem:[#allocation2 + $0x1268] sm:$0xff]
    %v680 = vld [vmem:[#allocation2 + $0x1270] sm:$0xff]
    %v681 = vld [vmem:[#allocation2 + $0x1278] sm:$0xff]
    %v682 = vld [vmem:[#allocation2 + $0x1280] sm:$0xff]
    %v683 = vld [vmem:[#allocation2 + $0x1288] sm:$0xff]
    %v684 = vld [vmem:[#allocation2 + $0x1290] sm:$0xff]
    %v685 = vld [vmem:[#allocation2 + $0x1298] sm:$0xff]
    %v686 = vld [vmem:[#allocation2 + $0x12a0] sm:$0xff]
    %v687 = vld [vmem:[#allocation2 + $0x12a8] sm:$0xff]
    %v688 = vld [vmem:[#allocation2 + $0x12b0] sm:$0xff]
    %v689 = vld [vmem:[#allocation2 + $0x12b8] sm:$0xff]
    %v690 = vld [vmem:[#allocation2 + $0x12c0] sm:$0xff]
    %v691 = vld [vmem:[#allocation2 + $0x12c8] sm:$0xff]
    %v692 = vld [vmem:[#allocation2 + $0x12d0] sm:$0xff]
    %v693 = vld [vmem:[#allocation2 + $0x12d8] sm:$0xff]
    %v694 = vld [vmem:[#allocation2 + $0x12e0] sm:$0xff]
    %v695 = vld [vmem:[#allocation2 + $0x12e8] sm:$0xff]
    %v696 = vld [vmem:[#allocation2 + $0x12f0] sm:$0xff]
    %v697 = vld [vmem:[#allocation2 + $0x12f8] sm:$0xff]
    %v698 = vld [vmem:[#allocation2 + $0x1300] sm:$0xff]
    %v699 = vld [vmem:[#allocation2 + $0x1308] sm:$0xff]
    %v700 = vld [vmem:[#allocation2 + $0x1310] sm:$0xff]
    %v701 = vld [vmem:[#allocation2 + $0x1318] sm:$0xff]
    %v702 = vld [vmem:[#allocation2 + $0x1320] sm:$0xff]
    %v703 = vld [vmem:[#allocation2 + $0x1328] sm:$0xff]
    %v704 = vld [vmem:[#allocation2 + $0x1330] sm:$0xff]
    %v705 = vld [vmem:[#allocation2 + $0x1338] sm:$0xff]
    %v706 = vld [vmem:[#allocation2 + $0x1340] sm:$0xff]
    %v707 = vld [vmem:[#allocation2 + $0x1348] sm:$0xff]
    %v708 = vld [vmem:[#allocation2 + $0x1350] sm:$0xff]
    %v709 = vld [vmem:[#allocation2 + $0x1358] sm:$0xff]
    %v710 = vld [vmem:[#allocation2 + $0x1360] sm:$0xff]
    %v711 = vld [vmem:[#allocation2 + $0x1368] sm:$0xff]
    %v712 = vld [vmem:[#allocation2 + $0x1370] sm:$0xff]
    %v713 = vld [vmem:[#allocation2 + $0x1378] sm:$0xff]
    %v714 = vld [vmem:[#allocation2 + $0x1380] sm:$0xff]
    %v715 = vld [vmem:[#allocation2 + $0x1388] sm:$0xff]
    %v716 = vld [vmem:[#allocation2 + $0x1390] sm:$0xff]
    %v717 = vld [vmem:[#allocation2 + $0x1398] sm:$0xff]
    %v718 = vld [vmem:[#allocation2 + $0x13a0] sm:$0xff]
    %v719 = vld [vmem:[#allocation2 + $0x13a8] sm:$0xff]
    %v720 = vld [vmem:[#allocation2 + $0x13b0] sm:$0xff]
    %v721 = vld [vmem:[#allocation2 + $0x13b8] sm:$0xff]
    %v722 = vld [vmem:[#allocation2 + $0x13c0] sm:$0xff]
    %v723 = vld [vmem:[#allocation2 + $0x13c8] sm:$0xff]
    %v724 = vld [vmem:[#allocation2 + $0x13d0] sm:$0xff]
    %v725 = vld [vmem:[#allocation2 + $0x13d8] sm:$0xff]
    %v726 = vld [vmem:[#allocation2 + $0x13e0] sm:$0xff]
    %v727 = vld [vmem:[#allocation2 + $0x13e8] sm:$0xff]
    %v728 = vld [vmem:[#allocation2 + $0x13f0] sm:$0xff]
    %v729 = vld [vmem:[#allocation2 + $0x13f8] sm:$0xff]
    %v730 = vld [vmem:[#allocation2 + $0x1400] sm:$0xff]
    %v731 = vld [vmem:[#allocation2 + $0x1408] sm:$0xff]
    %v732 = vld [vmem:[#allocation2 + $0x1410] sm:$0xff]
    %v733 = vld [vmem:[#allocation2 + $0x1418] sm:$0xff]
    %v734 = vld [vmem:[#allocation2 + $0x1420] sm:$0xff]
    %v735 = vld [vmem:[#allocation2 + $0x1428] sm:$0xff]
    %v736 = vld [vmem:[#allocation2 + $0x1430] sm:$0xff]
    %v737 = vld [vmem:[#allocation2 + $0x1438] sm:$0xff]
    %v738 = vld [vmem:[#allocation2 + $0x1440] sm:$0xff]
    %v739 = vld [vmem:[#allocation2 + $0x1448] sm:$0xff]
    %v740 = vld [vmem:[#allocation2 + $0x1450] sm:$0xff]
    %v741 = vld [vmem:[#allocation2 + $0x1458] sm:$0xff]
    %v742 = vld [vmem:[#allocation2 + $0x1460] sm:$0xff]
    %v743 = vld [vmem:[#allocation2 + $0x1468] sm:$0xff]
    %v744 = vld [vmem:[#allocation2 + $0x1470] sm:$0xff]
    %v745 = vld [vmem:[#allocation2 + $0x1478] sm:$0xff]
    %v746 = vld [vmem:[#allocation2 + $0x1480] sm:$0xff]
    %v747 = vld [vmem:[#allocation2 + $0x1488] sm:$0xff]
    %v748 = vld [vmem:[#allocation2 + $0x1490] sm:$0xff]
    %v749 = vld [vmem:[#allocation2 + $0x1498] sm:$0xff]
    %v750 = vld [vmem:[#allocation2 + $0x14a0] sm:$0xff]
    %v751 = vld [vmem:[#allocation2 + $0x14a8] sm:$0xff]
    %v752 = vld [vmem:[#allocation2 + $0x14b0] sm:$0xff]
    %v753 = vld [vmem:[#allocation2 + $0x14b8] sm:$0xff]
    %v754 = vld [vmem:[#allocation2 + $0x14c0] sm:$0xff]
    %v755 = vld [vmem:[#allocation2 + $0x14c8] sm:$0xff]
    %v756 = vld [vmem:[#allocation2 + $0x14d0] sm:$0xff]
    %v757 = vld [vmem:[#allocation2 + $0x14d8] sm:$0xff]
    %v758 = vld [vmem:[#allocation2 + $0x14e0] sm:$0xff]
    %v759 = vld [vmem:[#allocation2 + $0x14e8] sm:$0xff]
    %v760 = vld [vmem:[#allocation2 + $0x14f0] sm:$0xff]
    %v761 = vld [vmem:[#allocation2 + $0x14f8] sm:$0xff]
    %v762 = vld [vmem:[#allocation2 + $0x1500] sm:$0xff]
    %v763 = vld [vmem:[#allocation2 + $0x1508] sm:$0xff]
    %v764 = vld [vmem:[#allocation2 + $0x1510] sm:$0xff]
    %v765 = vld [vmem:[#allocation2 + $0x1518] sm:$0xff]
    %v766 = vld [vmem:[#allocation2 + $0x1520] sm:$0xff]
    %v767 = vld [vmem:[#allocation2 + $0x1528] sm:$0xff]
    %v768 = vld [vmem:[#allocation2 + $0x1530] sm:$0xff]
    %v769 = vld [vmem:[#allocation2 + $0x1538] sm:$0xff]
    %v770 = vld [vmem:[#allocation2 + $0x1540] sm:$0xff]
    %v771 = vld [vmem:[#allocation2 + $0x1548] sm:$0xff]
    %v772 = vld [vmem:[#allocation2 + $0x1550] sm:$0xff]
    %v773 = vld [vmem:[#allocation2 + $0x1558] sm:$0xff]
    %v774 = vld [vmem:[#allocation2 + $0x1560] sm:$0xff]
    %v775 = vld [vmem:[#allocation2 + $0x1568] sm:$0xff]
    %v776 = vld [vmem:[#allocation2 + $0x1570] sm:$0xff]
    %v777 = vld [vmem:[#allocation2 + $0x1578] sm:$0xff]
    %v778 = vld [vmem:[#allocation2 + $0x1580] sm:$0xff]
    %v779 = vld [vmem:[#allocation2 + $0x1588] sm:$0xff]
    %v780 = vld [vmem:[#allocation2 + $0x1590] sm:$0xff]
    %v781 = vld [vmem:[#allocation2 + $0x1598] sm:$0xff]
    %v782 = vld [vmem:[#allocation2 + $0x15a0] sm:$0xff]
    %v783 = vld [vmem:[#allocation2 + $0x15a8] sm:$0xff]
    %v784 = vld [vmem:[#allocation2 + $0x15b0] sm:$0xff]
    %v785 = vld [vmem:[#allocation2 + $0x15b8] sm:$0xff]
    %v786 = vld [vmem:[#allocation2 + $0x15c0] sm:$0xff]
    %v787 = vld [vmem:[#allocation2 + $0x15c8] sm:$0xff]
    %v788 = vld [vmem:[#allocation2 + $0x15d0] sm:$0xff]
    %v789 = vld [vmem:[#allocation2 + $0x15d8] sm:$0xff]
    %v790 = vld [vmem:[#allocation2 + $0x15e0] sm:$0xff]
    %v791 = vld [vmem:[#allocation2 + $0x15e8] sm:$0xff]
    %v792 = vld [vmem:[#allocation2 + $0x15f0] sm:$0xff]
    %v793 = vld [vmem:[#allocation2 + $0x15f8] sm:$0xff]
    %v794 = vld [vmem:[#allocation2 + $0x1600] sm:$0xff]
    %v795 = vld [vmem:[#allocation2 + $0x1608] sm:$0xff]
    %v796 = vld [vmem:[#allocation2 + $0x1610] sm:$0xff]
    %v797 = vld [vmem:[#allocation2 + $0x1618] sm:$0xff]
    %v798 = vld [vmem:[#allocation2 + $0x1620] sm:$0xff]
    %v799 = vld [vmem:[#allocation2 + $0x1628] sm:$0xff]
    %v800 = vld [vmem:[#allocation2 + $0x1630] sm:$0xff]
    %v801 = vld [vmem:[#allocation2 + $0x1638] sm:$0xff]
    %v802 = vld [vmem:[#allocation2 + $0x1640] sm:$0xff]
    %v803 = vld [vmem:[#allocation2 + $0x1648] sm:$0xff]
    %v804 = vld [vmem:[#allocation2 + $0x1650] sm:$0xff]
    %v805 = vld [vmem:[#allocation2 + $0x1658] sm:$0xff]
    %v806 = vld [vmem:[#allocation2 + $0x1660] sm:$0xff]
    %v807 = vld [vmem:[#allocation2 + $0x1668] sm:$0xff]
    %v808 = vld [vmem:[#allocation2 + $0x1670] sm:$0xff]
    %v809 = vld [vmem:[#allocation2 + $0x1678] sm:$0xff]
    %v810 = vld [vmem:[#allocation2 + $0x1680] sm:$0xff]
    %v811 = vld [vmem:[#allocation2 + $0x1688] sm:$0xff]
    %v812 = vld [vmem:[#allocation2 + $0x1690] sm:$0xff]
    %v813 = vld [vmem:[#allocation2 + $0x1698] sm:$0xff]
    %v814 = vld [vmem:[#allocation2 + $0x16a0] sm:$0xff]
    %v815 = vld [vmem:[#allocation2 + $0x16a8] sm:$0xff]
    %v816 = vld [vmem:[#allocation2 + $0x16b0] sm:$0xff]
    %v817 = vld [vmem:[#allocation2 + $0x16b8] sm:$0xff]
    %v818 = vld [vmem:[#allocation2 + $0x16c0] sm:$0xff]
    %v819 = vld [vmem:[#allocation2 + $0x16c8] sm:$0xff]
    %v820 = vld [vmem:[#allocation2 + $0x16d0] sm:$0xff]
    %v821 = vld [vmem:[#allocation2 + $0x16d8] sm:$0xff]
    %v822 = vld [vmem:[#allocation2 + $0x16e0] sm:$0xff]
    %v823 = vld [vmem:[#allocation2 + $0x16e8] sm:$0xff]
    %v824 = vld [vmem:[#allocation2 + $0x16f0] sm:$0xff]
    %v825 = vld [vmem:[#allocation2 + $0x16f8] sm:$0xff]
    %v826 = vld [vmem:[#allocation2 + $0x1700] sm:$0xff]
    %v827 = vld [vmem:[#allocation2 + $0x1708] sm:$0xff]
    %v828 = vld [vmem:[#allocation2 + $0x1710] sm:$0xff]
    %v829 = vld [vmem:[#allocation2 + $0x1718] sm:$0xff]
    %v830 = vld [vmem:[#allocation2 + $0x1720] sm:$0xff]
    %v831 = vld [vmem:[#allocation2 + $0x1728] sm:$0xff]
    %v832 = vld [vmem:[#allocation2 + $0x1730] sm:$0xff]
    %v833 = vld [vmem:[#allocation2 + $0x1738] sm:$0xff]
    %v834 = vld [vmem:[#allocation2 + $0x1740] sm:$0xff]
    %v835 = vld [vmem:[#allocation2 + $0x1748] sm:$0xff]
    %v836 = vld [vmem:[#allocation2 + $0x1750] sm:$0xff]
    %v837 = vld [vmem:[#allocation2 + $0x1758] sm:$0xff]
    %v838 = vld [vmem:[#allocation2 + $0x1760] sm:$0xff]
    %v839 = vld [vmem:[#allocation2 + $0x1768] sm:$0xff]
    %v840 = vld [vmem:[#allocation2 + $0x1770] sm:$0xff]
    %v841 = vld [vmem:[#allocation2 + $0x1778] sm:$0xff]
    %v842 = vld [vmem:[#allocation2 + $0x1780] sm:$0xff]
    %v843 = vld [vmem:[#allocation2 + $0x1788] sm:$0xff]
    %v844 = vld [vmem:[#allocation2 + $0x1790] sm:$0xff]
    %v845 = vld [vmem:[#allocation2 + $0x1798] sm:$0xff]
    %v846 = vld [vmem:[#allocation2 + $0x17a0] sm:$0xff]
    %v847 = vld [vmem:[#allocation2 + $0x17a8] sm:$0xff]
    %v848 = vld [vmem:[#allocation2 + $0x17b0] sm:$0xff]
    %v849 = vld [vmem:[#allocation2 + $0x17b8] sm:$0xff]
    %v850 = vld [vmem:[#allocation2 + $0x17c0] sm:$0xff]
    %v851 = vld [vmem:[#allocation2 + $0x17c8] sm:$0xff]
    %v852 = vld [vmem:[#allocation2 + $0x17d0] sm:$0xff]
    %v853 = vld [vmem:[#allocation2 + $0x17d8] sm:$0xff]
    %v854 = vld [vmem:[#allocation2 + $0x17e0] sm:$0xff]
    %v855 = vld [vmem:[#allocation2 + $0x17e8] sm:$0xff]
    %v856 = vld [vmem:[#allocation2 + $0x17f0] sm:$0xff]
    %v857 = vld [vmem:[#allocation2 + $0x17f8] sm:$0xff]
    %v858 = vld [vmem:[#allocation2 + $0x1800] sm:$0xff]
    %v859 = vld [vmem:[#allocation2 + $0x1808] sm:$0xff]
    %v860 = vld [vmem:[#allocation2 + $0x1810] sm:$0xff]
    %v861 = vld [vmem:[#allocation2 + $0x1818] sm:$0xff]
    %v862 = vld [vmem:[#allocation2 + $0x1820] sm:$0xff]
    %v863 = vld [vmem:[#allocation2 + $0x1828] sm:$0xff]
    %v864 = vld [vmem:[#allocation2 + $0x1830] sm:$0xff]
    %v865 = vld [vmem:[#allocation2 + $0x1838] sm:$0xff]
    %v866 = vld [vmem:[#allocation2 + $0x1840] sm:$0xff]
    %v867 = vld [vmem:[#allocation2 + $0x1848] sm:$0xff]
    %v868 = vld [vmem:[#allocation2 + $0x1850] sm:$0xff]
    %v869 = vld [vmem:[#allocation2 + $0x1858] sm:$0xff]
    %v870 = vld [vmem:[#allocation2 + $0x1860] sm:$0xff]
    %v871 = vld [vmem:[#allocation2 + $0x1868] sm:$0xff]
    %v872 = vld [vmem:[#allocation2 + $0x1870] sm:$0xff]
    %v873 = vld [vmem:[#allocation2 + $0x1878] sm:$0xff]
    %v874 = vld [vmem:[#allocation2 + $0x1880] sm:$0xff]
    %v875 = vld [vmem:[#allocation2 + $0x1888] sm:$0xff]
    %v876 = vld [vmem:[#allocation2 + $0x1890] sm:$0xff]
    %v877 = vld [vmem:[#allocation2 + $0x1898] sm:$0xff]
    %v878 = vld [vmem:[#allocation2 + $0x18a0] sm:$0xff]
    %v879 = vld [vmem:[#allocation2 + $0x18a8] sm:$0xff]
    %v880 = vld [vmem:[#allocation2 + $0x18b0] sm:$0xff]
    %v881 = vld [vmem:[#allocation2 + $0x18b8] sm:$0xff]
    %v882 = vld [vmem:[#allocation2 + $0x18c0] sm:$0xff]
    %v883 = vld [vmem:[#allocation2 + $0x18c8] sm:$0xff]
    %v884 = vld [vmem:[#allocation2 + $0x18d0] sm:$0xff]
    %v885 = vld [vmem:[#allocation2 + $0x18d8] sm:$0xff]
    %v886 = vld [vmem:[#allocation2 + $0x18e0] sm:$0xff]
    %v887 = vld [vmem:[#allocation2 + $0x18e8] sm:$0xff]
    %v888 = vld [vmem:[#allocation2 + $0x18f0] sm:$0xff]
    %v889 = vld [vmem:[#allocation2 + $0x18f8] sm:$0xff]
    %v890 = vld [vmem:[#allocation2 + $0x1900] sm:$0xff]
    %v891 = vld [vmem:[#allocation2 + $0x1908] sm:$0xff]
    %v892 = vld [vmem:[#allocation2 + $0x1910] sm:$0xff]
    %v893 = vld [vmem:[#allocation2 + $0x1918] sm:$0xff]
    %v894 = vld [vmem:[#allocation2 + $0x1920] sm:$0xff]
    %v895 = vld [vmem:[#allocation2 + $0x1928] sm:$0xff]
    %v896 = vld [vmem:[#allocation2 + $0x1930] sm:$0xff]
    %v897 = vld [vmem:[#allocation2 + $0x1938] sm:$0xff]
    %v898 = vld [vmem:[#allocation2 + $0x1940] sm:$0xff]
    %v899 = vld [vmem:[#allocation2 + $0x1948] sm:$0xff]
    %v900 = vld [vmem:[#allocation2 + $0x1950] sm:$0xff]
    %v901 = vld [vmem:[#allocation2 + $0x1958] sm:$0xff]
    %v902 = vld [vmem:[#allocation2 + $0x1960] sm:$0xff]
    %v903 = vld [vmem:[#allocation2 + $0x1968] sm:$0xff]
    %v904 = vld [vmem:[#allocation2 + $0x1970] sm:$0xff]
    %v905 = vld [vmem:[#allocation2 + $0x1978] sm:$0xff]
    %v906 = vld [vmem:[#allocation2 + $0x1980] sm:$0xff]
    %v907 = vld [vmem:[#allocation2 + $0x1988] sm:$0xff]
    %v908 = vld [vmem:[#allocation2 + $0x1990] sm:$0xff]
    %v909 = vld [vmem:[#allocation2 + $0x1998] sm:$0xff]
    %v910 = vld [vmem:[#allocation2 + $0x19a0] sm:$0xff]
    %v911 = vld [vmem:[#allocation2 + $0x19a8] sm:$0xff]
    %v912 = vld [vmem:[#allocation2 + $0x19b0] sm:$0xff]
    %v913 = vld [vmem:[#allocation2 + $0x19b8] sm:$0xff]
    %v914 = vld [vmem:[#allocation2 + $0x19c0] sm:$0xff]
    %v915 = vld [vmem:[#allocation2 + $0x19c8] sm:$0xff]
    %v916 = vld [vmem:[#allocation2 + $0x19d0] sm:$0xff]
    %v917 = vld [vmem:[#allocation2 + $0x19d8] sm:$0xff]
    %v918 = vld [vmem:[#allocation2 + $0x19e0] sm:$0xff]
    %v919 = vld [vmem:[#allocation2 + $0x19e8] sm:$0xff]
    %v920 = vld [vmem:[#allocation2 + $0x19f0] sm:$0xff]
    %v921 = vld [vmem:[#allocation2 + $0x19f8] sm:$0xff]
    %v922 = vld [vmem:[#allocation2 + $0x1a00] sm:$0xff]
    %v923 = vld [vmem:[#allocation2 + $0x1a08] sm:$0xff]
    %v924 = vld [vmem:[#allocation2 + $0x1a10] sm:$0xff]
    %v925 = vld [vmem:[#allocation2 + $0x1a18] sm:$0xff]
    %v926 = vld [vmem:[#allocation2 + $0x1a20] sm:$0xff]
    %v927 = vld [vmem:[#allocation2 + $0x1a28] sm:$0xff]
    %v928 = vld [vmem:[#allocation2 + $0x1a30] sm:$0xff]
    %v929 = vld [vmem:[#allocation2 + $0x1a38] sm:$0xff]
    %v930 = vld [vmem:[#allocation2 + $0x1a40] sm:$0xff]
    %v931 = vld [vmem:[#allocation2 + $0x1a48] sm:$0xff]
    %v932 = vld [vmem:[#allocation2 + $0x1a50] sm:$0xff]
    %v933 = vld [vmem:[#allocation2 + $0x1a58] sm:$0xff]
    %v934 = vld [vmem:[#allocation2 + $0x1a60] sm:$0xff]
    %v935 = vld [vmem:[#allocation2 + $0x1a68] sm:$0xff]
    %v936 = vld [vmem:[#allocation2 + $0x1a70] sm:$0xff]
    %v937 = vld [vmem:[#allocation2 + $0x1a78] sm:$0xff]
    %v938 = vld [vmem:[#allocation2 + $0x1a80] sm:$0xff]
    %v939 = vld [vmem:[#allocation2 + $0x1a88] sm:$0xff]
    %v940 = vld [vmem:[#allocation2 + $0x1a90] sm:$0xff]
    %v941 = vld [vmem:[#allocation2 + $0x1a98] sm:$0xff]
    %v942 = vld [vmem:[#allocation2 + $0x1aa0] sm:$0xff]
    %v943 = vld [vmem:[#allocation2 + $0x1aa8] sm:$0xff]
    %v944 = vld [vmem:[#allocation2 + $0x1ab0] sm:$0xff]
    %v945 = vld [vmem:[#allocation2 + $0x1ab8] sm:$0xff]
    %v946 = vld [vmem:[#allocation2 + $0x1ac0] sm:$0xff]
    %v947 = vld [vmem:[#allocation2 + $0x1ac8] sm:$0xff]
    %v948 = vld [vmem:[#allocation2 + $0x1ad0] sm:$0xff]
    %v949 = vld [vmem:[#allocation2 + $0x1ad8] sm:$0xff]
    %v950 = vld [vmem:[#allocation2 + $0x1ae0] sm:$0xff]
    %v951 = vld [vmem:[#allocation2 + $0x1ae8] sm:$0xff]
    %v952 = vld [vmem:[#allocation2 + $0x1af0] sm:$0xff]
    %v953 = vld [vmem:[#allocation2 + $0x1af8] sm:$0xff]
    %v954 = vld [vmem:[#allocation2 + $0x1b00] sm:$0xff]
    %v955 = vld [vmem:[#allocation2 + $0x1b08] sm:$0xff]
    %v956 = vld [vmem:[#allocation2 + $0x1b10] sm:$0xff]
    %v957 = vld [vmem:[#allocation2 + $0x1b18] sm:$0xff]
    %v958 = vld [vmem:[#allocation2 + $0x1b20] sm:$0xff]
    %v959 = vld [vmem:[#allocation2 + $0x1b28] sm:$0xff]
    %v960 = vld [vmem:[#allocation2 + $0x1b30] sm:$0xff]
    %v961 = vld [vmem:[#allocation2 + $0x1b38] sm:$0xff]
    %v962 = vld [vmem:[#allocation2 + $0x1b40] sm:$0xff]
    %v963 = vld [vmem:[#allocation2 + $0x1b48] sm:$0xff]
    %v964 = vld [vmem:[#allocation2 + $0x1b50] sm:$0xff]
    %v965 = vld [vmem:[#allocation2 + $0x1b58] sm:$0xff]
    %v966 = vld [vmem:[#allocation2 + $0x1b60] sm:$0xff]
    %v967 = vld [vmem:[#allocation2 + $0x1b68] sm:$0xff]
    %v968 = vld [vmem:[#allocation2 + $0x1b70] sm:$0xff]
    %v969 = vld [vmem:[#allocation2 + $0x1b78] sm:$0xff]
    %v970 = vld [vmem:[#allocation2 + $0x1b80] sm:$0xff]
    %v971 = vld [vmem:[#allocation2 + $0x1b88] sm:$0xff]
    %v972 = vld [vmem:[#allocation2 + $0x1b90] sm:$0xff]
    %v973 = vld [vmem:[#allocation2 + $0x1b98] sm:$0xff]
    %v974 = vld [vmem:[#allocation2 + $0x1ba0] sm:$0xff]
    %v975 = vld [vmem:[#allocation2 + $0x1ba8] sm:$0xff]
    %v976 = vld [vmem:[#allocation2 + $0x1bb0] sm:$0xff]
    %v977 = vld [vmem:[#allocation2 + $0x1bb8] sm:$0xff]
    %v978 = vld [vmem:[#allocation2 + $0x1bc0] sm:$0xff]
    %v979 = vld [vmem:[#allocation2 + $0x1bc8] sm:$0xff]
    %v980 = vld [vmem:[#allocation2 + $0x1bd0] sm:$0xff]
    %v981 = vld [vmem:[#allocation2 + $0x1bd8] sm:$0xff]
    %v982 = vld [vmem:[#allocation2 + $0x1be0] sm:$0xff]
    %v983 = vld [vmem:[#allocation2 + $0x1be8] sm:$0xff]
    %v984 = vld [vmem:[#allocation2 + $0x1bf0] sm:$0xff]
    %v985 = vld [vmem:[#allocation2 + $0x1bf8] sm:$0xff]
    %v986 = vld [vmem:[#allocation2 + $0x1c00] sm:$0xff]
    %v987 = vld [vmem:[#allocation2 + $0x1c08] sm:$0xff]
    %v988 = vld [vmem:[#allocation2 + $0x1c10] sm:$0xff]
    %v989 = vld [vmem:[#allocation2 + $0x1c18] sm:$0xff]
    %v990 = vld [vmem:[#allocation2 + $0x1c20] sm:$0xff]
    %v991 = vld [vmem:[#allocation2 + $0x1c28] sm:$0xff]
    %v992 = vld [vmem:[#allocation2 + $0x1c30] sm:$0xff]
    %v993 = vld [vmem:[#allocation2 + $0x1c38] sm:$0xff]
    %v994 = vld [vmem:[#allocation2 + $0x1c40] sm:$0xff]
    %v995 = vld [vmem:[#allocation2 + $0x1c48] sm:$0xff]
    %v996 = vld [vmem:[#allocation2 + $0x1c50] sm:$0xff]
    %v997 = vld [vmem:[#allocation2 + $0x1c58] sm:$0xff]
    %v998 = vld [vmem:[#allocation2 + $0x1c60] sm:$0xff]
    %v999 = vld [vmem:[#allocation2 + $0x1c68] sm:$0xff]
    %v1000 = vld [vmem:[#allocation2 + $0x1c70] sm:$0xff]
    %v1001 = vld [vmem:[#allocation2 + $0x1c78] sm:$0xff]
    %v1002 = vld [vmem:[#allocation2 + $0x1c80] sm:$0xff]
    %v1003 = vld [vmem:[#allocation2 + $0x1c88] sm:$0xff]
    %v1004 = vld [vmem:[#allocation2 + $0x1c90] sm:$0xff]
    %v1005 = vld [vmem:[#allocation2 + $0x1c98] sm:$0xff]
    %v1006 = vld [vmem:[#allocation2 + $0x1ca0] sm:$0xff]
    %v1007 = vld [vmem:[#allocation2 + $0x1ca8] sm:$0xff]
    %v1008 = vld [vmem:[#allocation2 + $0x1cb0] sm:$0xff]
    %v1009 = vld [vmem:[#allocation2 + $0x1cb8] sm:$0xff]
    %v1010 = vld [vmem:[#allocation2 + $0x1cc0] sm:$0xff]
    %v1011 = vld [vmem:[#allocation2 + $0x1cc8] sm:$0xff]
    %v1012 = vld [vmem:[#allocation2 + $0x1cd0] sm:$0xff]
    %v1013 = vld [vmem:[#allocation2 + $0x1cd8] sm:$0xff]
    %v1014 = vld [vmem:[#allocation2 + $0x1ce0] sm:$0xff]
    %v1015 = vld [vmem:[#allocation2 + $0x1ce8] sm:$0xff]
    %v1016 = vld [vmem:[#allocation2 + $0x1cf0] sm:$0xff]
    %v1017 = vld [vmem:[#allocation2 + $0x1cf8] sm:$0xff]
    %v1018 = vld [vmem:[#allocation2 + $0x1d00] sm:$0xff]
    %v1019 = vld [vmem:[#allocation2 + $0x1d08] sm:$0xff]
    %v1020 = vld [vmem:[#allocation2 + $0x1d10] sm:$0xff]
    %v1021 = vld [vmem:[#allocation2 + $0x1d18] sm:$0xff]
    %v1022 = vld [vmem:[#allocation2 + $0x1d20] sm:$0xff]
    %v1023 = vld [vmem:[#allocation2 + $0x1d28] sm:$0xff]
    %v1024 = vld [vmem:[#allocation2 + $0x1d30] sm:$0xff]
    %v1025 = vld [vmem:[#allocation2 + $0x1d38] sm:$0xff]
    %v1026 = vld [vmem:[#allocation2 + $0x1d40] sm:$0xff]
    %v1027 = vld [vmem:[#allocation2 + $0x1d48] sm:$0xff]
    %v1028 = vld [vmem:[#allocation2 + $0x1d50] sm:$0xff]
    %v1029 = vld [vmem:[#allocation2 + $0x1d58] sm:$0xff]
    %v1030 = vld [vmem:[#allocation2 + $0x1d60] sm:$0xff]
    %v1031 = vld [vmem:[#allocation2 + $0x1d68] sm:$0xff]
    %v1032 = vld [vmem:[#allocation2 + $0x1d70] sm:$0xff]
    %v1033 = vld [vmem:[#allocation2 + $0x1d78] sm:$0xff]
    %v1034 = vld [vmem:[#allocation2 + $0x1d80] sm:$0xff]
    %v1035 = vld [vmem:[#allocation2 + $0x1d88] sm:$0xff]
    %v1036 = vld [vmem:[#allocation2 + $0x1d90] sm:$0xff]
    %v1037 = vld [vmem:[#allocation2 + $0x1d98] sm:$0xff]
    %v1038 = vld [vmem:[#allocation2 + $0x1da0] sm:$0xff]
    %v1039 = vld [vmem:[#allocation2 + $0x1da8] sm:$0xff]
    %v1040 = vld [vmem:[#allocation2 + $0x1db0] sm:$0xff]
    %v1041 = vld [vmem:[#allocation2 + $0x1db8] sm:$0xff]
    %v1042 = vld [vmem:[#allocation2 + $0x1dc0] sm:$0xff]
    %v1043 = vld [vmem:[#allocation2 + $0x1dc8] sm:$0xff]
    %v1044 = vld [vmem:[#allocation2 + $0x1dd0] sm:$0xff]
    %v1045 = vld [vmem:[#allocation2 + $0x1dd8] sm:$0xff]
    %v1046 = vld [vmem:[#allocation2 + $0x1de0] sm:$0xff]
    %v1047 = vld [vmem:[#allocation2 + $0x1de8] sm:$0xff]
    %v1048 = vld [vmem:[#allocation2 + $0x1df0] sm:$0xff]
    %v1049 = vld [vmem:[#allocation2 + $0x1df8] sm:$0xff]
    %v1050 = vld [vmem:[#allocation2 + $0x1e00] sm:$0xff]
    %v1051 = vld [vmem:[#allocation2 + $0x1e08] sm:$0xff]
    %v1052 = vld [vmem:[#allocation2 + $0x1e10] sm:$0xff]
    %v1053 = vld [vmem:[#allocation2 + $0x1e18] sm:$0xff]
    %v1054 = vld [vmem:[#allocation2 + $0x1e20] sm:$0xff]
    %v1055 = vld [vmem:[#allocation2 + $0x1e28] sm:$0xff]
    %v1056 = vld [vmem:[#allocation2 + $0x1e30] sm:$0xff]
    %v1057 = vld [vmem:[#allocation2 + $0x1e38] sm:$0xff]
    %v1058 = vld [vmem:[#allocation2 + $0x1e40] sm:$0xff]
    %v1059 = vld [vmem:[#allocation2 + $0x1e48] sm:$0xff]
    %v1060 = vld [vmem:[#allocation2 + $0x1e50] sm:$0xff]
    %v1061 = vld [vmem:[#allocation2 + $0x1e58] sm:$0xff]
    %v1062 = vld [vmem:[#allocation2 + $0x1e60] sm:$0xff]
    %v1063 = vld [vmem:[#allocation2 + $0x1e68] sm:$0xff]
    %v1064 = vld [vmem:[#allocation2 + $0x1e70] sm:$0xff]
    %v1065 = vld [vmem:[#allocation2 + $0x1e78] sm:$0xff]
    %v1066 = vld [vmem:[#allocation2 + $0x1e80] sm:$0xff]
    %v1067 = vld [vmem:[#allocation2 + $0x1e88] sm:$0xff]
    %v1068 = vld [vmem:[#allocation2 + $0x1e90] sm:$0xff]
    %v1069 = vld [vmem:[#allocation2 + $0x1e98] sm:$0xff]
    %v1070 = vld [vmem:[#allocation2 + $0x1ea0] sm:$0xff]
    %v1071 = vld [vmem:[#allocation2 + $0x1ea8] sm:$0xff]
    %v1072 = vld [vmem:[#allocation2 + $0x1eb0] sm:$0xff]
    %v1073 = vld [vmem:[#allocation2 + $0x1eb8] sm:$0xff]
    %v1074 = vld [vmem:[#allocation2 + $0x1ec0] sm:$0xff]
    %v1075 = vld [vmem:[#allocation2 + $0x1ec8] sm:$0xff]
    %v1076 = vld [vmem:[#allocation2 + $0x1ed0] sm:$0xff]
    %v1077 = vld [vmem:[#allocation2 + $0x1ed8] sm:$0xff]
    %v1078 = vld [vmem:[#allocation2 + $0x1ee0] sm:$0xff]
    %v1079 = vld [vmem:[#allocation2 + $0x1ee8] sm:$0xff]
    %v1080 = vld [vmem:[#allocation2 + $0x1ef0] sm:$0xff]
    %v1081 = vld [vmem:[#allocation2 + $0x1ef8] sm:$0xff]
    %v1082 = vld [vmem:[#allocation2 + $0x1f00] sm:$0xff]
    %v1083 = vld [vmem:[#allocation2 + $0x1f08] sm:$0xff]
    %v1084 = vld [vmem:[#allocation2 + $0x1f10] sm:$0xff]
    %v1085 = vld [vmem:[#allocation2 + $0x1f18] sm:$0xff]
    %v1086 = vld [vmem:[#allocation2 + $0x1f20] sm:$0xff]
    %v1087 = vld [vmem:[#allocation2 + $0x1f28] sm:$0xff]
    %v1088 = vld [vmem:[#allocation2 + $0x1f30] sm:$0xff]
    %v1089 = vld [vmem:[#allocation2 + $0x1f38] sm:$0xff]
    %v1090 = vld [vmem:[#allocation2 + $0x1f40] sm:$0xff]
    %v1091 = vld [vmem:[#allocation2 + $0x1f48] sm:$0xff]
    %v1092 = vld [vmem:[#allocation2 + $0x1f50] sm:$0xff]
    %v1093 = vld [vmem:[#allocation2 + $0x1f58] sm:$0xff]
    %v1094 = vld [vmem:[#allocation2 + $0x1f60] sm:$0xff]
    %v1095 = vld [vmem:[#allocation2 + $0x1f68] sm:$0xff]
    %v1096 = vld [vmem:[#allocation2 + $0x1f70] sm:$0xff]
    %v1097 = vld [vmem:[#allocation2 + $0x1f78] sm:$0xff]
    %v1098 = vld [vmem:[#allocation2 + $0x1f80] sm:$0xff]
    %v1099 = vld [vmem:[#allocation2 + $0x1f88] sm:$0xff]
    %v1100 = vld [vmem:[#allocation2 + $0x1f90] sm:$0xff]
    %v1101 = vld [vmem:[#allocation2 + $0x1f98] sm:$0xff]
    %v1102 = vld [vmem:[#allocation2 + $0x1fa0] sm:$0xff]
    %v1103 = vld [vmem:[#allocation2 + $0x1fa8] sm:$0xff]
    %v1104 = vld [vmem:[#allocation2 + $0x1fb0] sm:$0xff]
    %v1105 = vld [vmem:[#allocation2 + $0x1fb8] sm:$0xff]
    %v1106 = vld [vmem:[#allocation2 + $0x1fc0] sm:$0xff]
    %v1107 = vld [vmem:[#allocation2 + $0x1fc8] sm:$0xff]
    %v1108 = vld [vmem:[#allocation2 + $0x1fd0] sm:$0xff]
    %v1109 = vld [vmem:[#allocation2 + $0x1fd8] sm:$0xff]
    %v1110 = vld [vmem:[#allocation2 + $0x1fe0] sm:$0xff]
    %v1111 = vld [vmem:[#allocation2 + $0x1fe8] sm:$0xff]
    %v1112 = vld [vmem:[#allocation2 + $0x1ff0] sm:$0xff]
    %v1113 = vld [vmem:[#allocation2 + $0x1ff8] sm:$0xff]
    %v1114 = vld [vmem:[#allocation2 + $0x2000] sm:$0xff]
    %v1115 = vld [vmem:[#allocation2 + $0x2008] sm:$0xff]
    %v1116 = vld [vmem:[#allocation2 + $0x2010] sm:$0xff]
    %v1117 = vld [vmem:[#allocation2 + $0x2018] sm:$0xff]
    %v1118 = vld [vmem:[#allocation2 + $0x2020] sm:$0xff]
    %v1119 = vld [vmem:[#allocation2 + $0x2028] sm:$0xff]
    %v1120 = vld [vmem:[#allocation2 + $0x2030] sm:$0xff]
    %v1121 = vld [vmem:[#allocation2 + $0x2038] sm:$0xff]
    %v1122 = vld [vmem:[#allocation2 + $0x2040] sm:$0xff]
    %v1123 = vld [vmem:[#allocation2 + $0x2048] sm:$0xff]
    %v1124 = vld [vmem:[#allocation2 + $0x2050] sm:$0xff]
    %v1125 = vld [vmem:[#allocation2 + $0x2058] sm:$0xff]
    %v1126 = vld [vmem:[#allocation2 + $0x2060] sm:$0xff]
    %v1127 = vld [vmem:[#allocation2 + $0x2068] sm:$0xff]
    %v1128 = vld [vmem:[#allocation2 + $0x2070] sm:$0xff]
    %v1129 = vld [vmem:[#allocation2 + $0x2078] sm:$0xff]
    %v1130 = vld [vmem:[#allocation2 + $0x2080] sm:$0xff]
    %v1131 = vld [vmem:[#allocation2 + $0x2088] sm:$0xff]
    %v1132 = vld [vmem:[#allocation2 + $0x2090] sm:$0xff]
    %v1133 = vld [vmem:[#allocation2 + $0x2098] sm:$0xff]
    %v1134 = vld [vmem:[#allocation2 + $0x20a0] sm:$0xff]
    %v1135 = vld [vmem:[#allocation2 + $0x20a8] sm:$0xff]
    %v1136 = vld [vmem:[#allocation2 + $0x20b0] sm:$0xff]
    %v1137 = vld [vmem:[#allocation2 + $0x20b8] sm:$0xff]
    %v1138 = vld [vmem:[#allocation2 + $0x20c0] sm:$0xff]
    %v1139 = vld [vmem:[#allocation2 + $0x20c8] sm:$0xff]
    %v1140 = vld [vmem:[#allocation2 + $0x20d0] sm:$0xff]
    %v1141 = vld [vmem:[#allocation2 + $0x20d8] sm:$0xff]
    %v1142 = vld [vmem:[#allocation2 + $0x20e0] sm:$0xff]
    %v1143 = vld [vmem:[#allocation2 + $0x20e8] sm:$0xff]
    %v1144 = vld [vmem:[#allocation2 + $0x20f0] sm:$0xff]
    %v1145 = vld [vmem:[#allocation2 + $0x20f8] sm:$0xff]
    %v1146 = vld [vmem:[#allocation2 + $0x2100] sm:$0xff]
    %v1147 = vld [vmem:[#allocation2 + $0x2108] sm:$0xff]
    %v1148 = vld [vmem:[#allocation2 + $0x2110] sm:$0xff]
    %v1149 = vld [vmem:[#allocation2 + $0x2118] sm:$0xff]
    %v1150 = vld [vmem:[#allocation2 + $0x2120] sm:$0xff]
    %v1151 = vld [vmem:[#allocation2 + $0x2128] sm:$0xff]
    %v1152 = vld [vmem:[#allocation2 + $0x2130] sm:$0xff]
    %v1153 = vld [vmem:[#allocation2 + $0x2138] sm:$0xff]
    %v1154 = vld [vmem:[#allocation2 + $0x2140] sm:$0xff]
    %v1155 = vld [vmem:[#allocation2 + $0x2148] sm:$0xff]
    %v1156 = vld [vmem:[#allocation2 + $0x2150] sm:$0xff]
    %v1157 = vld [vmem:[#allocation2 + $0x2158] sm:$0xff]
    %v1158 = vld [vmem:[#allocation2 + $0x2160] sm:$0xff]
    %v1159 = vld [vmem:[#allocation2 + $0x2168] sm:$0xff]
    %v1160 = vld [vmem:[#allocation2 + $0x2170] sm:$0xff]
    %v1161 = vld [vmem:[#allocation2 + $0x2178] sm:$0xff]
    %v1162 = vld [vmem:[#allocation2 + $0x2180] sm:$0xff]
    %v1163 = vld [vmem:[#allocation2 + $0x2188] sm:$0xff]
    %v1164 = vld [vmem:[#allocation2 + $0x2190] sm:$0xff]
    %v1165 = vld [vmem:[#allocation2 + $0x2198] sm:$0xff]
    %v1166 = vld [vmem:[#allocation2 + $0x21a0] sm:$0xff]
    %v1167 = vld [vmem:[#allocation2 + $0x21a8] sm:$0xff]
    %v1168 = vld [vmem:[#allocation2 + $0x21b0] sm:$0xff]
    %v1169 = vld [vmem:[#allocation2 + $0x21b8] sm:$0xff]
    %v1170 = vld [vmem:[#allocation2 + $0x21c0] sm:$0xff]
    %v1171 = vld [vmem:[#allocation2 + $0x21c8] sm:$0xff]
    %v1172 = vld [vmem:[#allocation2 + $0x21d0] sm:$0xff]
    %v1173 = vld [vmem:[#allocation2 + $0x21d8] sm:$0xff]
    %v1174 = vld [vmem:[#allocation2 + $0x21e0] sm:$0xff]
    %v1175 = vld [vmem:[#allocation2 + $0x21e8] sm:$0xff]
    %v1176 = vld [vmem:[#allocation2 + $0x21f0] sm:$0xff]
    %v1177 = vld [vmem:[#allocation2 + $0x21f8] sm:$0xff]
    %v1178 = vld [vmem:[#allocation2 + $0x2200] sm:$0xff]
    %v1179 = vld [vmem:[#allocation2 + $0x2208] sm:$0xff]
    %v1180 = vld [vmem:[#allocation2 + $0x2210] sm:$0xff]
    %v1181 = vld [vmem:[#allocation2 + $0x2218] sm:$0xff]
    %v1182 = vld [vmem:[#allocation2 + $0x2220] sm:$0xff]
    %v1183 = vld [vmem:[#allocation2 + $0x2228] sm:$0xff]
    %v1184 = vld [vmem:[#allocation2 + $0x2230] sm:$0xff]
    %v1185 = vld [vmem:[#allocation2 + $0x2238] sm:$0xff]
    %v1186 = vld [vmem:[#allocation2 + $0x2240] sm:$0xff]
    %v1187 = vld [vmem:[#allocation2 + $0x2248] sm:$0xff]
    %v1188 = vld [vmem:[#allocation2 + $0x2250] sm:$0xff]
    %v1189 = vld [vmem:[#allocation2 + $0x2258] sm:$0xff]
    %v1190 = vld [vmem:[#allocation2 + $0x2260] sm:$0xff]
    %v1191 = vld [vmem:[#allocation2 + $0x2268] sm:$0xff]
    %v1192 = vld [vmem:[#allocation2 + $0x2270] sm:$0xff]
    %v1193 = vld [vmem:[#allocation2 + $0x2278] sm:$0xff]
    %v1194 = vld [vmem:[#allocation2 + $0x2280] sm:$0xff]
    %v1195 = vld [vmem:[#allocation2 + $0x2288] sm:$0xff]
    %v1196 = vld [vmem:[#allocation2 + $0x2290] sm:$0xff]
    %v1197 = vld [vmem:[#allocation2 + $0x2298] sm:$0xff]
    %v1198 = vld [vmem:[#allocation2 + $0x22a0] sm:$0xff]
    %v1199 = vld [vmem:[#allocation2 + $0x22a8] sm:$0xff]
    %v1200 = vld [vmem:[#allocation2 + $0x22b0] sm:$0xff]
    %v1201 = vld [vmem:[#allocation2 + $0x22b8] sm:$0xff]
    %v1202 = vld [vmem:[#allocation2 + $0x22c0] sm:$0xff]
    %v1203 = vld [vmem:[#allocation2 + $0x22c8] sm:$0xff]
    %v1204 = vld [vmem:[#allocation2 + $0x22d0] sm:$0xff]
    %v1205 = vld [vmem:[#allocation2 + $0x22d8] sm:$0xff]
    %v1206 = vld [vmem:[#allocation2 + $0x22e0] sm:$0xff]
    %v1207 = vld [vmem:[#allocation2 + $0x22e8] sm:$0xff]
    %v1208 = vld [vmem:[#allocation2 + $0x22f0] sm:$0xff]
    %v1209 = vld [vmem:[#allocation2 + $0x22f8] sm:$0xff]
    %v1210 = vld [vmem:[#allocation2 + $0x2300] sm:$0xff]
    %v1211 = vld [vmem:[#allocation2 + $0x2308] sm:$0xff]
    %v1212 = vld [vmem:[#allocation2 + $0x2310] sm:$0xff]
    %v1213 = vld [vmem:[#allocation2 + $0x2318] sm:$0xff]
    %v1214 = vld [vmem:[#allocation2 + $0x2320] sm:$0xff]
    %v1215 = vld [vmem:[#allocation2 + $0x2328] sm:$0xff]
    %v1216 = vld [vmem:[#allocation2 + $0x2330] sm:$0xff]
    %v1217 = vld [vmem:[#allocation2 + $0x2338] sm:$0xff]
    %v1218 = vld [vmem:[#allocation2 + $0x2340] sm:$0xff]
    %v1219 = vld [vmem:[#allocation2 + $0x2348] sm:$0xff]
    %v1220 = vld [vmem:[#allocation2 + $0x2350] sm:$0xff]
    %v1221 = vld [vmem:[#allocation2 + $0x2358] sm:$0xff]
    %v1222 = vld [vmem:[#allocation2 + $0x2360] sm:$0xff]
    %v1223 = vld [vmem:[#allocation2 + $0x2368] sm:$0xff]
    %v1224 = vld [vmem:[#allocation2 + $0x2370] sm:$0xff]
    %v1225 = vld [vmem:[#allocation2 + $0x2378] sm:$0xff]
    %v1226 = vld [vmem:[#allocation2 + $0x2380] sm:$0xff]
    %v1227 = vld [vmem:[#allocation2 + $0x2388] sm:$0xff]
    %v1228 = vld [vmem:[#allocation2 + $0x2390] sm:$0xff]
    %v1229 = vld [vmem:[#allocation2 + $0x2398] sm:$0xff]
    %v1230 = vld [vmem:[#allocation2 + $0x23a0] sm:$0xff]
    %v1231 = vld [vmem:[#allocation2 + $0x23a8] sm:$0xff]
    %v1232 = vld [vmem:[#allocation2 + $0x23b0] sm:$0xff]
    %v1233 = vld [vmem:[#allocation2 + $0x23b8] sm:$0xff]
    %v1234 = vld [vmem:[#allocation2 + $0x23c0] sm:$0xff]
    %v1235 = vld [vmem:[#allocation2 + $0x23c8] sm:$0xff]
    %v1236 = vld [vmem:[#allocation2 + $0x23d0] sm:$0xff]
    %v1237 = vld [vmem:[#allocation2 + $0x23d8] sm:$0xff]
    %v1238 = vld [vmem:[#allocation2 + $0x23e0] sm:$0xff]
    %v1239 = vld [vmem:[#allocation2 + $0x23e8] sm:$0xff]
    %v1240 = vld [vmem:[#allocation2 + $0x23f0] sm:$0xff]
    %v1241 = vld [vmem:[#allocation2 + $0x23f8] sm:$0xff]
    %v1242 = vld [vmem:[#allocation2 + $0x2400] sm:$0xff]
    %v1243 = vld [vmem:[#allocation2 + $0x2408] sm:$0xff]
    %v1244 = vld [vmem:[#allocation2 + $0x2410] sm:$0xff]
    %v1245 = vld [vmem:[#allocation2 + $0x2418] sm:$0xff]
    %v1246 = vld [vmem:[#allocation2 + $0x2420] sm:$0xff]
    %v1247 = vld [vmem:[#allocation2 + $0x2428] sm:$0xff]
    %v1248 = vld [vmem:[#allocation2 + $0x2430] sm:$0xff]
    %v1249 = vld [vmem:[#allocation2 + $0x2438] sm:$0xff]
    %v1250 = vld [vmem:[#allocation2 + $0x2440] sm:$0xff]
    %v1251 = vld [vmem:[#allocation2 + $0x2448] sm:$0xff]
    %v1252 = vld [vmem:[#allocation2 + $0x2450] sm:$0xff]
    %v1253 = vld [vmem:[#allocation2 + $0x2458] sm:$0xff]
    %v1254 = vld [vmem:[#allocation2 + $0x2460] sm:$0xff]
    %v1255 = vld [vmem:[#allocation2 + $0x2468] sm:$0xff]
    %v1256 = vld [vmem:[#allocation2 + $0x2470] sm:$0xff]
    %v1257 = vld [vmem:[#allocation2 + $0x2478] sm:$0xff]
    %v1258 = vld [vmem:[#allocation2 + $0x2480] sm:$0xff]
    %v1259 = vld [vmem:[#allocation2 + $0x2488] sm:$0xff]
    %v1260 = vld [vmem:[#allocation2 + $0x2490] sm:$0xff]
    %v1261 = vld [vmem:[#allocation2 + $0x2498] sm:$0xff]
    %v1262 = vld [vmem:[#allocation2 + $0x24a0] sm:$0xff]
    %v1263 = vld [vmem:[#allocation2 + $0x24a8] sm:$0xff]
    %v1264 = vld [vmem:[#allocation2 + $0x24b0] sm:$0xff]
    %v1265 = vld [vmem:[#allocation2 + $0x24b8] sm:$0xff]
    %v1266 = vld [vmem:[#allocation2 + $0x24c0] sm:$0xff]
    %v1267 = vld [vmem:[#allocation2 + $0x24c8] sm:$0xff]
    %v1268 = vld [vmem:[#allocation2 + $0x24d0] sm:$0xff]
    %v1269 = vld [vmem:[#allocation2 + $0x24d8] sm:$0xff]
    %v1270 = vld [vmem:[#allocation2 + $0x24e0] sm:$0xff]
    %v1271 = vld [vmem:[#allocation2 + $0x24e8] sm:$0xff]
    %v1272 = vld [vmem:[#allocation2 + $0x24f0] sm:$0xff]
    %v1273 = vld [vmem:[#allocation2 + $0x24f8] sm:$0xff]
    %v1274 = vld [vmem:[#allocation2 + $0x2500] sm:$0xff]
    %v1275 = vld [vmem:[#allocation2 + $0x2508] sm:$0xff]
    %v1276 = vld [vmem:[#allocation2 + $0x2510] sm:$0xff]
    %v1277 = vld [vmem:[#allocation2 + $0x2518] sm:$0xff]
    %v1278 = vld [vmem:[#allocation2 + $0x2520] sm:$0xff]
    %v1279 = vld [vmem:[#allocation2 + $0x2528] sm:$0xff]
    %v1280 = vld [vmem:[#allocation2 + $0x2530] sm:$0xff]
    %v1281 = vld [vmem:[#allocation2 + $0x2538] sm:$0xff]
    %v1282 = vld [vmem:[#allocation2 + $0x2540] sm:$0xff]
    %v1283 = vld [vmem:[#allocation2 + $0x2548] sm:$0xff]
    %v1284 = vld [vmem:[#allocation2 + $0x2550] sm:$0xff]
    %v1285 = vld [vmem:[#allocation2 + $0x2558] sm:$0xff]
    %v1286 = vld [vmem:[#allocation2 + $0x2560] sm:$0xff]
    %v1287 = vld [vmem:[#allocation2 + $0x2568] sm:$0xff]
    %v1288 = vld [vmem:[#allocation2 + $0x2570] sm:$0xff]
    %v1289 = vld [vmem:[#allocation2 + $0x2578] sm:$0xff]
    %v1290 = vld [vmem:[#allocation2 + $0x2580] sm:$0xff]
    %v1291 = vld [vmem:[#allocation2 + $0x2588] sm:$0xff]
    %v1292 = vld [vmem:[#allocation2 + $0x2590] sm:$0xff]
    %v1293 = vld [vmem:[#allocation2 + $0x2598] sm:$0xff]
    %v1294 = vld [vmem:[#allocation2 + $0x25a0] sm:$0xff]
    %v1295 = vld [vmem:[#allocation2 + $0x25a8] sm:$0xff]
    %v1296 = vld [vmem:[#allocation2 + $0x25b0] sm:$0xff]
    %v1297 = vld [vmem:[#allocation2 + $0x25b8] sm:$0xff]
    %v1298 = vld [vmem:[#allocation2 + $0x25c0] sm:$0xff]
    %v1299 = vld [vmem:[#allocation2 + $0x25c8] sm:$0xff]
    %v1300 = vld [vmem:[#allocation2 + $0x25d0] sm:$0xff]
    %v1301 = vld [vmem:[#allocation2 + $0x25d8] sm:$0xff]
    %v1302 = vld [vmem:[#allocation2 + $0x25e0] sm:$0xff]
    %v1303 = vld [vmem:[#allocation2 + $0x25e8] sm:$0xff]
    %v1304 = vld [vmem:[#allocation2 + $0x25f0] sm:$0xff]
    %v1305 = vld [vmem:[#allocation2 + $0x25f8] sm:$0xff]
    %v1306 = vld [vmem:[#allocation2 + $0x2600] sm:$0xff]
    %v1307 = vld [vmem:[#allocation2 + $0x2608] sm:$0xff]
    %v1308 = vld [vmem:[#allocation2 + $0x2610] sm:$0xff]
    %v1309 = vld [vmem:[#allocation2 + $0x2618] sm:$0xff]
    %v1310 = vld [vmem:[#allocation2 + $0x2620] sm:$0xff]
    %v1311 = vld [vmem:[#allocation2 + $0x2628] sm:$0xff]
    %v1312 = vld [vmem:[#allocation2 + $0x2630] sm:$0xff]
    %v1313 = vld [vmem:[#allocation2 + $0x2638] sm:$0xff]
    %v1314 = vld [vmem:[#allocation2 + $0x2640] sm:$0xff]
    %v1315 = vld [vmem:[#allocation2 + $0x2648] sm:$0xff]
    %v1316 = vld [vmem:[#allocation2 + $0x2650] sm:$0xff]
    %v1317 = vld [vmem:[#allocation2 + $0x2658] sm:$0xff]
    %v1318 = vld [vmem:[#allocation2 + $0x2660] sm:$0xff]
    %v1319 = vld [vmem:[#allocation2 + $0x2668] sm:$0xff]
    %v1320 = vld [vmem:[#allocation2 + $0x2670] sm:$0xff]
    %v1321 = vld [vmem:[#allocation2 + $0x2678] sm:$0xff]
    %v1322 = vld [vmem:[#allocation2 + $0x2680] sm:$0xff]
    %v1323 = vld [vmem:[#allocation2 + $0x2688] sm:$0xff]
    %v1324 = vld [vmem:[#allocation2 + $0x2690] sm:$0xff]
    %v1325 = vld [vmem:[#allocation2 + $0x2698] sm:$0xff]
    %v1326 = vld [vmem:[#allocation2 + $0x26a0] sm:$0xff]
    %v1327 = vld [vmem:[#allocation2 + $0x26a8] sm:$0xff]
    %v1328 = vld [vmem:[#allocation2 + $0x26b0] sm:$0xff]
    %v1329 = vld [vmem:[#allocation2 + $0x26b8] sm:$0xff]
    %v1330 = vld [vmem:[#allocation2 + $0x26c0] sm:$0xff]
    %v1331 = vld [vmem:[#allocation2 + $0x26c8] sm:$0xff]
    %v1332 = vld [vmem:[#allocation2 + $0x26d0] sm:$0xff]
    %v1333 = vld [vmem:[#allocation2 + $0x26d8] sm:$0xff]
    %v1334 = vld [vmem:[#allocation2 + $0x26e0] sm:$0xff]
    %v1335 = vld [vmem:[#allocation2 + $0x26e8] sm:$0xff]
    %v1336 = vld [vmem:[#allocation2 + $0x26f0] sm:$0xff]
    %v1337 = vld [vmem:[#allocation2 + $0x26f8] sm:$0xff]
    %v1338 = vld [vmem:[#allocation2 + $0x2700] sm:$0xff]
    %v1339 = vld [vmem:[#allocation2 + $0x2708] sm:$0xff]
    %v1340 = vld [vmem:[#allocation2 + $0x2710] sm:$0xff]
    %v1341 = vld [vmem:[#allocation2 + $0x2718] sm:$0xff]
    %v1342 = vld [vmem:[#allocation2 + $0x2720] sm:$0xff]
    %v1343 = vld [vmem:[#allocation2 + $0x2728] sm:$0xff]
    %v1344 = vld [vmem:[#allocation2 + $0x2730] sm:$0xff]
    %v1345 = vld [vmem:[#allocation2 + $0x2738] sm:$0xff]
    %v1346 = vld [vmem:[#allocation2 + $0x2740] sm:$0xff]
    %v1347 = vld [vmem:[#allocation2 + $0x2748] sm:$0xff]
    %v1348 = vld [vmem:[#allocation2 + $0x2750] sm:$0xff]
    %v1349 = vld [vmem:[#allocation2 + $0x2758] sm:$0xff]
    %v1350 = vld [vmem:[#allocation2 + $0x2760] sm:$0xff]
    %v1351 = vld [vmem:[#allocation2 + $0x2768] sm:$0xff]
    %v1352 = vld [vmem:[#allocation2 + $0x2770] sm:$0xff]
    %v1353 = vld [vmem:[#allocation2 + $0x2778] sm:$0xff]
    %v1354 = vld [vmem:[#allocation2 + $0x2780] sm:$0xff]
    %v1355 = vld [vmem:[#allocation2 + $0x2788] sm:$0xff]
    %v1356 = vld [vmem:[#allocation2 + $0x2790] sm:$0xff]
    %v1357 = vld [vmem:[#allocation2 + $0x2798] sm:$0xff]
    %v1358 = vld [vmem:[#allocation2 + $0x27a0] sm:$0xff]
    %v1359 = vld [vmem:[#allocation2 + $0x27a8] sm:$0xff]
    %v1360 = vld [vmem:[#allocation2 + $0x27b0] sm:$0xff]
    %v1361 = vld [vmem:[#allocation2 + $0x27b8] sm:$0xff]
    %v1362 = vld [vmem:[#allocation2 + $0x27c0] sm:$0xff]
    %v1363 = vld [vmem:[#allocation2 + $0x27c8] sm:$0xff]
    %v1364 = vld [vmem:[#allocation2 + $0x27d0] sm:$0xff]
    %v1365 = vld [vmem:[#allocation2 + $0x27d8] sm:$0xff]
    %v1366 = vld [vmem:[#allocation2 + $0x27e0] sm:$0xff]
    %v1367 = vld [vmem:[#allocation2 + $0x27e8] sm:$0xff]
    %v1368 = vld [vmem:[#allocation2 + $0x27f0] sm:$0xff]
    %v1369 = vld [vmem:[#allocation2 + $0x27f8] sm:$0xff]
    %v1370 = vld [vmem:[#allocation2 + $0x2800] sm:$0xff]
    %v1371 = vld [vmem:[#allocation2 + $0x2808] sm:$0xff]
    %v1372 = vld [vmem:[#allocation2 + $0x2810] sm:$0xff]
    %v1373 = vld [vmem:[#allocation2 + $0x2818] sm:$0xff]
    %v1374 = vld [vmem:[#allocation2 + $0x2820] sm:$0xff]
    %v1375 = vld [vmem:[#allocation2 + $0x2828] sm:$0xff]
    %v1376 = vld [vmem:[#allocation2 + $0x2830] sm:$0xff]
    %v1377 = vld [vmem:[#allocation2 + $0x2838] sm:$0xff]
    %v1378 = vld [vmem:[#allocation2 + $0x2840] sm:$0xff]
    %v1379 = vld [vmem:[#allocation2 + $0x2848] sm:$0xff]
    %v1380 = vld [vmem:[#allocation2 + $0x2850] sm:$0xff]
    %v1381 = vld [vmem:[#allocation2 + $0x2858] sm:$0xff]
    %v1382 = vld [vmem:[#allocation2 + $0x2860] sm:$0xff]
    %v1383 = vld [vmem:[#allocation2 + $0x2868] sm:$0xff]
    %v1384 = vld [vmem:[#allocation2 + $0x2870] sm:$0xff]
    %v1385 = vld [vmem:[#allocation2 + $0x2878] sm:$0xff]
    %v1386 = vld [vmem:[#allocation2 + $0x2880] sm:$0xff]
    %v1387 = vld [vmem:[#allocation2 + $0x2888] sm:$0xff]
    %v1388 = vld [vmem:[#allocation2 + $0x2890] sm:$0xff]
    %v1389 = vld [vmem:[#allocation2 + $0x2898] sm:$0xff]
    %v1390 = vld [vmem:[#allocation2 + $0x28a0] sm:$0xff]
    %v1391 = vld [vmem:[#allocation2 + $0x28a8] sm:$0xff]
    %v1392 = vld [vmem:[#allocation2 + $0x28b0] sm:$0xff]
    %v1393 = vld [vmem:[#allocation2 + $0x28b8] sm:$0xff]
    %v1394 = vld [vmem:[#allocation2 + $0x28c0] sm:$0xff]
    %v1395 = vld [vmem:[#allocation2 + $0x28c8] sm:$0xff]
    %v1396 = vld [vmem:[#allocation2 + $0x28d0] sm:$0xff]
    %v1397 = vld [vmem:[#allocation2 + $0x28d8] sm:$0xff]
    %v1398 = vld [vmem:[#allocation2 + $0x28e0] sm:$0xff]
    %v1399 = vld [vmem:[#allocation2 + $0x28e8] sm:$0xff]
    %v1400 = vld [vmem:[#allocation2 + $0x28f0] sm:$0xff]
    %v1401 = vld [vmem:[#allocation2 + $0x28f8] sm:$0xff]
    %v1402 = vld [vmem:[#allocation2 + $0x2900] sm:$0xff]
    %v1403 = vld [vmem:[#allocation2 + $0x2908] sm:$0xff]
    %v1404 = vld [vmem:[#allocation2 + $0x2910] sm:$0xff]
    %v1405 = vld [vmem:[#allocation2 + $0x2918] sm:$0xff]
    %v1406 = vld [vmem:[#allocation2 + $0x2920] sm:$0xff]
    %v1407 = vld [vmem:[#allocation2 + $0x2928] sm:$0xff]
    %v1408 = vld [vmem:[#allocation2 + $0x2930] sm:$0xff]
    %v1409 = vld [vmem:[#allocation2 + $0x2938] sm:$0xff]
    %v1410 = vld [vmem:[#allocation2 + $0x2940] sm:$0xff]
    %v1411 = vld [vmem:[#allocation2 + $0x2948] sm:$0xff]
    %v1412 = vld [vmem:[#allocation2 + $0x2950] sm:$0xff]
    %v1413 = vld [vmem:[#allocation2 + $0x2958] sm:$0xff]
    %v1414 = vld [vmem:[#allocation2 + $0x2960] sm:$0xff]
    %v1415 = vld [vmem:[#allocation2 + $0x2968] sm:$0xff]
    %v1416 = vld [vmem:[#allocation2 + $0x2970] sm:$0xff]
    %v1417 = vld [vmem:[#allocation2 + $0x2978] sm:$0xff]
    %v1418 = vld [vmem:[#allocation2 + $0x2980] sm:$0xff]
    %v1419 = vld [vmem:[#allocation2 + $0x2988] sm:$0xff]
    %v1420 = vld [vmem:[#allocation2 + $0x2990] sm:$0xff]
    %v1421 = vld [vmem:[#allocation2 + $0x2998] sm:$0xff]
    %v1422 = vld [vmem:[#allocation2 + $0x29a0] sm:$0xff]
    %v1423 = vld [vmem:[#allocation2 + $0x29a8] sm:$0xff]
    %v1424 = vld [vmem:[#allocation2 + $0x29b0] sm:$0xff]
    %v1425 = vld [vmem:[#allocation2 + $0x29b8] sm:$0xff]
    %v1426 = vld [vmem:[#allocation2 + $0x29c0] sm:$0xff]
    %v1427 = vld [vmem:[#allocation2 + $0x29c8] sm:$0xff]
    %v1428 = vld [vmem:[#allocation2 + $0x29d0] sm:$0xff]
    %v1429 = vld [vmem:[#allocation2 + $0x29d8] sm:$0xff]
    %v1430 = vld [vmem:[#allocation2 + $0x29e0] sm:$0xff]
    %v1431 = vld [vmem:[#allocation2 + $0x29e8] sm:$0xff]
    %v1432 = vld [vmem:[#allocation2 + $0x29f0] sm:$0xff]
    %v1433 = vld [vmem:[#allocation2 + $0x29f8] sm:$0xff]
    %v1434 = vld [vmem:[#allocation2 + $0x2a00] sm:$0xff]
    %v1435 = vld [vmem:[#allocation2 + $0x2a08] sm:$0xff]
    %v1436 = vld [vmem:[#allocation2 + $0x2a10] sm:$0xff]
    %v1437 = vld [vmem:[#allocation2 + $0x2a18] sm:$0xff]
    %v1438 = vld [vmem:[#allocation2 + $0x2a20] sm:$0xff]
    %v1439 = vld [vmem:[#allocation2 + $0x2a28] sm:$0xff]
    %v1440 = vld [vmem:[#allocation2 + $0x2a30] sm:$0xff]
    %v1441 = vld [vmem:[#allocation2 + $0x2a38] sm:$0xff]
    %v1442 = vld [vmem:[#allocation2 + $0x2a40] sm:$0xff]
    %v1443 = vld [vmem:[#allocation2 + $0x2a48] sm:$0xff]
    %v1444 = vld [vmem:[#allocation2 + $0x2a50] sm:$0xff]
    %v1445 = vld [vmem:[#allocation2 + $0x2a58] sm:$0xff]
    %v1446 = vld [vmem:[#allocation2 + $0x2a60] sm:$0xff]
    %v1447 = vld [vmem:[#allocation2 + $0x2a68] sm:$0xff]
    %v1448 = vld [vmem:[#allocation2 + $0x2a70] sm:$0xff]
    %v1449 = vld [vmem:[#allocation2 + $0x2a78] sm:$0xff]
    %v1450 = vld [vmem:[#allocation2 + $0x2a80] sm:$0xff]
    %v1451 = vld [vmem:[#allocation2 + $0x2a88] sm:$0xff]
    %v1452 = vld [vmem:[#allocation2 + $0x2a90] sm:$0xff]
    %v1453 = vld [vmem:[#allocation2 + $0x2a98] sm:$0xff]
    %v1454 = vld [vmem:[#allocation2 + $0x2aa0] sm:$0xff]
    %v1455 = vld [vmem:[#allocation2 + $0x2aa8] sm:$0xff]
    %v1456 = vld [vmem:[#allocation2 + $0x2ab0] sm:$0xff]
    %v1457 = vld [vmem:[#allocation2 + $0x2ab8] sm:$0xff]
    %v1458 = vld [vmem:[#allocation2 + $0x2ac0] sm:$0xff]
    %v1459 = vld [vmem:[#allocation2 + $0x2ac8] sm:$0xff]
    %v1460 = vld [vmem:[#allocation2 + $0x2ad0] sm:$0xff]
    %v1461 = vld [vmem:[#allocation2 + $0x2ad8] sm:$0xff]
    %v1462 = vld [vmem:[#allocation2 + $0x2ae0] sm:$0xff]
    %v1463 = vld [vmem:[#allocation2 + $0x2ae8] sm:$0xff]
    %v1464 = vld [vmem:[#allocation2 + $0x2af0] sm:$0xff]
    %v1465 = vld [vmem:[#allocation2 + $0x2af8] sm:$0xff]
    %v1466 = vld [vmem:[#allocation2 + $0x2b00] sm:$0xff]
    %v1467 = vld [vmem:[#allocation2 + $0x2b08] sm:$0xff]
    %v1468 = vld [vmem:[#allocation2 + $0x2b10] sm:$0xff]
    %v1469 = vld [vmem:[#allocation2 + $0x2b18] sm:$0xff]
    %v1470 = vld [vmem:[#allocation2 + $0x2b20] sm:$0xff]
    %v1471 = vld [vmem:[#allocation2 + $0x2b28] sm:$0xff]
    %v1472 = vld [vmem:[#allocation2 + $0x2b30] sm:$0xff]
    %v1473 = vld [vmem:[#allocation2 + $0x2b38] sm:$0xff]
    %v1474 = vld [vmem:[#allocation2 + $0x2b40] sm:$0xff]
    %v1475 = vld [vmem:[#allocation2 + $0x2b48] sm:$0xff]
    %v1476 = vld [vmem:[#allocation2 + $0x2b50] sm:$0xff]
    %v1477 = vld [vmem:[#allocation2 + $0x2b58] sm:$0xff]
    %v1478 = vld [vmem:[#allocation2 + $0x2b60] sm:$0xff]
    %v1479 = vld [vmem:[#allocation2 + $0x2b68] sm:$0xff]
    %v1480 = vld [vmem:[#allocation2 + $0x2b70] sm:$0xff]
    %v1481 = vld [vmem:[#allocation2 + $0x2b78] sm:$0xff]
    %v1482 = vld [vmem:[#allocation2 + $0x2b80] sm:$0xff]
    %v1483 = vld [vmem:[#allocation2 + $0x2b88] sm:$0xff]
    %v1484 = vld [vmem:[#allocation2 + $0x2b90] sm:$0xff]
    %v1485 = vld [vmem:[#allocation2 + $0x2b98] sm:$0xff]
    %v1486 = vld [vmem:[#allocation2 + $0x2ba0] sm:$0xff]
    %v1487 = vld [vmem:[#allocation2 + $0x2ba8] sm:$0xff]
    %v1488 = vld [vmem:[#allocation2 + $0x2bb0] sm:$0xff]
    %v1489 = vld [vmem:[#allocation2 + $0x2bb8] sm:$0xff]
    %v1490 = vld [vmem:[#allocation2 + $0x2bc0] sm:$0xff]
    %v1491 = vld [vmem:[#allocation2 + $0x2bc8] sm:$0xff]
    %v1492 = vld [vmem:[#allocation2 + $0x2bd0] sm:$0xff]
    %v1493 = vld [vmem:[#allocation2 + $0x2bd8] sm:$0xff]
    %v1494 = vld [vmem:[#allocation2 + $0x2be0] sm:$0xff]
    %v1495 = vld [vmem:[#allocation2 + $0x2be8] sm:$0xff]
    %v1496 = vld [vmem:[#allocation2 + $0x2bf0] sm:$0xff]
    %v1497 = vld [vmem:[#allocation2 + $0x2bf8] sm:$0xff]
    %v1498 = vld [vmem:[#allocation2 + $0x2c00] sm:$0xff]
    %v1499 = vld [vmem:[#allocation2 + $0x2c08] sm:$0xff]
    %v1500 = vld [vmem:[#allocation2 + $0x2c10] sm:$0xff]
    %v1501 = vld [vmem:[#allocation2 + $0x2c18] sm:$0xff]
    %v1502 = vld [vmem:[#allocation2 + $0x2c20] sm:$0xff]
    %v1503 = vld [vmem:[#allocation2 + $0x2c28] sm:$0xff]
    %v1504 = vld [vmem:[#allocation2 + $0x2c30] sm:$0xff]
    %v1505 = vld [vmem:[#allocation2 + $0x2c38] sm:$0xff]
    %v1506 = vld [vmem:[#allocation2 + $0x2c40] sm:$0xff]
    %v1507 = vld [vmem:[#allocation2 + $0x2c48] sm:$0xff]
    %v1508 = vld [vmem:[#allocation2 + $0x2c50] sm:$0xff]
    %v1509 = vld [vmem:[#allocation2 + $0x2c58] sm:$0xff]
    %v1510 = vld [vmem:[#allocation2 + $0x2c60] sm:$0xff]
    %v1511 = vld [vmem:[#allocation2 + $0x2c68] sm:$0xff]
    %v1512 = vld [vmem:[#allocation2 + $0x2c70] sm:$0xff]
    %v1513 = vld [vmem:[#allocation2 + $0x2c78] sm:$0xff]
    %v1514 = vld [vmem:[#allocation2 + $0x2c80] sm:$0xff]
    %v1515 = vld [vmem:[#allocation2 + $0x2c88] sm:$0xff]
    %v1516 = vld [vmem:[#allocation2 + $0x2c90] sm:$0xff]
    %v1517 = vld [vmem:[#allocation2 + $0x2c98] sm:$0xff]
    %v1518 = vld [vmem:[#allocation2 + $0x2ca0] sm:$0xff]
    %v1519 = vld [vmem:[#allocation2 + $0x2ca8] sm:$0xff]
    %v1520 = vld [vmem:[#allocation2 + $0x2cb0] sm:$0xff]
    %v1521 = vld [vmem:[#allocation2 + $0x2cb8] sm:$0xff]
    %v1522 = vld [vmem:[#allocation2 + $0x2cc0] sm:$0xff]
    %v1523 = vld [vmem:[#allocation2 + $0x2cc8] sm:$0xff]
    %v1524 = vld [vmem:[#allocation2 + $0x2cd0] sm:$0xff]
    %v1525 = vld [vmem:[#allocation2 + $0x2cd8] sm:$0xff]
    %v1526 = vld [vmem:[#allocation2 + $0x2ce0] sm:$0xff]
    %v1527 = vld [vmem:[#allocation2 + $0x2ce8] sm:$0xff]
    %v1528 = vld [vmem:[#allocation2 + $0x2cf0] sm:$0xff]
    %v1529 = vld [vmem:[#allocation2 + $0x2cf8] sm:$0xff]
    %v1530 = vld [vmem:[#allocation2 + $0x2d00] sm:$0xff]
    %v1531 = vld [vmem:[#allocation2 + $0x2d08] sm:$0xff]
    %v1532 = vld [vmem:[#allocation2 + $0x2d10] sm:$0xff]
    %v1533 = vld [vmem:[#allocation2 + $0x2d18] sm:$0xff]
    %v1534 = vld [vmem:[#allocation2 + $0x2d20] sm:$0xff]
    %v1535 = vld [vmem:[#allocation2 + $0x2d28] sm:$0xff]
    %v1536 = vld [vmem:[#allocation2 + $0x2d30] sm:$0xff]
    %v1537 = vld [vmem:[#allocation2 + $0x2d38] sm:$0xff]
    %v1538 = vld [vmem:[#allocation2 + $0x2d40] sm:$0xff]
    %v1539 = vld [vmem:[#allocation2 + $0x2d48] sm:$0xff]
    %v1540 = vld [vmem:[#allocation2 + $0x2d50] sm:$0xff]
    %v1541 = vld [vmem:[#allocation2 + $0x2d58] sm:$0xff]
    %v1542 = vld [vmem:[#allocation2 + $0x2d60] sm:$0xff]
    %v1543 = vld [vmem:[#allocation2 + $0x2d68] sm:$0xff]
    %v1544 = vld [vmem:[#allocation2 + $0x2d70] sm:$0xff]
    %v1545 = vld [vmem:[#allocation2 + $0x2d78] sm:$0xff]
    %v1546 = vld [vmem:[#allocation2 + $0x2d80] sm:$0xff]
    %v1547 = vld [vmem:[#allocation2 + $0x2d88] sm:$0xff]
    %v1548 = vld [vmem:[#allocation2 + $0x2d90] sm:$0xff]
    %v1549 = vld [vmem:[#allocation2 + $0x2d98] sm:$0xff]
    %v1550 = vld [vmem:[#allocation2 + $0x2da0] sm:$0xff]
    %v1551 = vld [vmem:[#allocation2 + $0x2da8] sm:$0xff]
    %v1552 = vld [vmem:[#allocation2 + $0x2db0] sm:$0xff]
    %v1553 = vld [vmem:[#allocation2 + $0x2db8] sm:$0xff]
    %v1554 = vld [vmem:[#allocation2 + $0x2dc0] sm:$0xff]
    %v1555 = vld [vmem:[#allocation2 + $0x2dc8] sm:$0xff]
    %v1556 = vld [vmem:[#allocation2 + $0x2dd0] sm:$0xff]
    %v1557 = vld [vmem:[#allocation2 + $0x2dd8] sm:$0xff]
    %v1558 = vld [vmem:[#allocation2 + $0x2de0] sm:$0xff]
    %v1559 = vld [vmem:[#allocation2 + $0x2de8] sm:$0xff]
    %v1560 = vld [vmem:[#allocation2 + $0x2df0] sm:$0xff]
    %v1561 = vld [vmem:[#allocation2 + $0x2df8] sm:$0xff]
    %v1562 = vld [vmem:[#allocation2 + $0x2e00] sm:$0xff]
    %v1563 = vld [vmem:[#allocation2 + $0x2e08] sm:$0xff]
    %v1564 = vld [vmem:[#allocation2 + $0x2e10] sm:$0xff]
    %v1565 = vld [vmem:[#allocation2 + $0x2e18] sm:$0xff]
    %v1566 = vld [vmem:[#allocation2 + $0x2e20] sm:$0xff]
    %v1567 = vld [vmem:[#allocation2 + $0x2e28] sm:$0xff]
    %v1568 = vld [vmem:[#allocation2 + $0x2e30] sm:$0xff]
    %v1569 = vld [vmem:[#allocation2 + $0x2e38] sm:$0xff]
    %v1570 = vld [vmem:[#allocation2 + $0x2e40] sm:$0xff]
    %v1571 = vld [vmem:[#allocation2 + $0x2e48] sm:$0xff]
    %v1572 = vld [vmem:[#allocation2 + $0x2e50] sm:$0xff]
    %v1573 = vld [vmem:[#allocation2 + $0x2e58] sm:$0xff]
    %v1574 = vld [vmem:[#allocation2 + $0x2e60] sm:$0xff]
    %v1575 = vld [vmem:[#allocation2 + $0x2e68] sm:$0xff]
    %v1576 = vld [vmem:[#allocation2 + $0x2e70] sm:$0xff]
    %v1577 = vld [vmem:[#allocation2 + $0x2e78] sm:$0xff]
    %v1578 = vld [vmem:[#allocation2 + $0x2e80] sm:$0xff]
    %v1579 = vld [vmem:[#allocation2 + $0x2e88] sm:$0xff]
    %v1580 = vld [vmem:[#allocation2 + $0x2e90] sm:$0xff]
    %v1581 = vld [vmem:[#allocation2 + $0x2e98] sm:$0xff]
    %v1582 = vld [vmem:[#allocation2 + $0x2ea0] sm:$0xff]
    %v1583 = vld [vmem:[#allocation2 + $0x2ea8] sm:$0xff]
    %v1584 = vld [vmem:[#allocation2 + $0x2eb0] sm:$0xff]
    %v1585 = vld [vmem:[#allocation2 + $0x2eb8] sm:$0xff]
    %v1586 = vld [vmem:[#allocation2 + $0x2ec0] sm:$0xff]
    %v1587 = vld [vmem:[#allocation2 + $0x2ec8] sm:$0xff]
    %v1588 = vld [vmem:[#allocation2 + $0x2ed0] sm:$0xff]
    %v1589 = vld [vmem:[#allocation2 + $0x2ed8] sm:$0xff]
    %v1590 = vld [vmem:[#allocation2 + $0x2ee0] sm:$0xff]
    %v1591 = vld [vmem:[#allocation2 + $0x2ee8] sm:$0xff]
    %v1592 = vld [vmem:[#allocation2 + $0x2ef0] sm:$0xff]
    %v1593 = vld [vmem:[#allocation2 + $0x2ef8] sm:$0xff]
    %v1594 = vld [vmem:[#allocation2 + $0x2f00] sm:$0xff]
    %v1595 = vld [vmem:[#allocation2 + $0x2f08] sm:$0xff]
    %v1596 = vld [vmem:[#allocation2 + $0x2f10] sm:$0xff]
    %v1597 = vld [vmem:[#allocation2 + $0x2f18] sm:$0xff]
    %v1598 = vld [vmem:[#allocation2 + $0x2f20] sm:$0xff]
    %v1599 = vld [vmem:[#allocation2 + $0x2f28] sm:$0xff]
    %v1600 = vld [vmem:[#allocation2 + $0x2f30] sm:$0xff]
    %v1601 = vld [vmem:[#allocation2 + $0x2f38] sm:$0xff]
    %v1602 = vld [vmem:[#allocation2 + $0x2f40] sm:$0xff]
    %v1603 = vld [vmem:[#allocation2 + $0x2f48] sm:$0xff]
    %v1604 = vld [vmem:[#allocation2 + $0x2f50] sm:$0xff]
    %v1605 = vld [vmem:[#allocation2 + $0x2f58] sm:$0xff]
    %v1606 = vld [vmem:[#allocation2 + $0x2f60] sm:$0xff]
    %v1607 = vld [vmem:[#allocation2 + $0x2f68] sm:$0xff]
    %v1608 = vld [vmem:[#allocation2 + $0x2f70] sm:$0xff]
    %v1609 = vld [vmem:[#allocation2 + $0x2f78] sm:$0xff]
    %v1610 = vld [vmem:[#allocation2 + $0x2f80] sm:$0xff]
    %v1611 = vld [vmem:[#allocation2 + $0x2f88] sm:$0xff]
    %v1612 = vld [vmem:[#allocation2 + $0x2f90] sm:$0xff]
    %v1613 = vld [vmem:[#allocation2 + $0x2f98] sm:$0xff]
    %v1614 = vld [vmem:[#allocation2 + $0x2fa0] sm:$0xff]
    %v1615 = vld [vmem:[#allocation2 + $0x2fa8] sm:$0xff]
    %v1616 = vld [vmem:[#allocation2 + $0x2fb0] sm:$0xff]
    %v1617 = vld [vmem:[#allocation2 + $0x2fb8] sm:$0xff]
    %v1618 = vld [vmem:[#allocation2 + $0x2fc0] sm:$0xff]
    %v1619 = vld [vmem:[#allocation2 + $0x2fc8] sm:$0xff]
    %v1620 = vld [vmem:[#allocation2 + $0x2fd0] sm:$0xff]
    %v1621 = vld [vmem:[#allocation2 + $0x2fd8] sm:$0xff]
    %v1622 = vld [vmem:[#allocation2 + $0x2fe0] sm:$0xff]
    %v1623 = vld [vmem:[#allocation2 + $0x2fe8] sm:$0xff]
    %v1624 = vld [vmem:[#allocation2 + $0x2ff0] sm:$0xff]
    %v1625 = vld [vmem:[#allocation2 + $0x2ff8] sm:$0xff]
    %v1626 = vld [vmem:[#allocation2 + $0x3000] sm:$0xff]
    %v1627 = vld [vmem:[#allocation2 + $0x3008] sm:$0xff]
    %v1628 = vld [vmem:[#allocation2 + $0x3010] sm:$0xff]
    %v1629 = vld [vmem:[#allocation2 + $0x3018] sm:$0xff]
    %v1630 = vld [vmem:[#allocation2 + $0x3020] sm:$0xff]
    %v1631 = vld [vmem:[#allocation2 + $0x3028] sm:$0xff]
    %v1632 = vld [vmem:[#allocation2 + $0x3030] sm:$0xff]
    %v1633 = vld [vmem:[#allocation2 + $0x3038] sm:$0xff]
    %v1634 = vld [vmem:[#allocation2 + $0x3040] sm:$0xff]
    %v1635 = vld [vmem:[#allocation2 + $0x3048] sm:$0xff]
    %v1636 = vld [vmem:[#allocation2 + $0x3050] sm:$0xff]
    %v1637 = vld [vmem:[#allocation2 + $0x3058] sm:$0xff]
    %v1638 = vld [vmem:[#allocation2 + $0x3060] sm:$0xff]
    %v1639 = vld [vmem:[#allocation2 + $0x3068] sm:$0xff]
    %v1640 = vld [vmem:[#allocation2 + $0x3070] sm:$0xff]
    %v1641 = vld [vmem:[#allocation2 + $0x3078] sm:$0xff]
    %v1642 = vld [vmem:[#allocation2 + $0x3080] sm:$0xff]
    %v1643 = vld [vmem:[#allocation2 + $0x3088] sm:$0xff]
    %v1644 = vld [vmem:[#allocation2 + $0x3090] sm:$0xff]
    %v1645 = vld [vmem:[#allocation2 + $0x3098] sm:$0xff]
    %v1646 = vld [vmem:[#allocation2 + $0x30a0] sm:$0xff]
    %v1647 = vld [vmem:[#allocation2 + $0x30a8] sm:$0xff]
    %v1648 = vld [vmem:[#allocation2 + $0x30b0] sm:$0xff]
    %v1649 = vld [vmem:[#allocation2 + $0x30b8] sm:$0xff]
    %v1650 = vld [vmem:[#allocation2 + $0x30c0] sm:$0xff]
    %v1651 = vld [vmem:[#allocation2 + $0x30c8] sm:$0xff]
    %v1652 = vld [vmem:[#allocation2 + $0x30d0] sm:$0xff]
    %v1653 = vld [vmem:[#allocation2 + $0x30d8] sm:$0xff]
    %v1654 = vld [vmem:[#allocation2 + $0x30e0] sm:$0xff]
    %v1655 = vld [vmem:[#allocation2 + $0x30e8] sm:$0xff]
    %v1656 = vld [vmem:[#allocation2 + $0x30f0] sm:$0xff]
    %v1657 = vld [vmem:[#allocation2 + $0x30f8] sm:$0xff]
    %v1658 = vld [vmem:[#allocation2 + $0x3100] sm:$0xff]
    %v1659 = vld [vmem:[#allocation2 + $0x3108] sm:$0xff]
    %v1660 = vld [vmem:[#allocation2 + $0x3110] sm:$0xff]
    %v1661 = vld [vmem:[#allocation2 + $0x3118] sm:$0xff]
    %v1662 = vld [vmem:[#allocation2 + $0x3120] sm:$0xff]
    %v1663 = vld [vmem:[#allocation2 + $0x3128] sm:$0xff]
    %v1664 = vld [vmem:[#allocation2 + $0x3130] sm:$0xff]
    %v1665 = vld [vmem:[#allocation2 + $0x3138] sm:$0xff]
    %v1666 = vld [vmem:[#allocation2 + $0x3140] sm:$0xff]
    %v1667 = vld [vmem:[#allocation2 + $0x3148] sm:$0xff]
    %v1668 = vld [vmem:[#allocation2 + $0x3150] sm:$0xff]
    %v1669 = vld [vmem:[#allocation2 + $0x3158] sm:$0xff]
    %v1670 = vld [vmem:[#allocation2 + $0x3160] sm:$0xff]
    %v1671 = vld [vmem:[#allocation2 + $0x3168] sm:$0xff]
    %v1672 = vld [vmem:[#allocation2 + $0x3170] sm:$0xff]
    %v1673 = vld [vmem:[#allocation2 + $0x3178] sm:$0xff]
    %v1674 = vld [vmem:[#allocation2 + $0x3180] sm:$0xff]
    %v1675 = vld [vmem:[#allocation2 + $0x3188] sm:$0xff]
    %v1676 = vld [vmem:[#allocation2 + $0x3190] sm:$0xff]
    %v1677 = vld [vmem:[#allocation2 + $0x3198] sm:$0xff]
    %v1678 = vld [vmem:[#allocation2 + $0x31a0] sm:$0xff]
    %v1679 = vld [vmem:[#allocation2 + $0x31a8] sm:$0xff]
    %v1680 = vld [vmem:[#allocation2 + $0x31b0] sm:$0xff]
    %v1681 = vld [vmem:[#allocation2 + $0x31b8] sm:$0xff]
    %v1682 = vld [vmem:[#allocation2 + $0x31c0] sm:$0xff]
    %v1683 = vld [vmem:[#allocation2 + $0x31c8] sm:$0xff]
    %v1684 = vld [vmem:[#allocation2 + $0x31d0] sm:$0xff]
    %v1685 = vld [vmem:[#allocation2 + $0x31d8] sm:$0xff]
    %v1686 = vld [vmem:[#allocation2 + $0x31e0] sm:$0xff]
    %v1687 = vld [vmem:[#allocation2 + $0x31e8] sm:$0xff]
    %v1688 = vld [vmem:[#allocation2 + $0x31f0] sm:$0xff]
    %v1689 = vld [vmem:[#allocation2 + $0x31f8] sm:$0xff]
    %v1690 = vld [vmem:[#allocation2 + $0x3200] sm:$0xff]
    %v1691 = vld [vmem:[#allocation2 + $0x3208] sm:$0xff]
    %v1692 = vld [vmem:[#allocation2 + $0x3210] sm:$0xff]
    %v1693 = vld [vmem:[#allocation2 + $0x3218] sm:$0xff]
    %v1694 = vld [vmem:[#allocation2 + $0x3220] sm:$0xff]
    %v1695 = vld [vmem:[#allocation2 + $0x3228] sm:$0xff]
    %v1696 = vld [vmem:[#allocation2 + $0x3230] sm:$0xff]
    %v1697 = vld [vmem:[#allocation2 + $0x3238] sm:$0xff]
    %v1698 = vld [vmem:[#allocation2 + $0x3240] sm:$0xff]
    %v1699 = vld [vmem:[#allocation2 + $0x3248] sm:$0xff]
    %v1700 = vld [vmem:[#allocation2 + $0x3250] sm:$0xff]
    %v1701 = vld [vmem:[#allocation2 + $0x3258] sm:$0xff]
    %v1702 = vld [vmem:[#allocation2 + $0x3260] sm:$0xff]
    %v1703 = vld [vmem:[#allocation2 + $0x3268] sm:$0xff]
    %v1704 = vld [vmem:[#allocation2 + $0x3270] sm:$0xff]
    %v1705 = vld [vmem:[#allocation2 + $0x3278] sm:$0xff]
    %v1706 = vld [vmem:[#allocation2 + $0x3280] sm:$0xff]
    %v1707 = vld [vmem:[#allocation2 + $0x3288] sm:$0xff]
    %v1708 = vld [vmem:[#allocation2 + $0x3290] sm:$0xff]
    %v1709 = vld [vmem:[#allocation2 + $0x3298] sm:$0xff]
    %v1710 = vld [vmem:[#allocation2 + $0x32a0] sm:$0xff]
    %v1711 = vld [vmem:[#allocation2 + $0x32a8] sm:$0xff]
    %v1712 = vld [vmem:[#allocation2 + $0x32b0] sm:$0xff]
    %v1713 = vld [vmem:[#allocation2 + $0x32b8] sm:$0xff]
    %v1714 = vld [vmem:[#allocation2 + $0x32c0] sm:$0xff]
    %v1715 = vld [vmem:[#allocation2 + $0x32c8] sm:$0xff]
    %v1716 = vld [vmem:[#allocation2 + $0x32d0] sm:$0xff]
    %v1717 = vld [vmem:[#allocation2 + $0x32d8] sm:$0xff]
    %v1718 = vld [vmem:[#allocation2 + $0x32e0] sm:$0xff]
    %v1719 = vld [vmem:[#allocation2 + $0x32e8] sm:$0xff]
    %v1720 = vld [vmem:[#allocation2 + $0x32f0] sm:$0xff]
    %v1721 = vld [vmem:[#allocation2 + $0x32f8] sm:$0xff]
    %v1722 = vld [vmem:[#allocation2 + $0x3300] sm:$0xff]
    %v1723 = vld [vmem:[#allocation2 + $0x3308] sm:$0xff]
    %v1724 = vld [vmem:[#allocation2 + $0x3310] sm:$0xff]
    %v1725 = vld [vmem:[#allocation2 + $0x3318] sm:$0xff]
    %v1726 = vld [vmem:[#allocation2 + $0x3320] sm:$0xff]
    %v1727 = vld [vmem:[#allocation2 + $0x3328] sm:$0xff]
    %v1728 = vld [vmem:[#allocation2 + $0x3330] sm:$0xff]
    %v1729 = vld [vmem:[#allocation2 + $0x3338] sm:$0xff]
    %v1730 = vld [vmem:[#allocation2 + $0x3340] sm:$0xff]
    %v1731 = vld [vmem:[#allocation2 + $0x3348] sm:$0xff]
    %v1732 = vld [vmem:[#allocation2 + $0x3350] sm:$0xff]
    %v1733 = vld [vmem:[#allocation2 + $0x3358] sm:$0xff]
    %v1734 = vld [vmem:[#allocation2 + $0x3360] sm:$0xff]
    %v1735 = vld [vmem:[#allocation2 + $0x3368] sm:$0xff]
    %v1736 = vld [vmem:[#allocation2 + $0x3370] sm:$0xff]
    %v1737 = vld [vmem:[#allocation2 + $0x3378] sm:$0xff]
    %v1738 = vld [vmem:[#allocation2 + $0x3380] sm:$0xff]
    %v1739 = vld [vmem:[#allocation2 + $0x3388] sm:$0xff]
    %v1740 = vld [vmem:[#allocation2 + $0x3390] sm:$0xff]
    %v1741 = vld [vmem:[#allocation2 + $0x3398] sm:$0xff]
    %v1742 = vld [vmem:[#allocation2 + $0x33a0] sm:$0xff]
    %v1743 = vld [vmem:[#allocation2 + $0x33a8] sm:$0xff]
    %v1744 = vld [vmem:[#allocation2 + $0x33b0] sm:$0xff]
    %v1745 = vld [vmem:[#allocation2 + $0x33b8] sm:$0xff]
    %v1746 = vld [vmem:[#allocation2 + $0x33c0] sm:$0xff]
    %v1747 = vld [vmem:[#allocation2 + $0x33c8] sm:$0xff]
    %v1748 = vld [vmem:[#allocation2 + $0x33d0] sm:$0xff]
    %v1749 = vld [vmem:[#allocation2 + $0x33d8] sm:$0xff]
    %v1750 = vld [vmem:[#allocation2 + $0x33e0] sm:$0xff]
    %v1751 = vld [vmem:[#allocation2 + $0x33e8] sm:$0xff]
    %v1752 = vld [vmem:[#allocation2 + $0x33f0] sm:$0xff]
    %v1753 = vld [vmem:[#allocation2 + $0x33f8] sm:$0xff]
    %v1754 = vld [vmem:[#allocation2 + $0x3400] sm:$0xff]
    %v1755 = vld [vmem:[#allocation2 + $0x3408] sm:$0xff]
    %v1756 = vld [vmem:[#allocation2 + $0x3410] sm:$0xff]
    %v1757 = vld [vmem:[#allocation2 + $0x3418] sm:$0xff]
    %v1758 = vld [vmem:[#allocation2 + $0x3420] sm:$0xff]
    %v1759 = vld [vmem:[#allocation2 + $0x3428] sm:$0xff]
    %v1760 = vld [vmem:[#allocation2 + $0x3430] sm:$0xff]
    %v1761 = vld [vmem:[#allocation2 + $0x3438] sm:$0xff]
    %v1762 = vld [vmem:[#allocation2 + $0x3440] sm:$0xff]
    %v1763 = vld [vmem:[#allocation2 + $0x3448] sm:$0xff]
    %v1764 = vld [vmem:[#allocation2 + $0x3450] sm:$0xff]
    %v1765 = vld [vmem:[#allocation2 + $0x3458] sm:$0xff]
    %v1766 = vld [vmem:[#allocation2 + $0x3460] sm:$0xff]
    %v1767 = vld [vmem:[#allocation2 + $0x3468] sm:$0xff]
    %v1768 = vld [vmem:[#allocation2 + $0x3470] sm:$0xff]
    %v1769 = vld [vmem:[#allocation2 + $0x3478] sm:$0xff]
    %v1770 = vld [vmem:[#allocation2 + $0x3480] sm:$0xff]
    %v1771 = vld [vmem:[#allocation2 + $0x3488] sm:$0xff]
    %v1772 = vld [vmem:[#allocation2 + $0x3490] sm:$0xff]
    %v1773 = vld [vmem:[#allocation2 + $0x3498] sm:$0xff]
    %v1774 = vld [vmem:[#allocation2 + $0x34a0] sm:$0xff]
    %v1775 = vld [vmem:[#allocation2 + $0x34a8] sm:$0xff]
    %v1776 = vld [vmem:[#allocation2 + $0x34b0] sm:$0xff]
    %v1777 = vld [vmem:[#allocation2 + $0x34b8] sm:$0xff]
    %v1778 = vld [vmem:[#allocation2 + $0x34c0] sm:$0xff]
    %v1779 = vld [vmem:[#allocation2 + $0x34c8] sm:$0xff]
    %v1780 = vld [vmem:[#allocation2 + $0x34d0] sm:$0xff]
    %v1781 = vld [vmem:[#allocation2 + $0x34d8] sm:$0xff]
    %v1782 = vld [vmem:[#allocation2 + $0x34e0] sm:$0xff]
    %v1783 = vld [vmem:[#allocation2 + $0x34e8] sm:$0xff]
    %v1784 = vld [vmem:[#allocation2 + $0x34f0] sm:$0xff]
    %v1785 = vld [vmem:[#allocation2 + $0x34f8] sm:$0xff]
    %v1786 = vld [vmem:[#allocation2 + $0x3500] sm:$0xff]
    %v1787 = vld [vmem:[#allocation2 + $0x3508] sm:$0xff]
    %v1788 = vld [vmem:[#allocation2 + $0x3510] sm:$0xff]
    %v1789 = vld [vmem:[#allocation2 + $0x3518] sm:$0xff]
    %v1790 = vld [vmem:[#allocation2 + $0x3520] sm:$0xff]
    %v1791 = vld [vmem:[#allocation2 + $0x3528] sm:$0xff]
    %v1792 = vld [vmem:[#allocation2 + $0x3530] sm:$0xff]
    %v1793 = vld [vmem:[#allocation2 + $0x3538] sm:$0xff]
    %v1794 = vld [vmem:[#allocation2 + $0x3540] sm:$0xff]
    %v1795 = vld [vmem:[#allocation2 + $0x3548] sm:$0xff]
    %v1796 = vld [vmem:[#allocation2 + $0x3550] sm:$0xff]
    %v1797 = vld [vmem:[#allocation2 + $0x3558] sm:$0xff]
    %v1798 = vld [vmem:[#allocation2 + $0x3560] sm:$0xff]
    %v1799 = vld [vmem:[#allocation2 + $0x3568] sm:$0xff]
    %v1800 = vld [vmem:[#allocation2 + $0x3570] sm:$0xff]
    %v1801 = vld [vmem:[#allocation2 + $0x3578] sm:$0xff]
    %v1802 = vld [vmem:[#allocation2 + $0x3580] sm:$0xff]
    %v1803 = vld [vmem:[#allocation2 + $0x3588] sm:$0xff]
    %v1804 = vld [vmem:[#allocation2 + $0x3590] sm:$0xff]
    %v1805 = vld [vmem:[#allocation2 + $0x3598] sm:$0xff]
    %v1806 = vld [vmem:[#allocation2 + $0x35a0] sm:$0xff]
    %v1807 = vld [vmem:[#allocation2 + $0x35a8] sm:$0xff]
    %v1808 = vld [vmem:[#allocation2 + $0x35b0] sm:$0xff]
    %v1809 = vld [vmem:[#allocation2 + $0x35b8] sm:$0xff]
    %v1810 = vld [vmem:[#allocation2 + $0x35c0] sm:$0xff]
    %v1811 = vld [vmem:[#allocation2 + $0x35c8] sm:$0xff]
    %v1812 = vld [vmem:[#allocation2 + $0x35d0] sm:$0xff]
    %v1813 = vld [vmem:[#allocation2 + $0x35d8] sm:$0xff]
    %v1814 = vld [vmem:[#allocation2 + $0x35e0] sm:$0xff]
    %v1815 = vld [vmem:[#allocation2 + $0x35e8] sm:$0xff]
    %v1816 = vld [vmem:[#allocation2 + $0x35f0] sm:$0xff]
    %v1817 = vld [vmem:[#allocation2 + $0x35f8] sm:$0xff]
    %v1818 = vld [vmem:[#allocation2 + $0x3600] sm:$0xff]
    %v1819 = vld [vmem:[#allocation2 + $0x3608] sm:$0xff]
    %v1820 = vld [vmem:[#allocation2 + $0x3610] sm:$0xff]
    %v1821 = vld [vmem:[#allocation2 + $0x3618] sm:$0xff]
    %v1822 = vld [vmem:[#allocation2 + $0x3620] sm:$0xff]
    %v1823 = vld [vmem:[#allocation2 + $0x3628] sm:$0xff]
    %v1824 = vld [vmem:[#allocation2 + $0x3630] sm:$0xff]
    %v1825 = vld [vmem:[#allocation2 + $0x3638] sm:$0xff]
    %v1826 = vld [vmem:[#allocation2 + $0x3640] sm:$0xff]
    %v1827 = vld [vmem:[#allocation2 + $0x3648] sm:$0xff]
    %v1828 = vld [vmem:[#allocation2 + $0x3650] sm:$0xff]
    %v1829 = vld [vmem:[#allocation2 + $0x3658] sm:$0xff]
    %v1830 = vld [vmem:[#allocation2 + $0x3660] sm:$0xff]
    %v1831 = vld [vmem:[#allocation2 + $0x3668] sm:$0xff]
    %v1832 = vld [vmem:[#allocation2 + $0x3670] sm:$0xff]
    %v1833 = vld [vmem:[#allocation2 + $0x3678] sm:$0xff]
    %v1834 = vld [vmem:[#allocation2 + $0x3680] sm:$0xff]
    %v1835 = vld [vmem:[#allocation2 + $0x3688] sm:$0xff]
    %v1836 = vld [vmem:[#allocation2 + $0x3690] sm:$0xff]
    %v1837 = vld [vmem:[#allocation2 + $0x3698] sm:$0xff]
    %v1838 = vld [vmem:[#allocation2 + $0x36a0] sm:$0xff]
    %v1839 = vld [vmem:[#allocation2 + $0x36a8] sm:$0xff]
    %v1840 = vld [vmem:[#allocation2 + $0x36b0] sm:$0xff]
    %v1841 = vld [vmem:[#allocation2 + $0x36b8] sm:$0xff]
    %v1842 = vld [vmem:[#allocation2 + $0x36c0] sm:$0xff]
    %v1843 = vld [vmem:[#allocation2 + $0x36c8] sm:$0xff]
    %v1844 = vld [vmem:[#allocation2 + $0x36d0] sm:$0xff]
    %v1845 = vld [vmem:[#allocation2 + $0x36d8] sm:$0xff]
    %v1846 = vld [vmem:[#allocation2 + $0x36e0] sm:$0xff]
    %v1847 = vld [vmem:[#allocation2 + $0x36e8] sm:$0xff]
    %v1848 = vld [vmem:[#allocation2 + $0x36f0] sm:$0xff]
    %v1849 = vld [vmem:[#allocation2 + $0x36f8] sm:$0xff]
    %v1850 = vld [vmem:[#allocation2 + $0x3700] sm:$0xff]
    %v1851 = vld [vmem:[#allocation2 + $0x3708] sm:$0xff]
    %v1852 = vld [vmem:[#allocation2 + $0x3710] sm:$0xff]
    %v1853 = vld [vmem:[#allocation2 + $0x3718] sm:$0xff]
    %v1854 = vld [vmem:[#allocation2 + $0x3720] sm:$0xff]
    %v1855 = vld [vmem:[#allocation2 + $0x3728] sm:$0xff]
    %v1856 = vld [vmem:[#allocation2 + $0x3730] sm:$0xff]
    %v1857 = vld [vmem:[#allocation2 + $0x3738] sm:$0xff]
    %v1858 = vld [vmem:[#allocation2 + $0x3740] sm:$0xff]
    %v1859 = vld [vmem:[#allocation2 + $0x3748] sm:$0xff]
    %v1860 = vld [vmem:[#allocation2 + $0x3750] sm:$0xff]
    %v1861 = vld [vmem:[#allocation2 + $0x3758] sm:$0xff]
    %v1862 = vld [vmem:[#allocation2 + $0x3760] sm:$0xff]
    %v1863 = vld [vmem:[#allocation2 + $0x3768] sm:$0xff]
    %v1864 = vld [vmem:[#allocation2 + $0x3770] sm:$0xff]
    %v1865 = vld [vmem:[#allocation2 + $0x3778] sm:$0xff]
    %v1866 = vld [vmem:[#allocation2 + $0x3780] sm:$0xff]
    %v1867 = vld [vmem:[#allocation2 + $0x3788] sm:$0xff]
    %v1868 = vld [vmem:[#allocation2 + $0x3790] sm:$0xff]
    %v1869 = vld [vmem:[#allocation2 + $0x3798] sm:$0xff]
    %v1870 = vld [vmem:[#allocation2 + $0x37a0] sm:$0xff]
    %v1871 = vld [vmem:[#allocation2 + $0x37a8] sm:$0xff]
    %v1872 = vld [vmem:[#allocation2 + $0x37b0] sm:$0xff]
    %v1873 = vld [vmem:[#allocation2 + $0x37b8] sm:$0xff]
    %v1874 = vld [vmem:[#allocation2 + $0x37c0] sm:$0xff]
    %v1875 = vld [vmem:[#allocation2 + $0x37c8] sm:$0xff]
    %v1876 = vld [vmem:[#allocation2 + $0x37d0] sm:$0xff]
    %v1877 = vld [vmem:[#allocation2 + $0x37d8] sm:$0xff]
    %v1878 = vld [vmem:[#allocation2 + $0x37e0] sm:$0xff]
    %v1879 = vld [vmem:[#allocation2 + $0x37e8] sm:$0xff]
    %v1880 = vld [vmem:[#allocation2 + $0x37f0] sm:$0xff]
    %v1881 = vld [vmem:[#allocation2 + $0x37f8] sm:$0xff]
    %v1882 = vld [vmem:[#allocation2 + $0x3800] sm:$0xff]
    %v1883 = vld [vmem:[#allocation2 + $0x3808] sm:$0xff]
    %v1884 = vld [vmem:[#allocation2 + $0x3810] sm:$0xff]
    %v1885 = vld [vmem:[#allocation2 + $0x3818] sm:$0xff]
    %v1886 = vld [vmem:[#allocation2 + $0x3820] sm:$0xff]
    %v1887 = vld [vmem:[#allocation2 + $0x3828] sm:$0xff]
    %v1888 = vld [vmem:[#allocation2 + $0x3830] sm:$0xff]
    %v1889 = vld [vmem:[#allocation2 + $0x3838] sm:$0xff]
    %v1890 = vld [vmem:[#allocation2 + $0x3840] sm:$0xff]
    %v1891 = vld [vmem:[#allocation2 + $0x3848] sm:$0xff]
    %v1892 = vld [vmem:[#allocation2 + $0x3850] sm:$0xff]
    %v1893 = vld [vmem:[#allocation2 + $0x3858] sm:$0xff]
    %v1894 = vld [vmem:[#allocation2 + $0x3860] sm:$0xff]
    %v1895 = vld [vmem:[#allocation2 + $0x3868] sm:$0xff]
    %v1896 = vld [vmem:[#allocation2 + $0x3870] sm:$0xff]
    %v1897 = vld [vmem:[#allocation2 + $0x3878] sm:$0xff]
    %v1898 = vld [vmem:[#allocation2 + $0x3880] sm:$0xff]
    %v1899 = vld [vmem:[#allocation2 + $0x3888] sm:$0xff]
    %v1900 = vld [vmem:[#allocation2 + $0x3890] sm:$0xff]
    %v1901 = vld [vmem:[#allocation2 + $0x3898] sm:$0xff]
    %v1902 = vld [vmem:[#allocation2 + $0x38a0] sm:$0xff]
    %v1903 = vld [vmem:[#allocation2 + $0x38a8] sm:$0xff]
    %v1904 = vld [vmem:[#allocation2 + $0x38b0] sm:$0xff]
    %v1905 = vld [vmem:[#allocation2 + $0x38b8] sm:$0xff]
    %v1906 = vld [vmem:[#allocation2 + $0x38c0] sm:$0xff]
    %v1907 = vld [vmem:[#allocation2 + $0x38c8] sm:$0xff]
    %v1908 = vld [vmem:[#allocation2 + $0x38d0] sm:$0xff]
    %v1909 = vld [vmem:[#allocation2 + $0x38d8] sm:$0xff]
    %v1910 = vld [vmem:[#allocation2 + $0x38e0] sm:$0xff]
    %v1911 = vld [vmem:[#allocation2 + $0x38e8] sm:$0xff]
    %v1912 = vld [vmem:[#allocation2 + $0x38f0] sm:$0xff]
    %v1913 = vld [vmem:[#allocation2 + $0x38f8] sm:$0xff]
    %v1914 = vld [vmem:[#allocation2 + $0x3900] sm:$0xff]
    %v1915 = vld [vmem:[#allocation2 + $0x3908] sm:$0xff]
    %v1916 = vld [vmem:[#allocation2 + $0x3910] sm:$0xff]
    %v1917 = vld [vmem:[#allocation2 + $0x3918] sm:$0xff]
    %v1918 = vld [vmem:[#allocation2 + $0x3920] sm:$0xff]
    %v1919 = vld [vmem:[#allocation2 + $0x3928] sm:$0xff]
    %v1920 = vld [vmem:[#allocation2 + $0x3930] sm:$0xff]
    %v1921 = vld [vmem:[#allocation2 + $0x3938] sm:$0xff]
    %v1922 = vld [vmem:[#allocation2 + $0x3940] sm:$0xff]
    %v1923 = vld [vmem:[#allocation2 + $0x3948] sm:$0xff]
    %v1924 = vld [vmem:[#allocation2 + $0x3950] sm:$0xff]
    %v1925 = vld [vmem:[#allocation2 + $0x3958] sm:$0xff]
    %v1926 = vld [vmem:[#allocation2 + $0x3960] sm:$0xff]
    %v1927 = vld [vmem:[#allocation2 + $0x3968] sm:$0xff]
    %v1928 = vld [vmem:[#allocation2 + $0x3970] sm:$0xff]
    %v1929 = vld [vmem:[#allocation2 + $0x3978] sm:$0xff]
    %v1930 = vld [vmem:[#allocation2 + $0x3980] sm:$0xff]
    %v1931 = vld [vmem:[#allocation2 + $0x3988] sm:$0xff]
    %v1932 = vld [vmem:[#allocation2 + $0x3990] sm:$0xff]
    %v1933 = vld [vmem:[#allocation2 + $0x3998] sm:$0xff]
    %v1934 = vld [vmem:[#allocation2 + $0x39a0] sm:$0xff]
    %v1935 = vld [vmem:[#allocation2 + $0x39a8] sm:$0xff]
    %v1936 = vld [vmem:[#allocation2 + $0x39b0] sm:$0xff]
    %v1937 = vld [vmem:[#allocation2 + $0x39b8] sm:$0xff]
    %v1938 = vld [vmem:[#allocation2 + $0x39c0] sm:$0xff]
    %v1939 = vld [vmem:[#allocation2 + $0x39c8] sm:$0xff]
    %v1940 = vld [vmem:[#allocation2 + $0x39d0] sm:$0xff]
    %v1941 = vld [vmem:[#allocation2 + $0x39d8] sm:$0xff]
    %v1942 = vld [vmem:[#allocation2 + $0x39e0] sm:$0xff]
    %v1943 = vld [vmem:[#allocation2 + $0x39e8] sm:$0xff]
    %v1944 = vld [vmem:[#allocation2 + $0x39f0] sm:$0xff]
    %v1945 = vld [vmem:[#allocation2 + $0x39f8] sm:$0xff]
    %v1946 = vld [vmem:[#allocation2 + $0x3a00] sm:$0xff]
    %v1947 = vld [vmem:[#allocation2 + $0x3a08] sm:$0xff]
    %v1948 = vld [vmem:[#allocation2 + $0x3a10] sm:$0xff]
    %v1949 = vld [vmem:[#allocation2 + $0x3a18] sm:$0xff]
    %v1950 = vld [vmem:[#allocation2 + $0x3a20] sm:$0xff]
    %v1951 = vld [vmem:[#allocation2 + $0x3a28] sm:$0xff]
    %v1952 = vld [vmem:[#allocation2 + $0x3a30] sm:$0xff]
    %v1953 = vld [vmem:[#allocation2 + $0x3a38] sm:$0xff]
    %v1954 = vld [vmem:[#allocation2 + $0x3a40] sm:$0xff]
    %v1955 = vld [vmem:[#allocation2 + $0x3a48] sm:$0xff]
    %v1956 = vld [vmem:[#allocation2 + $0x3a50] sm:$0xff]
    %v1957 = vld [vmem:[#allocation2 + $0x3a58] sm:$0xff]
    %v1958 = vld [vmem:[#allocation2 + $0x3a60] sm:$0xff]
    %v1959 = vld [vmem:[#allocation2 + $0x3a68] sm:$0xff]
    %v1960 = vld [vmem:[#allocation2 + $0x3a70] sm:$0xff]
    %v1961 = vld [vmem:[#allocation2 + $0x3a78] sm:$0xff]
    %v1962 = vld [vmem:[#allocation2 + $0x3a80] sm:$0xff]
    %v1963 = vld [vmem:[#allocation2 + $0x3a88] sm:$0xff]
    %v1964 = vld [vmem:[#allocation2 + $0x3a90] sm:$0xff]
    %v1965 = vld [vmem:[#allocation2 + $0x3a98] sm:$0xff]
    %v1966 = vld [vmem:[#allocation2 + $0x3aa0] sm:$0xff]
    %v1967 = vld [vmem:[#allocation2 + $0x3aa8] sm:$0xff]
    %v1968 = vld [vmem:[#allocation2 + $0x3ab0] sm:$0xff]
    %v1969 = vld [vmem:[#allocation2 + $0x3ab8] sm:$0xff]
    %v1970 = vld [vmem:[#allocation2 + $0x3ac0] sm:$0xff]
    %v1971 = vld [vmem:[#allocation2 + $0x3ac8] sm:$0xff]
    %v1972 = vld [vmem:[#allocation2 + $0x3ad0] sm:$0xff]
    %v1973 = vld [vmem:[#allocation2 + $0x3ad8] sm:$0xff]
    %v1974 = vld [vmem:[#allocation2 + $0x3ae0] sm:$0xff]
    %v1975 = vld [vmem:[#allocation2 + $0x3ae8] sm:$0xff]
    %v1976 = vld [vmem:[#allocation2 + $0x3af0] sm:$0xff]
    %v1977 = vld [vmem:[#allocation2 + $0x3af8] sm:$0xff]
    %v1978 = vld [vmem:[#allocation2 + $0x3b00] sm:$0xff]
    %v1979 = vld [vmem:[#allocation2 + $0x3b08] sm:$0xff]
    %v1980 = vld [vmem:[#allocation2 + $0x3b10] sm:$0xff]
    %v1981 = vld [vmem:[#allocation2 + $0x3b18] sm:$0xff]
    %v1982 = vld [vmem:[#allocation2 + $0x3b20] sm:$0xff]
    %v1983 = vld [vmem:[#allocation2 + $0x3b28] sm:$0xff]
    %v1984 = vld [vmem:[#allocation2 + $0x3b30] sm:$0xff]
    %v1985 = vld [vmem:[#allocation2 + $0x3b38] sm:$0xff]
    %v1986 = vld [vmem:[#allocation2 + $0x3b40] sm:$0xff]
    %v1987 = vld [vmem:[#allocation2 + $0x3b48] sm:$0xff]
    %v1988 = vld [vmem:[#allocation2 + $0x3b50] sm:$0xff]
    %v1989 = vld [vmem:[#allocation2 + $0x3b58] sm:$0xff]
    %v1990 = vld [vmem:[#allocation2 + $0x3b60] sm:$0xff]
    %v1991 = vld [vmem:[#allocation2 + $0x3b68] sm:$0xff]
    %v1992 = vld [vmem:[#allocation2 + $0x3b70] sm:$0xff]
    %v1993 = vld [vmem:[#allocation2 + $0x3b78] sm:$0xff]
    %v1994 = vld [vmem:[#allocation2 + $0x3b80] sm:$0xff]
    %v1995 = vld [vmem:[#allocation2 + $0x3b88] sm:$0xff]
    %v1996 = vld [vmem:[#allocation2 + $0x3b90] sm:$0xff]
    %v1997 = vld [vmem:[#allocation2 + $0x3b98] sm:$0xff]
    %v1998 = vld [vmem:[#allocation2 + $0x3ba0] sm:$0xff]
    %v1999 = vld [vmem:[#allocation2 + $0x3ba8] sm:$0xff]
    %v2000 = vld [vmem:[#allocation2 + $0x3bb0] sm:$0xff]
    %v2001 = vld [vmem:[#allocation2 + $0x3bb8] sm:$0xff]
    %v2002 = vld [vmem:[#allocation2 + $0x3bc0] sm:$0xff]
    %v2003 = vld [vmem:[#allocation2 + $0x3bc8] sm:$0xff]
    %v2004 = vld [vmem:[#allocation2 + $0x3bd0] sm:$0xff]
    %v2005 = vld [vmem:[#allocation2 + $0x3bd8] sm:$0xff]
    %v2006 = vld [vmem:[#allocation2 + $0x3be0] sm:$0xff]
    %v2007 = vld [vmem:[#allocation2 + $0x3be8] sm:$0xff]
    %v2008 = vld [vmem:[#allocation2 + $0x3bf0] sm:$0xff]
    %v2009 = vld [vmem:[#allocation2 + $0x3bf8] sm:$0xff]
    %v2010 = vld [vmem:[#allocation2 + $0x3c00] sm:$0xff]
    %v2011 = vld [vmem:[#allocation2 + $0x3c08] sm:$0xff]
    %v2012 = vld [vmem:[#allocation2 + $0x3c10] sm:$0xff]
    %v2013 = vld [vmem:[#allocation2 + $0x3c18] sm:$0xff]
    %v2014 = vld [vmem:[#allocation2 + $0x3c20] sm:$0xff]
    %v2015 = vld [vmem:[#allocation2 + $0x3c28] sm:$0xff]
    %v2016 = vld [vmem:[#allocation2 + $0x3c30] sm:$0xff]
    %v2017 = vld [vmem:[#allocation2 + $0x3c38] sm:$0xff]
    %v2018 = vld [vmem:[#allocation2 + $0x3c40] sm:$0xff]
    %v2019 = vld [vmem:[#allocation2 + $0x3c48] sm:$0xff]
    %v2020 = vld [vmem:[#allocation2 + $0x3c50] sm:$0xff]
    %v2021 = vld [vmem:[#allocation2 + $0x3c58] sm:$0xff]
    %v2022 = vld [vmem:[#allocation2 + $0x3c60] sm:$0xff]
    %v2023 = vld [vmem:[#allocation2 + $0x3c68] sm:$0xff]
    %v2024 = vld [vmem:[#allocation2 + $0x3c70] sm:$0xff]
    %v2025 = vld [vmem:[#allocation2 + $0x3c78] sm:$0xff]
    %v2026 = vld [vmem:[#allocation4] sm:$0xff]
    %v2027 = vld [vmem:[#allocation4 + $0x8] sm:$0x7]
    %v2030 = vperm.slane %v2026, 0
    %v2031 = vperm.slane %v2026, 1
    %v2032 = vperm.slane %v2026, 2
    %v2033 = vperm.slane %v2026, 3
    %v2034 = vperm.slane %v2026, 4
    %v2035 = vperm.slane %v2026, 5
    %v2036 = vperm.slane %v2026, 6
    %v2037 = vperm.slane %v2026, 7
    %v2038 = vperm.slane %v2027, 0
    %v2039 = vperm.slane %v2027, 1
    %v2040 = vperm.slane %v2027, 2
    %2052 = vmatpush.msra.mxu0 %v255
    %2053 = vmatpush.msra.mxu0 %v244
    %2054 = vmatpush.msra.mxu0 %v233
    %2055 = vmatpush.msra.mxu0 %v222
    %2056 = vmatpush.msra.mxu0 %v211
    %2057 = vmatpush.msra.mxu0 %v200
    %2058 = vmatpush.msra.mxu0 %v189
    %2059 = vmatpush.msra.mxu0 %v178
    %2060 = vmatpush.msra.mxu0 %v167
    %2061 = vmatpush.msra.mxu0 %v156
    %2062 = vmatpush.msra.mxu0 %v145
    %2063 = vmatpush.msra.mxu0 %v134
    %2064 = vmatpush.msra.mxu0 %v123
    %2065 = vmatpush.msra.mxu0 %v112
    %2066 = vmatpush.msra.mxu0 %v101
    %2067 = vmatpush.msra.mxu0 %v90
    %2068 = vmatmul.f32.gmra.mxu0 %v79
    %v2069 = vpop.f32.mrf.mxu0
    %v2070 = vadd.f32 %v2030, %v2069
    %2071 = vdwg.mxu0
    %2072 = vmatpush.msra.mxu0 %v431
    %2073 = vmatpush.msra.mxu0 %v420
    %2074 = vmatpush.msra.mxu0 %v409
    %2075 = vmatpush.msra.mxu0 %v398
    %2076 = vmatpush.msra.mxu0 %v387
    %2077 = vmatpush.msra.mxu0 %v376
    %2078 = vmatpush.msra.mxu0 %v365
    %2079 = vmatpush.msra.mxu0 %v354
    %2080 = vmatpush.msra.mxu0 %v343
    %2081 = vmatpush.msra.mxu0 %v332
    %2082 = vmatpush.msra.mxu0 %v321
    %2083 = vmatpush.msra.mxu0 %v310
    %2084 = vmatpush.msra.mxu0 %v299
    %2085 = vmatpush.msra.mxu0 %v288
    %2086 = vmatpush.msra.mxu0 %v277
    %2087 = vmatpush.msra.mxu0 %v266
    %2088 = vmatmul.f32.gmra.mxu0 %v80
    %v2089 = vpop.f32.mrf.mxu0
    %v2090 = vadd.f32 %v2070, %v2089
    %2091 = vdwg.mxu0
    %2092 = vmatpush.msra.mxu0 %v607
    %2093 = vmatpush.msra.mxu0 %v596
    %2094 = vmatpush.msra.mxu0 %v585
    %2095 = vmatpush.msra.mxu0 %v574
    %2096 = vmatpush.msra.mxu0 %v563
    %2097 = vmatpush.msra.mxu0 %v552
    %2098 = vmatpush.msra.mxu0 %v541
    %2099 = vmatpush.msra.mxu0 %v530
    %2100 = vmatpush.msra.mxu0 %v519
    %2101 = vmatpush.msra.mxu0 %v508
    %2102 = vmatpush.msra.mxu0 %v497
    %2103 = vmatpush.msra.mxu0 %v486
    %2104 = vmatpush.msra.mxu0 %v475
    %2105 = vmatpush.msra.mxu0 %v464
    %2106 = vmatpush.msra.mxu0 %v453
    %2107 = vmatpush.msra.mxu0 %v442
    %2108 = vmatmul.f32.gmra.mxu0 %v81
    %v2109 = vpop.f32.mrf.mxu0
    %v2110 = vadd.f32 %v2090, %v2109
    %2111 = vdwg.mxu0
    %2112 = vmatpush.msra.mxu0 %v783
    %2113 = vmatpush.msra.mxu0 %v772
    %2114 = vmatpush.msra.mxu0 %v761
    %2115 = vmatpush.msra.mxu0 %v750
    %2116 = vmatpush.msra.mxu0 %v739
    %2117 = vmatpush.msra.mxu0 %v728
    %2118 = vmatpush.msra.mxu0 %v717
    %2119 = vmatpush.msra.mxu0 %v706
    %2120 = vmatpush.msra.mxu0 %v695
    %2121 = vmatpush.msra.mxu0 %v684
    %2122 = vmatpush.msra.mxu0 %v673
    %2123 = vmatpush.msra.mxu0 %v662
    %2124 = vmatpush.msra.mxu0 %v651
    %2125 = vmatpush.msra.mxu0 %v640
    %2126 = vmatpush.msra.mxu0 %v629
    %2127 = vmatpush.msra.mxu0 %v618
    %2128 = vmatmul.f32.gmra.mxu0 %v82
    %v2129 = vpop.f32.mrf.mxu0
    %v2130 = vadd.f32 %v2110, %v2129
    %2131 = vdwg.mxu0
    %2132 = vmatpush.msra.mxu0 %v959
    %2133 = vmatpush.msra.mxu0 %v948
    %2134 = vmatpush.msra.mxu0 %v937
    %2135 = vmatpush.msra.mxu0 %v926
    %2136 = vmatpush.msra.mxu0 %v915
    %2137 = vmatpush.msra.mxu0 %v904
    %2138 = vmatpush.msra.mxu0 %v893
    %2139 = vmatpush.msra.mxu0 %v882
    %2140 = vmatpush.msra.mxu0 %v871
    %2141 = vmatpush.msra.mxu0 %v860
    %2142 = vmatpush.msra.mxu0 %v849
    %2143 = vmatpush.msra.mxu0 %v838
    %2144 = vmatpush.msra.mxu0 %v827
    %2145 = vmatpush.msra.mxu0 %v816
    %2146 = vmatpush.msra.mxu0 %v805
    %2147 = vmatpush.msra.mxu0 %v794
    %2148 = vmatmul.f32.gmra.mxu0 %v83
    %v2149 = vpop.f32.mrf.mxu0
    %v2150 = vadd.f32 %v2130, %v2149
    %2151 = vdwg.mxu0
    %2152 = vmatpush.msra.mxu0 %v1135
    %2153 = vmatpush.msra.mxu0 %v1124
    %2154 = vmatpush.msra.mxu0 %v1113
    %2155 = vmatpush.msra.mxu0 %v1102
    %2156 = vmatpush.msra.mxu0 %v1091
    %2157 = vmatpush.msra.mxu0 %v1080
    %2158 = vmatpush.msra.mxu0 %v1069
    %2159 = vmatpush.msra.mxu0 %v1058
    %2160 = vmatpush.msra.mxu0 %v1047
    %2161 = vmatpush.msra.mxu0 %v1036
    %2162 = vmatpush.msra.mxu0 %v1025
    %2163 = vmatpush.msra.mxu0 %v1014
    %2164 = vmatpush.msra.mxu0 %v1003
    %2165 = vmatpush.msra.mxu0 %v992
    %2166 = vmatpush.msra.mxu0 %v981
    %2167 = vmatpush.msra.mxu0 %v970
    %2168 = vmatmul.f32.gmra.mxu0 %v84
    %v2169 = vpop.f32.mrf.mxu0
    %v2170 = vadd.f32 %v2150, %v2169
    %2171 = vdwg.mxu0
    %2172 = vmatpush.msra.mxu0 %v1311
    %2173 = vmatpush.msra.mxu0 %v1300
    %2174 = vmatpush.msra.mxu0 %v1289
    %2175 = vmatpush.msra.mxu0 %v1278
    %2176 = vmatpush.msra.mxu0 %v1267
    %2177 = vmatpush.msra.mxu0 %v1256
    %2178 = vmatpush.msra.mxu0 %v1245
    %2179 = vmatpush.msra.mxu0 %v1234
    %2180 = vmatpush.msra.mxu0 %v1223
    %2181 = vmatpush.msra.mxu0 %v1212
    %2182 = vmatpush.msra.mxu0 %v1201
    %2183 = vmatpush.msra.mxu0 %v1190
    %2184 = vmatpush.msra.mxu0 %v1179
    %2185 = vmatpush.msra.mxu0 %v1168
    %2186 = vmatpush.msra.mxu0 %v1157
    %2187 = vmatpush.msra.mxu0 %v1146
    %2188 = vmatmul.f32.gmra.mxu0 %v85
    %v2189 = vpop.f32.mrf.mxu0
    %v2190 = vadd.f32 %v2170, %v2189
    %2191 = vdwg.mxu0
    %2192 = vmatpush.msra.mxu0 %v1487
    %2193 = vmatpush.msra.mxu0 %v1476
    %2194 = vmatpush.msra.mxu0 %v1465
    %2195 = vmatpush.msra.mxu0 %v1454
    %2196 = vmatpush.msra.mxu0 %v1443
    %2197 = vmatpush.msra.mxu0 %v1432
    %2198 = vmatpush.msra.mxu0 %v1421
    %2199 = vmatpush.msra.mxu0 %v1410
    %2200 = vmatpush.msra.mxu0 %v1399
    %2201 = vmatpush.msra.mxu0 %v1388
    %2202 = vmatpush.msra.mxu0 %v1377
    %2203 = vmatpush.msra.mxu0 %v1366
    %2204 = vmatpush.msra.mxu0 %v1355
    %2205 = vmatpush.msra.mxu0 %v1344
    %2206 = vmatpush.msra.mxu0 %v1333
    %2207 = vmatpush.msra.mxu0 %v1322
    %2208 = vmatmul.f32.gmra.mxu0 %v86
    %v2209 = vpop.f32.mrf.mxu0
    %v2210 = vadd.f32 %v2190, %v2209
    %2211 = vdwg.mxu0
    %2212 = vmatpush.msra.mxu0 %v1663
    %2213 = vmatpush.msra.mxu0 %v1652
    %2214 = vmatpush.msra.mxu0 %v1641
    %2215 = vmatpush.msra.mxu0 %v1630
    %2216 = vmatpush.msra.mxu0 %v1619
    %2217 = vmatpush.msra.mxu0 %v1608
    %2218 = vmatpush.msra.mxu0 %v1597
    %2219 = vmatpush.msra.mxu0 %v1586
    %2220 = vmatpush.msra.mxu0 %v1575
    %2221 = vmatpush.msra.mxu0 %v1564
    %2222 = vmatpush.msra.mxu0 %v1553
    %2223 = vmatpush.msra.mxu0 %v1542
    %2224 = vmatpush.msra.mxu0 %v1531
    %2225 = vmatpush.msra.mxu0 %v1520
    %2226 = vmatpush.msra.mxu0 %v1509
    %2227 = vmatpush.msra.mxu0 %v1498
    %2228 = vmatmul.f32.gmra.mxu0 %v87
    %v2229 = vpop.f32.mrf.mxu0
    %v2230 = vadd.f32 %v2210, %v2229
    %2231 = vdwg.mxu0
    %2232 = vmatpush.msra.mxu0 %v1839
    %2233 = vmatpush.msra.mxu0 %v1828
    %2234 = vmatpush.msra.mxu0 %v1817
    %2235 = vmatpush.msra.mxu0 %v1806
    %2236 = vmatpush.msra.mxu0 %v1795
    %2237 = vmatpush.msra.mxu0 %v1784
    %2238 = vmatpush.msra.mxu0 %v1773
    %2239 = vmatpush.msra.mxu0 %v1762
    %2240 = vmatpush.msra.mxu0 %v1751
    %2241 = vmatpush.msra.mxu0 %v1740
    %2242 = vmatpush.msra.mxu0 %v1729
    %2243 = vmatpush.msra.mxu0 %v1718
    %2244 = vmatpush.msra.mxu0 %v1707
    %2245 = vmatpush.msra.mxu0 %v1696
    %2246 = vmatpush.msra.mxu0 %v1685
    %2247 = vmatpush.msra.mxu0 %v1674
    %2248 = vmatmul.f32.gmra.mxu0 %v88
    %v2249 = vpop.f32.mrf.mxu0
    %v2250 = vadd.f32 %v2230, %v2249
    %2251 = vdwg.mxu0
    %2252 = vmatpush.msra.mxu0 %v2015
    %2253 = vmatpush.msra.mxu0 %v2004
    %2254 = vmatpush.msra.mxu0 %v1993
    %2255 = vmatpush.msra.mxu0 %v1982
    %2256 = vmatpush.msra.mxu0 %v1971
    %2257 = vmatpush.msra.mxu0 %v1960
    %2258 = vmatpush.msra.mxu0 %v1949
    %2259 = vmatpush.msra.mxu0 %v1938
    %2260 = vmatpush.msra.mxu0 %v1927
    %2261 = vmatpush.msra.mxu0 %v1916
    %2262 = vmatpush.msra.mxu0 %v1905
    %2263 = vmatpush.msra.mxu0 %v1894
    %2264 = vmatpush.msra.mxu0 %v1883
    %2265 = vmatpush.msra.mxu0 %v1872
    %2266 = vmatpush.msra.mxu0 %v1861
    %2267 = vmatpush.msra.mxu0 %v1850
    %2268 = vmatmul.f32.gmra.mxu0 %v89
    %v2269 = vpop.f32.mrf.mxu0
    %v2270 = vadd.f32 %v2250, %v2269
    %2271 = vdwg.mxu0
    %2272 = vmatpush.msra.mxu0 %v256
    %2273 = vmatpush.msra.mxu0 %v245
    %2274 = vmatpush.msra.mxu0 %v234
    %2275 = vmatpush.msra.mxu0 %v223
    %2276 = vmatpush.msra.mxu0 %v212
    %2277 = vmatpush.msra.mxu0 %v201
    %2278 = vmatpush.msra.mxu0 %v190
    %2279 = vmatpush.msra.mxu0 %v179
    %2280 = vmatpush.msra.mxu0 %v168
    %2281 = vmatpush.msra.mxu0 %v157
    %2282 = vmatpush.msra.mxu0 %v146
    %2283 = vmatpush.msra.mxu0 %v135
    %2284 = vmatpush.msra.mxu0 %v124
    %2285 = vmatpush.msra.mxu0 %v113
    %2286 = vmatpush.msra.mxu0 %v102
    %2287 = vmatpush.msra.mxu0 %v91
    %2288 = vmatmul.f32.gmra.mxu0 %v79
    %v2289 = vpop.f32.mrf.mxu0
    %v2290 = vadd.f32 %v2031, %v2289
    %2291 = vdwg.mxu0
    %2292 = vmatpush.msra.mxu0 %v432
    %2293 = vmatpush.msra.mxu0 %v421
    %2294 = vmatpush.msra.mxu0 %v410
    %2295 = vmatpush.msra.mxu0 %v399
    %2296 = vmatpush.msra.mxu0 %v388
    %2297 = vmatpush.msra.mxu0 %v377
    %2298 = vmatpush.msra.mxu0 %v366
    %2299 = vmatpush.msra.mxu0 %v355
    %2300 = vmatpush.msra.mxu0 %v344
    %2301 = vmatpush.msra.mxu0 %v333
    %2302 = vmatpush.msra.mxu0 %v322
    %2303 = vmatpush.msra.mxu0 %v311
    %2304 = vmatpush.msra.mxu0 %v300
    %2305 = vmatpush.msra.mxu0 %v289
    %2306 = vmatpush.msra.mxu0 %v278
    %2307 = vmatpush.msra.mxu0 %v267
    %2308 = vmatmul.f32.gmra.mxu0 %v80
    %v2309 = vpop.f32.mrf.mxu0
    %v2310 = vadd.f32 %v2290, %v2309
    %2311 = vdwg.mxu0
    %2312 = vmatpush.msra.mxu0 %v608
    %2313 = vmatpush.msra.mxu0 %v597
    %2314 = vmatpush.msra.mxu0 %v586
    %2315 = vmatpush.msra.mxu0 %v575
    %2316 = vmatpush.msra.mxu0 %v564
    %2317 = vmatpush.msra.mxu0 %v553
    %2318 = vmatpush.msra.mxu0 %v542
    %2319 = vmatpush.msra.mxu0 %v531
    %2320 = vmatpush.msra.mxu0 %v520
    %2321 = vmatpush.msra.mxu0 %v509
    %2322 = vmatpush.msra.mxu0 %v498
    %2323 = vmatpush.msra.mxu0 %v487
    %2324 = vmatpush.msra.mxu0 %v476
    %2325 = vmatpush.msra.mxu0 %v465
    %2326 = vmatpush.msra.mxu0 %v454
    %2327 = vmatpush.msra.mxu0 %v443
    %2328 = vmatmul.f32.gmra.mxu0 %v81
    %v2329 = vpop.f32.mrf.mxu0
    %v2330 = vadd.f32 %v2310, %v2329
    %2331 = vdwg.mxu0
    %2332 = vmatpush.msra.mxu0 %v784
    %2333 = vmatpush.msra.mxu0 %v773
    %2334 = vmatpush.msra.mxu0 %v762
    %2335 = vmatpush.msra.mxu0 %v751
    %2336 = vmatpush.msra.mxu0 %v740
    %2337 = vmatpush.msra.mxu0 %v729
    %2338 = vmatpush.msra.mxu0 %v718
    %2339 = vmatpush.msra.mxu0 %v707
    %2340 = vmatpush.msra.mxu0 %v696
    %2341 = vmatpush.msra.mxu0 %v685
    %2342 = vmatpush.msra.mxu0 %v674
    %2343 = vmatpush.msra.mxu0 %v663
    %2344 = vmatpush.msra.mxu0 %v652
    %2345 = vmatpush.msra.mxu0 %v641
    %2346 = vmatpush.msra.mxu0 %v630
    %2347 = vmatpush.msra.mxu0 %v619
    %2348 = vmatmul.f32.gmra.mxu0 %v82
    %v2349 = vpop.f32.mrf.mxu0
    %v2350 = vadd.f32 %v2330, %v2349
    %2351 = vdwg.mxu0
    %2352 = vmatpush.msra.mxu0 %v960
    %2353 = vmatpush.msra.mxu0 %v949
    %2354 = vmatpush.msra.mxu0 %v938
    %2355 = vmatpush.msra.mxu0 %v927
    %2356 = vmatpush.msra.mxu0 %v916
    %2357 = vmatpush.msra.mxu0 %v905
    %2358 = vmatpush.msra.mxu0 %v894
    %2359 = vmatpush.msra.mxu0 %v883
    %2360 = vmatpush.msra.mxu0 %v872
    %2361 = vmatpush.msra.mxu0 %v861
    %2362 = vmatpush.msra.mxu0 %v850
    %2363 = vmatpush.msra.mxu0 %v839
    %2364 = vmatpush.msra.mxu0 %v828
    %2365 = vmatpush.msra.mxu0 %v817
    %2366 = vmatpush.msra.mxu0 %v806
    %2367 = vmatpush.msra.mxu0 %v795
    %2368 = vmatmul.f32.gmra.mxu0 %v83
    %v2369 = vpop.f32.mrf.mxu0
    %v2370 = vadd.f32 %v2350, %v2369
    %2371 = vdwg.mxu0
    %2372 = vmatpush.msra.mxu0 %v1136
    %2373 = vmatpush.msra.mxu0 %v1125
    %2374 = vmatpush.msra.mxu0 %v1114
    %2375 = vmatpush.msra.mxu0 %v1103
    %2376 = vmatpush.msra.mxu0 %v1092
    %2377 = vmatpush.msra.mxu0 %v1081
    %2378 = vmatpush.msra.mxu0 %v1070
    %2379 = vmatpush.msra.mxu0 %v1059
    %2380 = vmatpush.msra.mxu0 %v1048
    %2381 = vmatpush.msra.mxu0 %v1037
    %2382 = vmatpush.msra.mxu0 %v1026
    %2383 = vmatpush.msra.mxu0 %v1015
    %2384 = vmatpush.msra.mxu0 %v1004
    %2385 = vmatpush.msra.mxu0 %v993
    %2386 = vmatpush.msra.mxu0 %v982
    %2387 = vmatpush.msra.mxu0 %v971
    %2388 = vmatmul.f32.gmra.mxu0 %v84
    %v2389 = vpop.f32.mrf.mxu0
    %v2390 = vadd.f32 %v2370, %v2389
    %2391 = vdwg.mxu0
    %2392 = vmatpush.msra.mxu0 %v1312
    %2393 = vmatpush.msra.mxu0 %v1301
    %2394 = vmatpush.msra.mxu0 %v1290
    %2395 = vmatpush.msra.mxu0 %v1279
    %2396 = vmatpush.msra.mxu0 %v1268
    %2397 = vmatpush.msra.mxu0 %v1257
    %2398 = vmatpush.msra.mxu0 %v1246
    %2399 = vmatpush.msra.mxu0 %v1235
    %2400 = vmatpush.msra.mxu0 %v1224
    %2401 = vmatpush.msra.mxu0 %v1213
    %2402 = vmatpush.msra.mxu0 %v1202
    %2403 = vmatpush.msra.mxu0 %v1191
    %2404 = vmatpush.msra.mxu0 %v1180
    %2405 = vmatpush.msra.mxu0 %v1169
    %2406 = vmatpush.msra.mxu0 %v1158
    %2407 = vmatpush.msra.mxu0 %v1147
    %2408 = vmatmul.f32.gmra.mxu0 %v85
    %v2409 = vpop.f32.mrf.mxu0
    %v2410 = vadd.f32 %v2390, %v2409
    %2411 = vdwg.mxu0
    %2412 = vmatpush.msra.mxu0 %v1488
    %2413 = vmatpush.msra.mxu0 %v1477
    %2414 = vmatpush.msra.mxu0 %v1466
    %2415 = vmatpush.msra.mxu0 %v1455
    %2416 = vmatpush.msra.mxu0 %v1444
    %2417 = vmatpush.msra.mxu0 %v1433
    %2418 = vmatpush.msra.mxu0 %v1422
    %2419 = vmatpush.msra.mxu0 %v1411
    %2420 = vmatpush.msra.mxu0 %v1400
    %2421 = vmatpush.msra.mxu0 %v1389
    %2422 = vmatpush.msra.mxu0 %v1378
    %2423 = vmatpush.msra.mxu0 %v1367
    %2424 = vmatpush.msra.mxu0 %v1356
    %2425 = vmatpush.msra.mxu0 %v1345
    %2426 = vmatpush.msra.mxu0 %v1334
    %2427 = vmatpush.msra.mxu0 %v1323
    %2428 = vmatmul.f32.gmra.mxu0 %v86
    %v2429 = vpop.f32.mrf.mxu0
    %v2430 = vadd.f32 %v2410, %v2429
    %2431 = vdwg.mxu0
    %2432 = vmatpush.msra.mxu0 %v1664
    %2433 = vmatpush.msra.mxu0 %v1653
    %2434 = vmatpush.msra.mxu0 %v1642
    %2435 = vmatpush.msra.mxu0 %v1631
    %2436 = vmatpush.msra.mxu0 %v1620
    %2437 = vmatpush.msra.mxu0 %v1609
    %2438 = vmatpush.msra.mxu0 %v1598
    %2439 = vmatpush.msra.mxu0 %v1587
    %2440 = vmatpush.msra.mxu0 %v1576
    %2441 = vmatpush.msra.mxu0 %v1565
    %2442 = vmatpush.msra.mxu0 %v1554
    %2443 = vmatpush.msra.mxu0 %v1543
    %2444 = vmatpush.msra.mxu0 %v1532
    %2445 = vmatpush.msra.mxu0 %v1521
    %2446 = vmatpush.msra.mxu0 %v1510
    %2447 = vmatpush.msra.mxu0 %v1499
    %2448 = vmatmul.f32.gmra.mxu0 %v87
    %v2449 = vpop.f32.mrf.mxu0
    %v2450 = vadd.f32 %v2430, %v2449
    %2451 = vdwg.mxu0
    %2452 = vmatpush.msra.mxu0 %v1840
    %2453 = vmatpush.msra.mxu0 %v1829
    %2454 = vmatpush.msra.mxu0 %v1818
    %2455 = vmatpush.msra.mxu0 %v1807
    %2456 = vmatpush.msra.mxu0 %v1796
    %2457 = vmatpush.msra.mxu0 %v1785
    %2458 = vmatpush.msra.mxu0 %v1774
    %2459 = vmatpush.msra.mxu0 %v1763
    %2460 = vmatpush.msra.mxu0 %v1752
    %2461 = vmatpush.msra.mxu0 %v1741
    %2462 = vmatpush.msra.mxu0 %v1730
    %2463 = vmatpush.msra.mxu0 %v1719
    %2464 = vmatpush.msra.mxu0 %v1708
    %2465 = vmatpush.msra.mxu0 %v1697
    %2466 = vmatpush.msra.mxu0 %v1686
    %2467 = vmatpush.msra.mxu0 %v1675
    %2468 = vmatmul.f32.gmra.mxu0 %v88
    %v2469 = vpop.f32.mrf.mxu0
    %v2470 = vadd.f32 %v2450, %v2469
    %2471 = vdwg.mxu0
    %2472 = vmatpush.msra.mxu0 %v2016
    %2473 = vmatpush.msra.mxu0 %v2005
    %2474 = vmatpush.msra.mxu0 %v1994
    %2475 = vmatpush.msra.mxu0 %v1983
    %2476 = vmatpush.msra.mxu0 %v1972
    %2477 = vmatpush.msra.mxu0 %v1961
    %2478 = vmatpush.msra.mxu0 %v1950
    %2479 = vmatpush.msra.mxu0 %v1939
    %2480 = vmatpush.msra.mxu0 %v1928
    %2481 = vmatpush.msra.mxu0 %v1917
    %2482 = vmatpush.msra.mxu0 %v1906
    %2483 = vmatpush.msra.mxu0 %v1895
    %2484 = vmatpush.msra.mxu0 %v1884
    %2485 = vmatpush.msra.mxu0 %v1873
    %2486 = vmatpush.msra.mxu0 %v1862
    %2487 = vmatpush.msra.mxu0 %v1851
    %2488 = vmatmul.f32.gmra.mxu0 %v89
    %v2489 = vpop.f32.mrf.mxu0
    %v2490 = vadd.f32 %v2470, %v2489
    %2491 = vdwg.mxu0
    %2492 = vmatpush.msra.mxu0 %v257
    %2493 = vmatpush.msra.mxu0 %v246
    %2494 = vmatpush.msra.mxu0 %v235
    %2495 = vmatpush.msra.mxu0 %v224
    %2496 = vmatpush.msra.mxu0 %v213
    %2497 = vmatpush.msra.mxu0 %v202
    %2498 = vmatpush.msra.mxu0 %v191
    %2499 = vmatpush.msra.mxu0 %v180
    %2500 = vmatpush.msra.mxu0 %v169
    %2501 = vmatpush.msra.mxu0 %v158
    %2502 = vmatpush.msra.mxu0 %v147
    %2503 = vmatpush.msra.mxu0 %v136
    %2504 = vmatpush.msra.mxu0 %v125
    %2505 = vmatpush.msra.mxu0 %v114
    %2506 = vmatpush.msra.mxu0 %v103
    %2507 = vmatpush.msra.mxu0 %v92
    %2508 = vmatmul.f32.gmra.mxu0 %v79
    %v2509 = vpop.f32.mrf.mxu0
    %v2510 = vadd.f32 %v2032, %v2509
    %2511 = vdwg.mxu0
    %2512 = vmatpush.msra.mxu0 %v433
    %2513 = vmatpush.msra.mxu0 %v422
    %2514 = vmatpush.msra.mxu0 %v411
    %2515 = vmatpush.msra.mxu0 %v400
    %2516 = vmatpush.msra.mxu0 %v389
    %2517 = vmatpush.msra.mxu0 %v378
    %2518 = vmatpush.msra.mxu0 %v367
    %2519 = vmatpush.msra.mxu0 %v356
    %2520 = vmatpush.msra.mxu0 %v345
    %2521 = vmatpush.msra.mxu0 %v334
    %2522 = vmatpush.msra.mxu0 %v323
    %2523 = vmatpush.msra.mxu0 %v312
    %2524 = vmatpush.msra.mxu0 %v301
    %2525 = vmatpush.msra.mxu0 %v290
    %2526 = vmatpush.msra.mxu0 %v279
    %2527 = vmatpush.msra.mxu0 %v268
    %2528 = vmatmul.f32.gmra.mxu0 %v80
    %v2529 = vpop.f32.mrf.mxu0
    %v2530 = vadd.f32 %v2510, %v2529
    %2531 = vdwg.mxu0
    %2532 = vmatpush.msra.mxu0 %v609
    %2533 = vmatpush.msra.mxu0 %v598
    %2534 = vmatpush.msra.mxu0 %v587
    %2535 = vmatpush.msra.mxu0 %v576
    %2536 = vmatpush.msra.mxu0 %v565
    %2537 = vmatpush.msra.mxu0 %v554
    %2538 = vmatpush.msra.mxu0 %v543
    %2539 = vmatpush.msra.mxu0 %v532
    %2540 = vmatpush.msra.mxu0 %v521
    %2541 = vmatpush.msra.mxu0 %v510
    %2542 = vmatpush.msra.mxu0 %v499
    %2543 = vmatpush.msra.mxu0 %v488
    %2544 = vmatpush.msra.mxu0 %v477
    %2545 = vmatpush.msra.mxu0 %v466
    %2546 = vmatpush.msra.mxu0 %v455
    %2547 = vmatpush.msra.mxu0 %v444
    %2548 = vmatmul.f32.gmra.mxu0 %v81
    %v2549 = vpop.f32.mrf.mxu0
    %v2550 = vadd.f32 %v2530, %v2549
    %2551 = vdwg.mxu0
    %2552 = vmatpush.msra.mxu0 %v785
    %2553 = vmatpush.msra.mxu0 %v774
    %2554 = vmatpush.msra.mxu0 %v763
    %2555 = vmatpush.msra.mxu0 %v752
    %2556 = vmatpush.msra.mxu0 %v741
    %2557 = vmatpush.msra.mxu0 %v730
    %2558 = vmatpush.msra.mxu0 %v719
    %2559 = vmatpush.msra.mxu0 %v708
    %2560 = vmatpush.msra.mxu0 %v697
    %2561 = vmatpush.msra.mxu0 %v686
    %2562 = vmatpush.msra.mxu0 %v675
    %2563 = vmatpush.msra.mxu0 %v664
    %2564 = vmatpush.msra.mxu0 %v653
    %2565 = vmatpush.msra.mxu0 %v642
    %2566 = vmatpush.msra.mxu0 %v631
    %2567 = vmatpush.msra.mxu0 %v620
    %2568 = vmatmul.f32.gmra.mxu0 %v82
    %v2569 = vpop.f32.mrf.mxu0
    %v2570 = vadd.f32 %v2550, %v2569
    %2571 = vdwg.mxu0
    %2572 = vmatpush.msra.mxu0 %v961
    %2573 = vmatpush.msra.mxu0 %v950
    %2574 = vmatpush.msra.mxu0 %v939
    %2575 = vmatpush.msra.mxu0 %v928
    %2576 = vmatpush.msra.mxu0 %v917
    %2577 = vmatpush.msra.mxu0 %v906
    %2578 = vmatpush.msra.mxu0 %v895
    %2579 = vmatpush.msra.mxu0 %v884
    %2580 = vmatpush.msra.mxu0 %v873
    %2581 = vmatpush.msra.mxu0 %v862
    %2582 = vmatpush.msra.mxu0 %v851
    %2583 = vmatpush.msra.mxu0 %v840
    %2584 = vmatpush.msra.mxu0 %v829
    %2585 = vmatpush.msra.mxu0 %v818
    %2586 = vmatpush.msra.mxu0 %v807
    %2587 = vmatpush.msra.mxu0 %v796
    %2588 = vmatmul.f32.gmra.mxu0 %v83
    %v2589 = vpop.f32.mrf.mxu0
    %v2590 = vadd.f32 %v2570, %v2589
    %2591 = vdwg.mxu0
    %2592 = vmatpush.msra.mxu0 %v1137
    %2593 = vmatpush.msra.mxu0 %v1126
    %2594 = vmatpush.msra.mxu0 %v1115
    %2595 = vmatpush.msra.mxu0 %v1104
    %2596 = vmatpush.msra.mxu0 %v1093
    %2597 = vmatpush.msra.mxu0 %v1082
    %2598 = vmatpush.msra.mxu0 %v1071
    %2599 = vmatpush.msra.mxu0 %v1060
    %2600 = vmatpush.msra.mxu0 %v1049
    %2601 = vmatpush.msra.mxu0 %v1038
    %2602 = vmatpush.msra.mxu0 %v1027
    %2603 = vmatpush.msra.mxu0 %v1016
    %2604 = vmatpush.msra.mxu0 %v1005
    %2605 = vmatpush.msra.mxu0 %v994
    %2606 = vmatpush.msra.mxu0 %v983
    %2607 = vmatpush.msra.mxu0 %v972
    %2608 = vmatmul.f32.gmra.mxu0 %v84
    %v2609 = vpop.f32.mrf.mxu0
    %v2610 = vadd.f32 %v2590, %v2609
    %2611 = vdwg.mxu0
    %2612 = vmatpush.msra.mxu0 %v1313
    %2613 = vmatpush.msra.mxu0 %v1302
    %2614 = vmatpush.msra.mxu0 %v1291
    %2615 = vmatpush.msra.mxu0 %v1280
    %2616 = vmatpush.msra.mxu0 %v1269
    %2617 = vmatpush.msra.mxu0 %v1258
    %2618 = vmatpush.msra.mxu0 %v1247
    %2619 = vmatpush.msra.mxu0 %v1236
    %2620 = vmatpush.msra.mxu0 %v1225
    %2621 = vmatpush.msra.mxu0 %v1214
    %2622 = vmatpush.msra.mxu0 %v1203
    %2623 = vmatpush.msra.mxu0 %v1192
    %2624 = vmatpush.msra.mxu0 %v1181
    %2625 = vmatpush.msra.mxu0 %v1170
    %2626 = vmatpush.msra.mxu0 %v1159
    %2627 = vmatpush.msra.mxu0 %v1148
    %2628 = vmatmul.f32.gmra.mxu0 %v85
    %v2629 = vpop.f32.mrf.mxu0
    %v2630 = vadd.f32 %v2610, %v2629
    %2631 = vdwg.mxu0
    %2632 = vmatpush.msra.mxu0 %v1489
    %2633 = vmatpush.msra.mxu0 %v1478
    %2634 = vmatpush.msra.mxu0 %v1467
    %2635 = vmatpush.msra.mxu0 %v1456
    %2636 = vmatpush.msra.mxu0 %v1445
    %2637 = vmatpush.msra.mxu0 %v1434
    %2638 = vmatpush.msra.mxu0 %v1423
    %2639 = vmatpush.msra.mxu0 %v1412
    %2640 = vmatpush.msra.mxu0 %v1401
    %2641 = vmatpush.msra.mxu0 %v1390
    %2642 = vmatpush.msra.mxu0 %v1379
    %2643 = vmatpush.msra.mxu0 %v1368
    %2644 = vmatpush.msra.mxu0 %v1357
    %2645 = vmatpush.msra.mxu0 %v1346
    %2646 = vmatpush.msra.mxu0 %v1335
    %2647 = vmatpush.msra.mxu0 %v1324
    %2648 = vmatmul.f32.gmra.mxu0 %v86
    %v2649 = vpop.f32.mrf.mxu0
    %v2650 = vadd.f32 %v2630, %v2649
    %2651 = vdwg.mxu0
    %2652 = vmatpush.msra.mxu0 %v1665
    %2653 = vmatpush.msra.mxu0 %v1654
    %2654 = vmatpush.msra.mxu0 %v1643
    %2655 = vmatpush.msra.mxu0 %v1632
    %2656 = vmatpush.msra.mxu0 %v1621
    %2657 = vmatpush.msra.mxu0 %v1610
    %2658 = vmatpush.msra.mxu0 %v1599
    %2659 = vmatpush.msra.mxu0 %v1588
    %2660 = vmatpush.msra.mxu0 %v1577
    %2661 = vmatpush.msra.mxu0 %v1566
    %2662 = vmatpush.msra.mxu0 %v1555
    %2663 = vmatpush.msra.mxu0 %v1544
    %2664 = vmatpush.msra.mxu0 %v1533
    %2665 = vmatpush.msra.mxu0 %v1522
    %2666 = vmatpush.msra.mxu0 %v1511
    %2667 = vmatpush.msra.mxu0 %v1500
    %2668 = vmatmul.f32.gmra.mxu0 %v87
    %v2669 = vpop.f32.mrf.mxu0
    %v2670 = vadd.f32 %v2650, %v2669
    %2671 = vdwg.mxu0
    %2672 = vmatpush.msra.mxu0 %v1841
    %2673 = vmatpush.msra.mxu0 %v1830
    %2674 = vmatpush.msra.mxu0 %v1819
    %2675 = vmatpush.msra.mxu0 %v1808
    %2676 = vmatpush.msra.mxu0 %v1797
    %2677 = vmatpush.msra.mxu0 %v1786
    %2678 = vmatpush.msra.mxu0 %v1775
    %2679 = vmatpush.msra.mxu0 %v1764
    %2680 = vmatpush.msra.mxu0 %v1753
    %2681 = vmatpush.msra.mxu0 %v1742
    %2682 = vmatpush.msra.mxu0 %v1731
    %2683 = vmatpush.msra.mxu0 %v1720
    %2684 = vmatpush.msra.mxu0 %v1709
    %2685 = vmatpush.msra.mxu0 %v1698
    %2686 = vmatpush.msra.mxu0 %v1687
    %2687 = vmatpush.msra.mxu0 %v1676
    %2688 = vmatmul.f32.gmra.mxu0 %v88
    %v2689 = vpop.f32.mrf.mxu0
    %v2690 = vadd.f32 %v2670, %v2689
    %2691 = vdwg.mxu0
    %2692 = vmatpush.msra.mxu0 %v2017
    %2693 = vmatpush.msra.mxu0 %v2006
    %2694 = vmatpush.msra.mxu0 %v1995
    %2695 = vmatpush.msra.mxu0 %v1984
    %2696 = vmatpush.msra.mxu0 %v1973
    %2697 = vmatpush.msra.mxu0 %v1962
    %2698 = vmatpush.msra.mxu0 %v1951
    %2699 = vmatpush.msra.mxu0 %v1940
    %2700 = vmatpush.msra.mxu0 %v1929
    %2701 = vmatpush.msra.mxu0 %v1918
    %2702 = vmatpush.msra.mxu0 %v1907
    %2703 = vmatpush.msra.mxu0 %v1896
    %2704 = vmatpush.msra.mxu0 %v1885
    %2705 = vmatpush.msra.mxu0 %v1874
    %2706 = vmatpush.msra.mxu0 %v1863
    %2707 = vmatpush.msra.mxu0 %v1852
    %2708 = vmatmul.f32.gmra.mxu0 %v89
    %v2709 = vpop.f32.mrf.mxu0
    %v2710 = vadd.f32 %v2690, %v2709
    %2711 = vdwg.mxu0
    %2712 = vmatpush.msra.mxu0 %v258
    %2713 = vmatpush.msra.mxu0 %v247
    %2714 = vmatpush.msra.mxu0 %v236
    %2715 = vmatpush.msra.mxu0 %v225
    %2716 = vmatpush.msra.mxu0 %v214
    %2717 = vmatpush.msra.mxu0 %v203
    %2718 = vmatpush.msra.mxu0 %v192
    %2719 = vmatpush.msra.mxu0 %v181
    %2720 = vmatpush.msra.mxu0 %v170
    %2721 = vmatpush.msra.mxu0 %v159
    %2722 = vmatpush.msra.mxu0 %v148
    %2723 = vmatpush.msra.mxu0 %v137
    %2724 = vmatpush.msra.mxu0 %v126
    %2725 = vmatpush.msra.mxu0 %v115
    %2726 = vmatpush.msra.mxu0 %v104
    %2727 = vmatpush.msra.mxu0 %v93
    %2728 = vmatmul.f32.gmra.mxu0 %v79
    %v2729 = vpop.f32.mrf.mxu0
    %v2730 = vadd.f32 %v2033, %v2729
    %2731 = vdwg.mxu0
    %2732 = vmatpush.msra.mxu0 %v434
    %2733 = vmatpush.msra.mxu0 %v423
    %2734 = vmatpush.msra.mxu0 %v412
    %2735 = vmatpush.msra.mxu0 %v401
    %2736 = vmatpush.msra.mxu0 %v390
    %2737 = vmatpush.msra.mxu0 %v379
    %2738 = vmatpush.msra.mxu0 %v368
    %2739 = vmatpush.msra.mxu0 %v357
    %2740 = vmatpush.msra.mxu0 %v346
    %2741 = vmatpush.msra.mxu0 %v335
    %2742 = vmatpush.msra.mxu0 %v324
    %2743 = vmatpush.msra.mxu0 %v313
    %2744 = vmatpush.msra.mxu0 %v302
    %2745 = vmatpush.msra.mxu0 %v291
    %2746 = vmatpush.msra.mxu0 %v280
    %2747 = vmatpush.msra.mxu0 %v269
    %2748 = vmatmul.f32.gmra.mxu0 %v80
    %v2749 = vpop.f32.mrf.mxu0
    %v2750 = vadd.f32 %v2730, %v2749
    %2751 = vdwg.mxu0
    %2752 = vmatpush.msra.mxu0 %v610
    %2753 = vmatpush.msra.mxu0 %v599
    %2754 = vmatpush.msra.mxu0 %v588
    %2755 = vmatpush.msra.mxu0 %v577
    %2756 = vmatpush.msra.mxu0 %v566
    %2757 = vmatpush.msra.mxu0 %v555
    %2758 = vmatpush.msra.mxu0 %v544
    %2759 = vmatpush.msra.mxu0 %v533
    %2760 = vmatpush.msra.mxu0 %v522
    %2761 = vmatpush.msra.mxu0 %v511
    %2762 = vmatpush.msra.mxu0 %v500
    %2763 = vmatpush.msra.mxu0 %v489
    %2764 = vmatpush.msra.mxu0 %v478
    %2765 = vmatpush.msra.mxu0 %v467
    %2766 = vmatpush.msra.mxu0 %v456
    %2767 = vmatpush.msra.mxu0 %v445
    %2768 = vmatmul.f32.gmra.mxu0 %v81
    %v2769 = vpop.f32.mrf.mxu0
    %v2770 = vadd.f32 %v2750, %v2769
    %2771 = vdwg.mxu0
    %2772 = vmatpush.msra.mxu0 %v786
    %2773 = vmatpush.msra.mxu0 %v775
    %2774 = vmatpush.msra.mxu0 %v764
    %2775 = vmatpush.msra.mxu0 %v753
    %2776 = vmatpush.msra.mxu0 %v742
    %2777 = vmatpush.msra.mxu0 %v731
    %2778 = vmatpush.msra.mxu0 %v720
    %2779 = vmatpush.msra.mxu0 %v709
    %2780 = vmatpush.msra.mxu0 %v698
    %2781 = vmatpush.msra.mxu0 %v687
    %2782 = vmatpush.msra.mxu0 %v676
    %2783 = vmatpush.msra.mxu0 %v665
    %2784 = vmatpush.msra.mxu0 %v654
    %2785 = vmatpush.msra.mxu0 %v643
    %2786 = vmatpush.msra.mxu0 %v632
    %2787 = vmatpush.msra.mxu0 %v621
    %2788 = vmatmul.f32.gmra.mxu0 %v82
    %v2789 = vpop.f32.mrf.mxu0
    %v2790 = vadd.f32 %v2770, %v2789
    %2791 = vdwg.mxu0
    %2792 = vmatpush.msra.mxu0 %v962
    %2793 = vmatpush.msra.mxu0 %v951
    %2794 = vmatpush.msra.mxu0 %v940
    %2795 = vmatpush.msra.mxu0 %v929
    %2796 = vmatpush.msra.mxu0 %v918
    %2797 = vmatpush.msra.mxu0 %v907
    %2798 = vmatpush.msra.mxu0 %v896
    %2799 = vmatpush.msra.mxu0 %v885
    %2800 = vmatpush.msra.mxu0 %v874
    %2801 = vmatpush.msra.mxu0 %v863
    %2802 = vmatpush.msra.mxu0 %v852
    %2803 = vmatpush.msra.mxu0 %v841
    %2804 = vmatpush.msra.mxu0 %v830
    %2805 = vmatpush.msra.mxu0 %v819
    %2806 = vmatpush.msra.mxu0 %v808
    %2807 = vmatpush.msra.mxu0 %v797
    %2808 = vmatmul.f32.gmra.mxu0 %v83
    %v2809 = vpop.f32.mrf.mxu0
    %v2810 = vadd.f32 %v2790, %v2809
    %2811 = vdwg.mxu0
    %2812 = vmatpush.msra.mxu0 %v1138
    %2813 = vmatpush.msra.mxu0 %v1127
    %2814 = vmatpush.msra.mxu0 %v1116
    %2815 = vmatpush.msra.mxu0 %v1105
    %2816 = vmatpush.msra.mxu0 %v1094
    %2817 = vmatpush.msra.mxu0 %v1083
    %2818 = vmatpush.msra.mxu0 %v1072
    %2819 = vmatpush.msra.mxu0 %v1061
    %2820 = vmatpush.msra.mxu0 %v1050
    %2821 = vmatpush.msra.mxu0 %v1039
    %2822 = vmatpush.msra.mxu0 %v1028
    %2823 = vmatpush.msra.mxu0 %v1017
    %2824 = vmatpush.msra.mxu0 %v1006
    %2825 = vmatpush.msra.mxu0 %v995
    %2826 = vmatpush.msra.mxu0 %v984
    %2827 = vmatpush.msra.mxu0 %v973
    %2828 = vmatmul.f32.gmra.mxu0 %v84
    %v2829 = vpop.f32.mrf.mxu0
    %v2830 = vadd.f32 %v2810, %v2829
    %2831 = vdwg.mxu0
    %2832 = vmatpush.msra.mxu0 %v1314
    %2833 = vmatpush.msra.mxu0 %v1303
    %2834 = vmatpush.msra.mxu0 %v1292
    %2835 = vmatpush.msra.mxu0 %v1281
    %2836 = vmatpush.msra.mxu0 %v1270
    %2837 = vmatpush.msra.mxu0 %v1259
    %2838 = vmatpush.msra.mxu0 %v1248
    %2839 = vmatpush.msra.mxu0 %v1237
    %2840 = vmatpush.msra.mxu0 %v1226
    %2841 = vmatpush.msra.mxu0 %v1215
    %2842 = vmatpush.msra.mxu0 %v1204
    %2843 = vmatpush.msra.mxu0 %v1193
    %2844 = vmatpush.msra.mxu0 %v1182
    %2845 = vmatpush.msra.mxu0 %v1171
    %2846 = vmatpush.msra.mxu0 %v1160
    %2847 = vmatpush.msra.mxu0 %v1149
    %2848 = vmatmul.f32.gmra.mxu0 %v85
    %v2849 = vpop.f32.mrf.mxu0
    %v2850 = vadd.f32 %v2830, %v2849
    %2851 = vdwg.mxu0
    %2852 = vmatpush.msra.mxu0 %v1490
    %2853 = vmatpush.msra.mxu0 %v1479
    %2854 = vmatpush.msra.mxu0 %v1468
    %2855 = vmatpush.msra.mxu0 %v1457
    %2856 = vmatpush.msra.mxu0 %v1446
    %2857 = vmatpush.msra.mxu0 %v1435
    %2858 = vmatpush.msra.mxu0 %v1424
    %2859 = vmatpush.msra.mxu0 %v1413
    %2860 = vmatpush.msra.mxu0 %v1402
    %2861 = vmatpush.msra.mxu0 %v1391
    %2862 = vmatpush.msra.mxu0 %v1380
    %2863 = vmatpush.msra.mxu0 %v1369
    %2864 = vmatpush.msra.mxu0 %v1358
    %2865 = vmatpush.msra.mxu0 %v1347
    %2866 = vmatpush.msra.mxu0 %v1336
    %2867 = vmatpush.msra.mxu0 %v1325
    %2868 = vmatmul.f32.gmra.mxu0 %v86
    %v2869 = vpop.f32.mrf.mxu0
    %v2870 = vadd.f32 %v2850, %v2869
    %2871 = vdwg.mxu0
    %2872 = vmatpush.msra.mxu0 %v1666
    %2873 = vmatpush.msra.mxu0 %v1655
    %2874 = vmatpush.msra.mxu0 %v1644
    %2875 = vmatpush.msra.mxu0 %v1633
    %2876 = vmatpush.msra.mxu0 %v1622
    %2877 = vmatpush.msra.mxu0 %v1611
    %2878 = vmatpush.msra.mxu0 %v1600
    %2879 = vmatpush.msra.mxu0 %v1589
    %2880 = vmatpush.msra.mxu0 %v1578
    %2881 = vmatpush.msra.mxu0 %v1567
    %2882 = vmatpush.msra.mxu0 %v1556
    %2883 = vmatpush.msra.mxu0 %v1545
    %2884 = vmatpush.msra.mxu0 %v1534
    %2885 = vmatpush.msra.mxu0 %v1523
    %2886 = vmatpush.msra.mxu0 %v1512
    %2887 = vmatpush.msra.mxu0 %v1501
    %2888 = vmatmul.f32.gmra.mxu0 %v87
    %v2889 = vpop.f32.mrf.mxu0
    %v2890 = vadd.f32 %v2870, %v2889
    %2891 = vdwg.mxu0
    %2892 = vmatpush.msra.mxu0 %v1842
    %2893 = vmatpush.msra.mxu0 %v1831
    %2894 = vmatpush.msra.mxu0 %v1820
    %2895 = vmatpush.msra.mxu0 %v1809
    %2896 = vmatpush.msra.mxu0 %v1798
    %2897 = vmatpush.msra.mxu0 %v1787
    %2898 = vmatpush.msra.mxu0 %v1776
    %2899 = vmatpush.msra.mxu0 %v1765
    %2900 = vmatpush.msra.mxu0 %v1754
    %2901 = vmatpush.msra.mxu0 %v1743
    %2902 = vmatpush.msra.mxu0 %v1732
    %2903 = vmatpush.msra.mxu0 %v1721
    %2904 = vmatpush.msra.mxu0 %v1710
    %2905 = vmatpush.msra.mxu0 %v1699
    %2906 = vmatpush.msra.mxu0 %v1688
    %2907 = vmatpush.msra.mxu0 %v1677
    %2908 = vmatmul.f32.gmra.mxu0 %v88
    %v2909 = vpop.f32.mrf.mxu0
    %v2910 = vadd.f32 %v2890, %v2909
    %2911 = vdwg.mxu0
    %2912 = vmatpush.msra.mxu0 %v2018
    %2913 = vmatpush.msra.mxu0 %v2007
    %2914 = vmatpush.msra.mxu0 %v1996
    %2915 = vmatpush.msra.mxu0 %v1985
    %2916 = vmatpush.msra.mxu0 %v1974
    %2917 = vmatpush.msra.mxu0 %v1963
    %2918 = vmatpush.msra.mxu0 %v1952
    %2919 = vmatpush.msra.mxu0 %v1941
    %2920 = vmatpush.msra.mxu0 %v1930
    %2921 = vmatpush.msra.mxu0 %v1919
    %2922 = vmatpush.msra.mxu0 %v1908
    %2923 = vmatpush.msra.mxu0 %v1897
    %2924 = vmatpush.msra.mxu0 %v1886
    %2925 = vmatpush.msra.mxu0 %v1875
    %2926 = vmatpush.msra.mxu0 %v1864
    %2927 = vmatpush.msra.mxu0 %v1853
    %2928 = vmatmul.f32.gmra.mxu0 %v89
    %v2929 = vpop.f32.mrf.mxu0
    %v2930 = vadd.f32 %v2910, %v2929
    %2931 = vdwg.mxu0
    %2932 = vmatpush.msra.mxu0 %v259
    %2933 = vmatpush.msra.mxu0 %v248
    %2934 = vmatpush.msra.mxu0 %v237
    %2935 = vmatpush.msra.mxu0 %v226
    %2936 = vmatpush.msra.mxu0 %v215
    %2937 = vmatpush.msra.mxu0 %v204
    %2938 = vmatpush.msra.mxu0 %v193
    %2939 = vmatpush.msra.mxu0 %v182
    %2940 = vmatpush.msra.mxu0 %v171
    %2941 = vmatpush.msra.mxu0 %v160
    %2942 = vmatpush.msra.mxu0 %v149
    %2943 = vmatpush.msra.mxu0 %v138
    %2944 = vmatpush.msra.mxu0 %v127
    %2945 = vmatpush.msra.mxu0 %v116
    %2946 = vmatpush.msra.mxu0 %v105
    %2947 = vmatpush.msra.mxu0 %v94
    %2948 = vmatmul.f32.gmra.mxu0 %v79
    %v2949 = vpop.f32.mrf.mxu0
    %v2950 = vadd.f32 %v2034, %v2949
    %2951 = vdwg.mxu0
    %2952 = vmatpush.msra.mxu0 %v435
    %2953 = vmatpush.msra.mxu0 %v424
    %2954 = vmatpush.msra.mxu0 %v413
    %2955 = vmatpush.msra.mxu0 %v402
    %2956 = vmatpush.msra.mxu0 %v391
    %2957 = vmatpush.msra.mxu0 %v380
    %2958 = vmatpush.msra.mxu0 %v369
    %2959 = vmatpush.msra.mxu0 %v358
    %2960 = vmatpush.msra.mxu0 %v347
    %2961 = vmatpush.msra.mxu0 %v336
    %2962 = vmatpush.msra.mxu0 %v325
    %2963 = vmatpush.msra.mxu0 %v314
    %2964 = vmatpush.msra.mxu0 %v303
    %2965 = vmatpush.msra.mxu0 %v292
    %2966 = vmatpush.msra.mxu0 %v281
    %2967 = vmatpush.msra.mxu0 %v270
    %2968 = vmatmul.f32.gmra.mxu0 %v80
    %v2969 = vpop.f32.mrf.mxu0
    %v2970 = vadd.f32 %v2950, %v2969
    %2971 = vdwg.mxu0
    %2972 = vmatpush.msra.mxu0 %v611
    %2973 = vmatpush.msra.mxu0 %v600
    %2974 = vmatpush.msra.mxu0 %v589
    %2975 = vmatpush.msra.mxu0 %v578
    %2976 = vmatpush.msra.mxu0 %v567
    %2977 = vmatpush.msra.mxu0 %v556
    %2978 = vmatpush.msra.mxu0 %v545
    %2979 = vmatpush.msra.mxu0 %v534
    %2980 = vmatpush.msra.mxu0 %v523
    %2981 = vmatpush.msra.mxu0 %v512
    %2982 = vmatpush.msra.mxu0 %v501
    %2983 = vmatpush.msra.mxu0 %v490
    %2984 = vmatpush.msra.mxu0 %v479
    %2985 = vmatpush.msra.mxu0 %v468
    %2986 = vmatpush.msra.mxu0 %v457
    %2987 = vmatpush.msra.mxu0 %v446
    %2988 = vmatmul.f32.gmra.mxu0 %v81
    %v2989 = vpop.f32.mrf.mxu0
    %v2990 = vadd.f32 %v2970, %v2989
    %2991 = vdwg.mxu0
    %2992 = vmatpush.msra.mxu0 %v787
    %2993 = vmatpush.msra.mxu0 %v776
    %2994 = vmatpush.msra.mxu0 %v765
    %2995 = vmatpush.msra.mxu0 %v754
    %2996 = vmatpush.msra.mxu0 %v743
    %2997 = vmatpush.msra.mxu0 %v732
    %2998 = vmatpush.msra.mxu0 %v721
    %2999 = vmatpush.msra.mxu0 %v710
    %3000 = vmatpush.msra.mxu0 %v699
    %3001 = vmatpush.msra.mxu0 %v688
    %3002 = vmatpush.msra.mxu0 %v677
    %3003 = vmatpush.msra.mxu0 %v666
    %3004 = vmatpush.msra.mxu0 %v655
    %3005 = vmatpush.msra.mxu0 %v644
    %3006 = vmatpush.msra.mxu0 %v633
    %3007 = vmatpush.msra.mxu0 %v622
    %3008 = vmatmul.f32.gmra.mxu0 %v82
    %v3009 = vpop.f32.mrf.mxu0
    %v3010 = vadd.f32 %v2990, %v3009
    %3011 = vdwg.mxu0
    %3012 = vmatpush.msra.mxu0 %v963
    %3013 = vmatpush.msra.mxu0 %v952
    %3014 = vmatpush.msra.mxu0 %v941
    %3015 = vmatpush.msra.mxu0 %v930
    %3016 = vmatpush.msra.mxu0 %v919
    %3017 = vmatpush.msra.mxu0 %v908
    %3018 = vmatpush.msra.mxu0 %v897
    %3019 = vmatpush.msra.mxu0 %v886
    %3020 = vmatpush.msra.mxu0 %v875
    %3021 = vmatpush.msra.mxu0 %v864
    %3022 = vmatpush.msra.mxu0 %v853
    %3023 = vmatpush.msra.mxu0 %v842
    %3024 = vmatpush.msra.mxu0 %v831
    %3025 = vmatpush.msra.mxu0 %v820
    %3026 = vmatpush.msra.mxu0 %v809
    %3027 = vmatpush.msra.mxu0 %v798
    %3028 = vmatmul.f32.gmra.mxu0 %v83
    %v3029 = vpop.f32.mrf.mxu0
    %v3030 = vadd.f32 %v3010, %v3029
    %3031 = vdwg.mxu0
    %3032 = vmatpush.msra.mxu0 %v1139
    %3033 = vmatpush.msra.mxu0 %v1128
    %3034 = vmatpush.msra.mxu0 %v1117
    %3035 = vmatpush.msra.mxu0 %v1106
    %3036 = vmatpush.msra.mxu0 %v1095
    %3037 = vmatpush.msra.mxu0 %v1084
    %3038 = vmatpush.msra.mxu0 %v1073
    %3039 = vmatpush.msra.mxu0 %v1062
    %3040 = vmatpush.msra.mxu0 %v1051
    %3041 = vmatpush.msra.mxu0 %v1040
    %3042 = vmatpush.msra.mxu0 %v1029
    %3043 = vmatpush.msra.mxu0 %v1018
    %3044 = vmatpush.msra.mxu0 %v1007
    %3045 = vmatpush.msra.mxu0 %v996
    %3046 = vmatpush.msra.mxu0 %v985
    %3047 = vmatpush.msra.mxu0 %v974
    %3048 = vmatmul.f32.gmra.mxu0 %v84
    %v3049 = vpop.f32.mrf.mxu0
    %v3050 = vadd.f32 %v3030, %v3049
    %3051 = vdwg.mxu0
    %3052 = vmatpush.msra.mxu0 %v1315
    %3053 = vmatpush.msra.mxu0 %v1304
    %3054 = vmatpush.msra.mxu0 %v1293
    %3055 = vmatpush.msra.mxu0 %v1282
    %3056 = vmatpush.msra.mxu0 %v1271
    %3057 = vmatpush.msra.mxu0 %v1260
    %3058 = vmatpush.msra.mxu0 %v1249
    %3059 = vmatpush.msra.mxu0 %v1238
    %3060 = vmatpush.msra.mxu0 %v1227
    %3061 = vmatpush.msra.mxu0 %v1216
    %3062 = vmatpush.msra.mxu0 %v1205
    %3063 = vmatpush.msra.mxu0 %v1194
    %3064 = vmatpush.msra.mxu0 %v1183
    %3065 = vmatpush.msra.mxu0 %v1172
    %3066 = vmatpush.msra.mxu0 %v1161
    %3067 = vmatpush.msra.mxu0 %v1150
    %3068 = vmatmul.f32.gmra.mxu0 %v85
    %v3069 = vpop.f32.mrf.mxu0
    %v3070 = vadd.f32 %v3050, %v3069
    %3071 = vdwg.mxu0
    %3072 = vmatpush.msra.mxu0 %v1491
    %3073 = vmatpush.msra.mxu0 %v1480
    %3074 = vmatpush.msra.mxu0 %v1469
    %3075 = vmatpush.msra.mxu0 %v1458
    %3076 = vmatpush.msra.mxu0 %v1447
    %3077 = vmatpush.msra.mxu0 %v1436
    %3078 = vmatpush.msra.mxu0 %v1425
    %3079 = vmatpush.msra.mxu0 %v1414
    %3080 = vmatpush.msra.mxu0 %v1403
    %3081 = vmatpush.msra.mxu0 %v1392
    %3082 = vmatpush.msra.mxu0 %v1381
    %3083 = vmatpush.msra.mxu0 %v1370
    %3084 = vmatpush.msra.mxu0 %v1359
    %3085 = vmatpush.msra.mxu0 %v1348
    %3086 = vmatpush.msra.mxu0 %v1337
    %3087 = vmatpush.msra.mxu0 %v1326
    %3088 = vmatmul.f32.gmra.mxu0 %v86
    %v3089 = vpop.f32.mrf.mxu0
    %v3090 = vadd.f32 %v3070, %v3089
    %3091 = vdwg.mxu0
    %3092 = vmatpush.msra.mxu0 %v1667
    %3093 = vmatpush.msra.mxu0 %v1656
    %3094 = vmatpush.msra.mxu0 %v1645
    %3095 = vmatpush.msra.mxu0 %v1634
    %3096 = vmatpush.msra.mxu0 %v1623
    %3097 = vmatpush.msra.mxu0 %v1612
    %3098 = vmatpush.msra.mxu0 %v1601
    %3099 = vmatpush.msra.mxu0 %v1590
    %3100 = vmatpush.msra.mxu0 %v1579
    %3101 = vmatpush.msra.mxu0 %v1568
    %3102 = vmatpush.msra.mxu0 %v1557
    %3103 = vmatpush.msra.mxu0 %v1546
    %3104 = vmatpush.msra.mxu0 %v1535
    %3105 = vmatpush.msra.mxu0 %v1524
    %3106 = vmatpush.msra.mxu0 %v1513
    %3107 = vmatpush.msra.mxu0 %v1502
    %3108 = vmatmul.f32.gmra.mxu0 %v87
    %v3109 = vpop.f32.mrf.mxu0
    %v3110 = vadd.f32 %v3090, %v3109
    %3111 = vdwg.mxu0
    %3112 = vmatpush.msra.mxu0 %v1843
    %3113 = vmatpush.msra.mxu0 %v1832
    %3114 = vmatpush.msra.mxu0 %v1821
    %3115 = vmatpush.msra.mxu0 %v1810
    %3116 = vmatpush.msra.mxu0 %v1799
    %3117 = vmatpush.msra.mxu0 %v1788
    %3118 = vmatpush.msra.mxu0 %v1777
    %3119 = vmatpush.msra.mxu0 %v1766
    %3120 = vmatpush.msra.mxu0 %v1755
    %3121 = vmatpush.msra.mxu0 %v1744
    %3122 = vmatpush.msra.mxu0 %v1733
    %3123 = vmatpush.msra.mxu0 %v1722
    %3124 = vmatpush.msra.mxu0 %v1711
    %3125 = vmatpush.msra.mxu0 %v1700
    %3126 = vmatpush.msra.mxu0 %v1689
    %3127 = vmatpush.msra.mxu0 %v1678
    %3128 = vmatmul.f32.gmra.mxu0 %v88
    %v3129 = vpop.f32.mrf.mxu0
    %v3130 = vadd.f32 %v3110, %v3129
    %3131 = vdwg.mxu0
    %3132 = vmatpush.msra.mxu0 %v2019
    %3133 = vmatpush.msra.mxu0 %v2008
    %3134 = vmatpush.msra.mxu0 %v1997
    %3135 = vmatpush.msra.mxu0 %v1986
    %3136 = vmatpush.msra.mxu0 %v1975
    %3137 = vmatpush.msra.mxu0 %v1964
    %3138 = vmatpush.msra.mxu0 %v1953
    %3139 = vmatpush.msra.mxu0 %v1942
    %3140 = vmatpush.msra.mxu0 %v1931
    %3141 = vmatpush.msra.mxu0 %v1920
    %3142 = vmatpush.msra.mxu0 %v1909
    %3143 = vmatpush.msra.mxu0 %v1898
    %3144 = vmatpush.msra.mxu0 %v1887
    %3145 = vmatpush.msra.mxu0 %v1876
    %3146 = vmatpush.msra.mxu0 %v1865
    %3147 = vmatpush.msra.mxu0 %v1854
    %3148 = vmatmul.f32.gmra.mxu0 %v89
    %v3149 = vpop.f32.mrf.mxu0
    %v3150 = vadd.f32 %v3130, %v3149
    %3151 = vdwg.mxu0
    %3152 = vmatpush.msra.mxu0 %v260
    %3153 = vmatpush.msra.mxu0 %v249
    %3154 = vmatpush.msra.mxu0 %v238
    %3155 = vmatpush.msra.mxu0 %v227
    %3156 = vmatpush.msra.mxu0 %v216
    %3157 = vmatpush.msra.mxu0 %v205
    %3158 = vmatpush.msra.mxu0 %v194
    %3159 = vmatpush.msra.mxu0 %v183
    %3160 = vmatpush.msra.mxu0 %v172
    %3161 = vmatpush.msra.mxu0 %v161
    %3162 = vmatpush.msra.mxu0 %v150
    %3163 = vmatpush.msra.mxu0 %v139
    %3164 = vmatpush.msra.mxu0 %v128
    %3165 = vmatpush.msra.mxu0 %v117
    %3166 = vmatpush.msra.mxu0 %v106
    %3167 = vmatpush.msra.mxu0 %v95
    %3168 = vmatmul.f32.gmra.mxu0 %v79
    %v3169 = vpop.f32.mrf.mxu0
    %v3170 = vadd.f32 %v2035, %v3169
    %3171 = vdwg.mxu0
    %3172 = vmatpush.msra.mxu0 %v436
    %3173 = vmatpush.msra.mxu0 %v425
    %3174 = vmatpush.msra.mxu0 %v414
    %3175 = vmatpush.msra.mxu0 %v403
    %3176 = vmatpush.msra.mxu0 %v392
    %3177 = vmatpush.msra.mxu0 %v381
    %3178 = vmatpush.msra.mxu0 %v370
    %3179 = vmatpush.msra.mxu0 %v359
    %3180 = vmatpush.msra.mxu0 %v348
    %3181 = vmatpush.msra.mxu0 %v337
    %3182 = vmatpush.msra.mxu0 %v326
    %3183 = vmatpush.msra.mxu0 %v315
    %3184 = vmatpush.msra.mxu0 %v304
    %3185 = vmatpush.msra.mxu0 %v293
    %3186 = vmatpush.msra.mxu0 %v282
    %3187 = vmatpush.msra.mxu0 %v271
    %3188 = vmatmul.f32.gmra.mxu0 %v80
    %v3189 = vpop.f32.mrf.mxu0
    %v3190 = vadd.f32 %v3170, %v3189
    %3191 = vdwg.mxu0
    %3192 = vmatpush.msra.mxu0 %v612
    %3193 = vmatpush.msra.mxu0 %v601
    %3194 = vmatpush.msra.mxu0 %v590
    %3195 = vmatpush.msra.mxu0 %v579
    %3196 = vmatpush.msra.mxu0 %v568
    %3197 = vmatpush.msra.mxu0 %v557
    %3198 = vmatpush.msra.mxu0 %v546
    %3199 = vmatpush.msra.mxu0 %v535
    %3200 = vmatpush.msra.mxu0 %v524
    %3201 = vmatpush.msra.mxu0 %v513
    %3202 = vmatpush.msra.mxu0 %v502
    %3203 = vmatpush.msra.mxu0 %v491
    %3204 = vmatpush.msra.mxu0 %v480
    %3205 = vmatpush.msra.mxu0 %v469
    %3206 = vmatpush.msra.mxu0 %v458
    %3207 = vmatpush.msra.mxu0 %v447
    %3208 = vmatmul.f32.gmra.mxu0 %v81
    %v3209 = vpop.f32.mrf.mxu0
    %v3210 = vadd.f32 %v3190, %v3209
    %3211 = vdwg.mxu0
    %3212 = vmatpush.msra.mxu0 %v788
    %3213 = vmatpush.msra.mxu0 %v777
    %3214 = vmatpush.msra.mxu0 %v766
    %3215 = vmatpush.msra.mxu0 %v755
    %3216 = vmatpush.msra.mxu0 %v744
    %3217 = vmatpush.msra.mxu0 %v733
    %3218 = vmatpush.msra.mxu0 %v722
    %3219 = vmatpush.msra.mxu0 %v711
    %3220 = vmatpush.msra.mxu0 %v700
    %3221 = vmatpush.msra.mxu0 %v689
    %3222 = vmatpush.msra.mxu0 %v678
    %3223 = vmatpush.msra.mxu0 %v667
    %3224 = vmatpush.msra.mxu0 %v656
    %3225 = vmatpush.msra.mxu0 %v645
    %3226 = vmatpush.msra.mxu0 %v634
    %3227 = vmatpush.msra.mxu0 %v623
    %3228 = vmatmul.f32.gmra.mxu0 %v82
    %v3229 = vpop.f32.mrf.mxu0
    %v3230 = vadd.f32 %v3210, %v3229
    %3231 = vdwg.mxu0
    %3232 = vmatpush.msra.mxu0 %v964
    %3233 = vmatpush.msra.mxu0 %v953
    %3234 = vmatpush.msra.mxu0 %v942
    %3235 = vmatpush.msra.mxu0 %v931
    %3236 = vmatpush.msra.mxu0 %v920
    %3237 = vmatpush.msra.mxu0 %v909
    %3238 = vmatpush.msra.mxu0 %v898
    %3239 = vmatpush.msra.mxu0 %v887
    %3240 = vmatpush.msra.mxu0 %v876
    %3241 = vmatpush.msra.mxu0 %v865
    %3242 = vmatpush.msra.mxu0 %v854
    %3243 = vmatpush.msra.mxu0 %v843
    %3244 = vmatpush.msra.mxu0 %v832
    %3245 = vmatpush.msra.mxu0 %v821
    %3246 = vmatpush.msra.mxu0 %v810
    %3247 = vmatpush.msra.mxu0 %v799
    %3248 = vmatmul.f32.gmra.mxu0 %v83
    %v3249 = vpop.f32.mrf.mxu0
    %v3250 = vadd.f32 %v3230, %v3249
    %3251 = vdwg.mxu0
    %3252 = vmatpush.msra.mxu0 %v1140
    %3253 = vmatpush.msra.mxu0 %v1129
    %3254 = vmatpush.msra.mxu0 %v1118
    %3255 = vmatpush.msra.mxu0 %v1107
    %3256 = vmatpush.msra.mxu0 %v1096
    %3257 = vmatpush.msra.mxu0 %v1085
    %3258 = vmatpush.msra.mxu0 %v1074
    %3259 = vmatpush.msra.mxu0 %v1063
    %3260 = vmatpush.msra.mxu0 %v1052
    %3261 = vmatpush.msra.mxu0 %v1041
    %3262 = vmatpush.msra.mxu0 %v1030
    %3263 = vmatpush.msra.mxu0 %v1019
    %3264 = vmatpush.msra.mxu0 %v1008
    %3265 = vmatpush.msra.mxu0 %v997
    %3266 = vmatpush.msra.mxu0 %v986
    %3267 = vmatpush.msra.mxu0 %v975
    %3268 = vmatmul.f32.gmra.mxu0 %v84
    %v3269 = vpop.f32.mrf.mxu0
    %v3270 = vadd.f32 %v3250, %v3269
    %3271 = vdwg.mxu0
    %3272 = vmatpush.msra.mxu0 %v1316
    %3273 = vmatpush.msra.mxu0 %v1305
    %3274 = vmatpush.msra.mxu0 %v1294
    %3275 = vmatpush.msra.mxu0 %v1283
    %3276 = vmatpush.msra.mxu0 %v1272
    %3277 = vmatpush.msra.mxu0 %v1261
    %3278 = vmatpush.msra.mxu0 %v1250
    %3279 = vmatpush.msra.mxu0 %v1239
    %3280 = vmatpush.msra.mxu0 %v1228
    %3281 = vmatpush.msra.mxu0 %v1217
    %3282 = vmatpush.msra.mxu0 %v1206
    %3283 = vmatpush.msra.mxu0 %v1195
    %3284 = vmatpush.msra.mxu0 %v1184
    %3285 = vmatpush.msra.mxu0 %v1173
    %3286 = vmatpush.msra.mxu0 %v1162
    %3287 = vmatpush.msra.mxu0 %v1151
    %3288 = vmatmul.f32.gmra.mxu0 %v85
    %v3289 = vpop.f32.mrf.mxu0
    %v3290 = vadd.f32 %v3270, %v3289
    %3291 = vdwg.mxu0
    %3292 = vmatpush.msra.mxu0 %v1492
    %3293 = vmatpush.msra.mxu0 %v1481
    %3294 = vmatpush.msra.mxu0 %v1470
    %3295 = vmatpush.msra.mxu0 %v1459
    %3296 = vmatpush.msra.mxu0 %v1448
    %3297 = vmatpush.msra.mxu0 %v1437
    %3298 = vmatpush.msra.mxu0 %v1426
    %3299 = vmatpush.msra.mxu0 %v1415
    %3300 = vmatpush.msra.mxu0 %v1404
    %3301 = vmatpush.msra.mxu0 %v1393
    %3302 = vmatpush.msra.mxu0 %v1382
    %3303 = vmatpush.msra.mxu0 %v1371
    %3304 = vmatpush.msra.mxu0 %v1360
    %3305 = vmatpush.msra.mxu0 %v1349
    %3306 = vmatpush.msra.mxu0 %v1338
    %3307 = vmatpush.msra.mxu0 %v1327
    %3308 = vmatmul.f32.gmra.mxu0 %v86
    %v3309 = vpop.f32.mrf.mxu0
    %v3310 = vadd.f32 %v3290, %v3309
    %3311 = vdwg.mxu0
    %3312 = vmatpush.msra.mxu0 %v1668
    %3313 = vmatpush.msra.mxu0 %v1657
    %3314 = vmatpush.msra.mxu0 %v1646
    %3315 = vmatpush.msra.mxu0 %v1635
    %3316 = vmatpush.msra.mxu0 %v1624
    %3317 = vmatpush.msra.mxu0 %v1613
    %3318 = vmatpush.msra.mxu0 %v1602
    %3319 = vmatpush.msra.mxu0 %v1591
    %3320 = vmatpush.msra.mxu0 %v1580
    %3321 = vmatpush.msra.mxu0 %v1569
    %3322 = vmatpush.msra.mxu0 %v1558
    %3323 = vmatpush.msra.mxu0 %v1547
    %3324 = vmatpush.msra.mxu0 %v1536
    %3325 = vmatpush.msra.mxu0 %v1525
    %3326 = vmatpush.msra.mxu0 %v1514
    %3327 = vmatpush.msra.mxu0 %v1503
    %3328 = vmatmul.f32.gmra.mxu0 %v87
    %v3329 = vpop.f32.mrf.mxu0
    %v3330 = vadd.f32 %v3310, %v3329
    %3331 = vdwg.mxu0
    %3332 = vmatpush.msra.mxu0 %v1844
    %3333 = vmatpush.msra.mxu0 %v1833
    %3334 = vmatpush.msra.mxu0 %v1822
    %3335 = vmatpush.msra.mxu0 %v1811
    %3336 = vmatpush.msra.mxu0 %v1800
    %3337 = vmatpush.msra.mxu0 %v1789
    %3338 = vmatpush.msra.mxu0 %v1778
    %3339 = vmatpush.msra.mxu0 %v1767
    %3340 = vmatpush.msra.mxu0 %v1756
    %3341 = vmatpush.msra.mxu0 %v1745
    %3342 = vmatpush.msra.mxu0 %v1734
    %3343 = vmatpush.msra.mxu0 %v1723
    %3344 = vmatpush.msra.mxu0 %v1712
    %3345 = vmatpush.msra.mxu0 %v1701
    %3346 = vmatpush.msra.mxu0 %v1690
    %3347 = vmatpush.msra.mxu0 %v1679
    %3348 = vmatmul.f32.gmra.mxu0 %v88
    %v3349 = vpop.f32.mrf.mxu0
    %v3350 = vadd.f32 %v3330, %v3349
    %3351 = vdwg.mxu0
    %3352 = vmatpush.msra.mxu0 %v2020
    %3353 = vmatpush.msra.mxu0 %v2009
    %3354 = vmatpush.msra.mxu0 %v1998
    %3355 = vmatpush.msra.mxu0 %v1987
    %3356 = vmatpush.msra.mxu0 %v1976
    %3357 = vmatpush.msra.mxu0 %v1965
    %3358 = vmatpush.msra.mxu0 %v1954
    %3359 = vmatpush.msra.mxu0 %v1943
    %3360 = vmatpush.msra.mxu0 %v1932
    %3361 = vmatpush.msra.mxu0 %v1921
    %3362 = vmatpush.msra.mxu0 %v1910
    %3363 = vmatpush.msra.mxu0 %v1899
    %3364 = vmatpush.msra.mxu0 %v1888
    %3365 = vmatpush.msra.mxu0 %v1877
    %3366 = vmatpush.msra.mxu0 %v1866
    %3367 = vmatpush.msra.mxu0 %v1855
    %3368 = vmatmul.f32.gmra.mxu0 %v89
    %v3369 = vpop.f32.mrf.mxu0
    %v3370 = vadd.f32 %v3350, %v3369
    %3371 = vdwg.mxu0
    %3372 = vmatpush.msra.mxu0 %v261
    %3373 = vmatpush.msra.mxu0 %v250
    %3374 = vmatpush.msra.mxu0 %v239
    %3375 = vmatpush.msra.mxu0 %v228
    %3376 = vmatpush.msra.mxu0 %v217
    %3377 = vmatpush.msra.mxu0 %v206
    %3378 = vmatpush.msra.mxu0 %v195
    %3379 = vmatpush.msra.mxu0 %v184
    %3380 = vmatpush.msra.mxu0 %v173
    %3381 = vmatpush.msra.mxu0 %v162
    %3382 = vmatpush.msra.mxu0 %v151
    %3383 = vmatpush.msra.mxu0 %v140
    %3384 = vmatpush.msra.mxu0 %v129
    %3385 = vmatpush.msra.mxu0 %v118
    %3386 = vmatpush.msra.mxu0 %v107
    %3387 = vmatpush.msra.mxu0 %v96
    %3388 = vmatmul.f32.gmra.mxu0 %v79
    %v3389 = vpop.f32.mrf.mxu0
    %v3390 = vadd.f32 %v2036, %v3389
    %3391 = vdwg.mxu0
    %3392 = vmatpush.msra.mxu0 %v437
    %3393 = vmatpush.msra.mxu0 %v426
    %3394 = vmatpush.msra.mxu0 %v415
    %3395 = vmatpush.msra.mxu0 %v404
    %3396 = vmatpush.msra.mxu0 %v393
    %3397 = vmatpush.msra.mxu0 %v382
    %3398 = vmatpush.msra.mxu0 %v371
    %3399 = vmatpush.msra.mxu0 %v360
    %3400 = vmatpush.msra.mxu0 %v349
    %3401 = vmatpush.msra.mxu0 %v338
    %3402 = vmatpush.msra.mxu0 %v327
    %3403 = vmatpush.msra.mxu0 %v316
    %3404 = vmatpush.msra.mxu0 %v305
    %3405 = vmatpush.msra.mxu0 %v294
    %3406 = vmatpush.msra.mxu0 %v283
    %3407 = vmatpush.msra.mxu0 %v272
    %3408 = vmatmul.f32.gmra.mxu0 %v80
    %v3409 = vpop.f32.mrf.mxu0
    %v3410 = vadd.f32 %v3390, %v3409
    %3411 = vdwg.mxu0
    %3412 = vmatpush.msra.mxu0 %v613
    %3413 = vmatpush.msra.mxu0 %v602
    %3414 = vmatpush.msra.mxu0 %v591
    %3415 = vmatpush.msra.mxu0 %v580
    %3416 = vmatpush.msra.mxu0 %v569
    %3417 = vmatpush.msra.mxu0 %v558
    %3418 = vmatpush.msra.mxu0 %v547
    %3419 = vmatpush.msra.mxu0 %v536
    %3420 = vmatpush.msra.mxu0 %v525
    %3421 = vmatpush.msra.mxu0 %v514
    %3422 = vmatpush.msra.mxu0 %v503
    %3423 = vmatpush.msra.mxu0 %v492
    %3424 = vmatpush.msra.mxu0 %v481
    %3425 = vmatpush.msra.mxu0 %v470
    %3426 = vmatpush.msra.mxu0 %v459
    %3427 = vmatpush.msra.mxu0 %v448
    %3428 = vmatmul.f32.gmra.mxu0 %v81
    %v3429 = vpop.f32.mrf.mxu0
    %v3430 = vadd.f32 %v3410, %v3429
    %3431 = vdwg.mxu0
    %3432 = vmatpush.msra.mxu0 %v789
    %3433 = vmatpush.msra.mxu0 %v778
    %3434 = vmatpush.msra.mxu0 %v767
    %3435 = vmatpush.msra.mxu0 %v756
    %3436 = vmatpush.msra.mxu0 %v745
    %3437 = vmatpush.msra.mxu0 %v734
    %3438 = vmatpush.msra.mxu0 %v723
    %3439 = vmatpush.msra.mxu0 %v712
    %3440 = vmatpush.msra.mxu0 %v701
    %3441 = vmatpush.msra.mxu0 %v690
    %3442 = vmatpush.msra.mxu0 %v679
    %3443 = vmatpush.msra.mxu0 %v668
    %3444 = vmatpush.msra.mxu0 %v657
    %3445 = vmatpush.msra.mxu0 %v646
    %3446 = vmatpush.msra.mxu0 %v635
    %3447 = vmatpush.msra.mxu0 %v624
    %3448 = vmatmul.f32.gmra.mxu0 %v82
    %v3449 = vpop.f32.mrf.mxu0
    %v3450 = vadd.f32 %v3430, %v3449
    %3451 = vdwg.mxu0
    %3452 = vmatpush.msra.mxu0 %v965
    %3453 = vmatpush.msra.mxu0 %v954
    %3454 = vmatpush.msra.mxu0 %v943
    %3455 = vmatpush.msra.mxu0 %v932
    %3456 = vmatpush.msra.mxu0 %v921
    %3457 = vmatpush.msra.mxu0 %v910
    %3458 = vmatpush.msra.mxu0 %v899
    %3459 = vmatpush.msra.mxu0 %v888
    %3460 = vmatpush.msra.mxu0 %v877
    %3461 = vmatpush.msra.mxu0 %v866
    %3462 = vmatpush.msra.mxu0 %v855
    %3463 = vmatpush.msra.mxu0 %v844
    %3464 = vmatpush.msra.mxu0 %v833
    %3465 = vmatpush.msra.mxu0 %v822
    %3466 = vmatpush.msra.mxu0 %v811
    %3467 = vmatpush.msra.mxu0 %v800
    %3468 = vmatmul.f32.gmra.mxu0 %v83
    %v3469 = vpop.f32.mrf.mxu0
    %v3470 = vadd.f32 %v3450, %v3469
    %3471 = vdwg.mxu0
    %3472 = vmatpush.msra.mxu0 %v1141
    %3473 = vmatpush.msra.mxu0 %v1130
    %3474 = vmatpush.msra.mxu0 %v1119
    %3475 = vmatpush.msra.mxu0 %v1108
    %3476 = vmatpush.msra.mxu0 %v1097
    %3477 = vmatpush.msra.mxu0 %v1086
    %3478 = vmatpush.msra.mxu0 %v1075
    %3479 = vmatpush.msra.mxu0 %v1064
    %3480 = vmatpush.msra.mxu0 %v1053
    %3481 = vmatpush.msra.mxu0 %v1042
    %3482 = vmatpush.msra.mxu0 %v1031
    %3483 = vmatpush.msra.mxu0 %v1020
    %3484 = vmatpush.msra.mxu0 %v1009
    %3485 = vmatpush.msra.mxu0 %v998
    %3486 = vmatpush.msra.mxu0 %v987
    %3487 = vmatpush.msra.mxu0 %v976
    %3488 = vmatmul.f32.gmra.mxu0 %v84
    %v3489 = vpop.f32.mrf.mxu0
    %v3490 = vadd.f32 %v3470, %v3489
    %3491 = vdwg.mxu0
    %3492 = vmatpush.msra.mxu0 %v1317
    %3493 = vmatpush.msra.mxu0 %v1306
    %3494 = vmatpush.msra.mxu0 %v1295
    %3495 = vmatpush.msra.mxu0 %v1284
    %3496 = vmatpush.msra.mxu0 %v1273
    %3497 = vmatpush.msra.mxu0 %v1262
    %3498 = vmatpush.msra.mxu0 %v1251
    %3499 = vmatpush.msra.mxu0 %v1240
    %3500 = vmatpush.msra.mxu0 %v1229
    %3501 = vmatpush.msra.mxu0 %v1218
    %3502 = vmatpush.msra.mxu0 %v1207
    %3503 = vmatpush.msra.mxu0 %v1196
    %3504 = vmatpush.msra.mxu0 %v1185
    %3505 = vmatpush.msra.mxu0 %v1174
    %3506 = vmatpush.msra.mxu0 %v1163
    %3507 = vmatpush.msra.mxu0 %v1152
    %3508 = vmatmul.f32.gmra.mxu0 %v85
    %v3509 = vpop.f32.mrf.mxu0
    %v3510 = vadd.f32 %v3490, %v3509
    %3511 = vdwg.mxu0
    %3512 = vmatpush.msra.mxu0 %v1493
    %3513 = vmatpush.msra.mxu0 %v1482
    %3514 = vmatpush.msra.mxu0 %v1471
    %3515 = vmatpush.msra.mxu0 %v1460
    %3516 = vmatpush.msra.mxu0 %v1449
    %3517 = vmatpush.msra.mxu0 %v1438
    %3518 = vmatpush.msra.mxu0 %v1427
    %3519 = vmatpush.msra.mxu0 %v1416
    %3520 = vmatpush.msra.mxu0 %v1405
    %3521 = vmatpush.msra.mxu0 %v1394
    %3522 = vmatpush.msra.mxu0 %v1383
    %3523 = vmatpush.msra.mxu0 %v1372
    %3524 = vmatpush.msra.mxu0 %v1361
    %3525 = vmatpush.msra.mxu0 %v1350
    %3526 = vmatpush.msra.mxu0 %v1339
    %3527 = vmatpush.msra.mxu0 %v1328
    %3528 = vmatmul.f32.gmra.mxu0 %v86
    %v3529 = vpop.f32.mrf.mxu0
    %v3530 = vadd.f32 %v3510, %v3529
    %3531 = vdwg.mxu0
    %3532 = vmatpush.msra.mxu0 %v1669
    %3533 = vmatpush.msra.mxu0 %v1658
    %3534 = vmatpush.msra.mxu0 %v1647
    %3535 = vmatpush.msra.mxu0 %v1636
    %3536 = vmatpush.msra.mxu0 %v1625
    %3537 = vmatpush.msra.mxu0 %v1614
    %3538 = vmatpush.msra.mxu0 %v1603
    %3539 = vmatpush.msra.mxu0 %v1592
    %3540 = vmatpush.msra.mxu0 %v1581
    %3541 = vmatpush.msra.mxu0 %v1570
    %3542 = vmatpush.msra.mxu0 %v1559
    %3543 = vmatpush.msra.mxu0 %v1548
    %3544 = vmatpush.msra.mxu0 %v1537
    %3545 = vmatpush.msra.mxu0 %v1526
    %3546 = vmatpush.msra.mxu0 %v1515
    %3547 = vmatpush.msra.mxu0 %v1504
    %3548 = vmatmul.f32.gmra.mxu0 %v87
    %v3549 = vpop.f32.mrf.mxu0
    %v3550 = vadd.f32 %v3530, %v3549
    %3551 = vdwg.mxu0
    %3552 = vmatpush.msra.mxu0 %v1845
    %3553 = vmatpush.msra.mxu0 %v1834
    %3554 = vmatpush.msra.mxu0 %v1823
    %3555 = vmatpush.msra.mxu0 %v1812
    %3556 = vmatpush.msra.mxu0 %v1801
    %3557 = vmatpush.msra.mxu0 %v1790
    %3558 = vmatpush.msra.mxu0 %v1779
    %3559 = vmatpush.msra.mxu0 %v1768
    %3560 = vmatpush.msra.mxu0 %v1757
    %3561 = vmatpush.msra.mxu0 %v1746
    %3562 = vmatpush.msra.mxu0 %v1735
    %3563 = vmatpush.msra.mxu0 %v1724
    %3564 = vmatpush.msra.mxu0 %v1713
    %3565 = vmatpush.msra.mxu0 %v1702
    %3566 = vmatpush.msra.mxu0 %v1691
    %3567 = vmatpush.msra.mxu0 %v1680
    %3568 = vmatmul.f32.gmra.mxu0 %v88
    %v3569 = vpop.f32.mrf.mxu0
    %v3570 = vadd.f32 %v3550, %v3569
    %3571 = vdwg.mxu0
    %3572 = vmatpush.msra.mxu0 %v2021
    %3573 = vmatpush.msra.mxu0 %v2010
    %3574 = vmatpush.msra.mxu0 %v1999
    %3575 = vmatpush.msra.mxu0 %v1988
    %3576 = vmatpush.msra.mxu0 %v1977
    %3577 = vmatpush.msra.mxu0 %v1966
    %3578 = vmatpush.msra.mxu0 %v1955
    %3579 = vmatpush.msra.mxu0 %v1944
    %3580 = vmatpush.msra.mxu0 %v1933
    %3581 = vmatpush.msra.mxu0 %v1922
    %3582 = vmatpush.msra.mxu0 %v1911
    %3583 = vmatpush.msra.mxu0 %v1900
    %3584 = vmatpush.msra.mxu0 %v1889
    %3585 = vmatpush.msra.mxu0 %v1878
    %3586 = vmatpush.msra.mxu0 %v1867
    %3587 = vmatpush.msra.mxu0 %v1856
    %3588 = vmatmul.f32.gmra.mxu0 %v89
    %v3589 = vpop.f32.mrf.mxu0
    %v3590 = vadd.f32 %v3570, %v3589
    %3591 = vdwg.mxu0
    %3592 = vmatpush.msra.mxu0 %v262
    %3593 = vmatpush.msra.mxu0 %v251
    %3594 = vmatpush.msra.mxu0 %v240
    %3595 = vmatpush.msra.mxu0 %v229
    %3596 = vmatpush.msra.mxu0 %v218
    %3597 = vmatpush.msra.mxu0 %v207
    %3598 = vmatpush.msra.mxu0 %v196
    %3599 = vmatpush.msra.mxu0 %v185
    %3600 = vmatpush.msra.mxu0 %v174
    %3601 = vmatpush.msra.mxu0 %v163
    %3602 = vmatpush.msra.mxu0 %v152
    %3603 = vmatpush.msra.mxu0 %v141
    %3604 = vmatpush.msra.mxu0 %v130
    %3605 = vmatpush.msra.mxu0 %v119
    %3606 = vmatpush.msra.mxu0 %v108
    %3607 = vmatpush.msra.mxu0 %v97
    %3608 = vmatmul.f32.gmra.mxu0 %v79
    %v3609 = vpop.f32.mrf.mxu0
    %v3610 = vadd.f32 %v2037, %v3609
    %3611 = vdwg.mxu0
    %3612 = vmatpush.msra.mxu0 %v438
    %3613 = vmatpush.msra.mxu0 %v427
    %3614 = vmatpush.msra.mxu0 %v416
    %3615 = vmatpush.msra.mxu0 %v405
    %3616 = vmatpush.msra.mxu0 %v394
    %3617 = vmatpush.msra.mxu0 %v383
    %3618 = vmatpush.msra.mxu0 %v372
    %3619 = vmatpush.msra.mxu0 %v361
    %3620 = vmatpush.msra.mxu0 %v350
    %3621 = vmatpush.msra.mxu0 %v339
    %3622 = vmatpush.msra.mxu0 %v328
    %3623 = vmatpush.msra.mxu0 %v317
    %3624 = vmatpush.msra.mxu0 %v306
    %3625 = vmatpush.msra.mxu0 %v295
    %3626 = vmatpush.msra.mxu0 %v284
    %3627 = vmatpush.msra.mxu0 %v273
    %3628 = vmatmul.f32.gmra.mxu0 %v80
    %v3629 = vpop.f32.mrf.mxu0
    %v3630 = vadd.f32 %v3610, %v3629
    %3631 = vdwg.mxu0
    %3632 = vmatpush.msra.mxu0 %v614
    %3633 = vmatpush.msra.mxu0 %v603
    %3634 = vmatpush.msra.mxu0 %v592
    %3635 = vmatpush.msra.mxu0 %v581
    %3636 = vmatpush.msra.mxu0 %v570
    %3637 = vmatpush.msra.mxu0 %v559
    %3638 = vmatpush.msra.mxu0 %v548
    %3639 = vmatpush.msra.mxu0 %v537
    %3640 = vmatpush.msra.mxu0 %v526
    %3641 = vmatpush.msra.mxu0 %v515
    %3642 = vmatpush.msra.mxu0 %v504
    %3643 = vmatpush.msra.mxu0 %v493
    %3644 = vmatpush.msra.mxu0 %v482
    %3645 = vmatpush.msra.mxu0 %v471
    %3646 = vmatpush.msra.mxu0 %v460
    %3647 = vmatpush.msra.mxu0 %v449
    %3648 = vmatmul.f32.gmra.mxu0 %v81
    %v3649 = vpop.f32.mrf.mxu0
    %v3650 = vadd.f32 %v3630, %v3649
    %3651 = vdwg.mxu0
    %3652 = vmatpush.msra.mxu0 %v790
    %3653 = vmatpush.msra.mxu0 %v779
    %3654 = vmatpush.msra.mxu0 %v768
    %3655 = vmatpush.msra.mxu0 %v757
    %3656 = vmatpush.msra.mxu0 %v746
    %3657 = vmatpush.msra.mxu0 %v735
    %3658 = vmatpush.msra.mxu0 %v724
    %3659 = vmatpush.msra.mxu0 %v713
    %3660 = vmatpush.msra.mxu0 %v702
    %3661 = vmatpush.msra.mxu0 %v691
    %3662 = vmatpush.msra.mxu0 %v680
    %3663 = vmatpush.msra.mxu0 %v669
    %3664 = vmatpush.msra.mxu0 %v658
    %3665 = vmatpush.msra.mxu0 %v647
    %3666 = vmatpush.msra.mxu0 %v636
    %3667 = vmatpush.msra.mxu0 %v625
    %3668 = vmatmul.f32.gmra.mxu0 %v82
    %v3669 = vpop.f32.mrf.mxu0
    %v3670 = vadd.f32 %v3650, %v3669
    %3671 = vdwg.mxu0
    %3672 = vmatpush.msra.mxu0 %v966
    %3673 = vmatpush.msra.mxu0 %v955
    %3674 = vmatpush.msra.mxu0 %v944
    %3675 = vmatpush.msra.mxu0 %v933
    %3676 = vmatpush.msra.mxu0 %v922
    %3677 = vmatpush.msra.mxu0 %v911
    %3678 = vmatpush.msra.mxu0 %v900
    %3679 = vmatpush.msra.mxu0 %v889
    %3680 = vmatpush.msra.mxu0 %v878
    %3681 = vmatpush.msra.mxu0 %v867
    %3682 = vmatpush.msra.mxu0 %v856
    %3683 = vmatpush.msra.mxu0 %v845
    %3684 = vmatpush.msra.mxu0 %v834
    %3685 = vmatpush.msra.mxu0 %v823
    %3686 = vmatpush.msra.mxu0 %v812
    %3687 = vmatpush.msra.mxu0 %v801
    %3688 = vmatmul.f32.gmra.mxu0 %v83
    %v3689 = vpop.f32.mrf.mxu0
    %v3690 = vadd.f32 %v3670, %v3689
    %3691 = vdwg.mxu0
    %3692 = vmatpush.msra.mxu0 %v1142
    %3693 = vmatpush.msra.mxu0 %v1131
    %3694 = vmatpush.msra.mxu0 %v1120
    %3695 = vmatpush.msra.mxu0 %v1109
    %3696 = vmatpush.msra.mxu0 %v1098
    %3697 = vmatpush.msra.mxu0 %v1087
    %3698 = vmatpush.msra.mxu0 %v1076
    %3699 = vmatpush.msra.mxu0 %v1065
    %3700 = vmatpush.msra.mxu0 %v1054
    %3701 = vmatpush.msra.mxu0 %v1043
    %3702 = vmatpush.msra.mxu0 %v1032
    %3703 = vmatpush.msra.mxu0 %v1021
    %3704 = vmatpush.msra.mxu0 %v1010
    %3705 = vmatpush.msra.mxu0 %v999
    %3706 = vmatpush.msra.mxu0 %v988
    %3707 = vmatpush.msra.mxu0 %v977
    %3708 = vmatmul.f32.gmra.mxu0 %v84
    %v3709 = vpop.f32.mrf.mxu0
    %v3710 = vadd.f32 %v3690, %v3709
    %3711 = vdwg.mxu0
    %3712 = vmatpush.msra.mxu0 %v1318
    %3713 = vmatpush.msra.mxu0 %v1307
    %3714 = vmatpush.msra.mxu0 %v1296
    %3715 = vmatpush.msra.mxu0 %v1285
    %3716 = vmatpush.msra.mxu0 %v1274
    %3717 = vmatpush.msra.mxu0 %v1263
    %3718 = vmatpush.msra.mxu0 %v1252
    %3719 = vmatpush.msra.mxu0 %v1241
    %3720 = vmatpush.msra.mxu0 %v1230
    %3721 = vmatpush.msra.mxu0 %v1219
    %3722 = vmatpush.msra.mxu0 %v1208
    %3723 = vmatpush.msra.mxu0 %v1197
    %3724 = vmatpush.msra.mxu0 %v1186
    %3725 = vmatpush.msra.mxu0 %v1175
    %3726 = vmatpush.msra.mxu0 %v1164
    %3727 = vmatpush.msra.mxu0 %v1153
    %3728 = vmatmul.f32.gmra.mxu0 %v85
    %v3729 = vpop.f32.mrf.mxu0
    %v3730 = vadd.f32 %v3710, %v3729
    %3731 = vdwg.mxu0
    %3732 = vmatpush.msra.mxu0 %v1494
    %3733 = vmatpush.msra.mxu0 %v1483
    %3734 = vmatpush.msra.mxu0 %v1472
    %3735 = vmatpush.msra.mxu0 %v1461
    %3736 = vmatpush.msra.mxu0 %v1450
    %3737 = vmatpush.msra.mxu0 %v1439
    %3738 = vmatpush.msra.mxu0 %v1428
    %3739 = vmatpush.msra.mxu0 %v1417
    %3740 = vmatpush.msra.mxu0 %v1406
    %3741 = vmatpush.msra.mxu0 %v1395
    %3742 = vmatpush.msra.mxu0 %v1384
    %3743 = vmatpush.msra.mxu0 %v1373
    %3744 = vmatpush.msra.mxu0 %v1362
    %3745 = vmatpush.msra.mxu0 %v1351
    %3746 = vmatpush.msra.mxu0 %v1340
    %3747 = vmatpush.msra.mxu0 %v1329
    %3748 = vmatmul.f32.gmra.mxu0 %v86
    %v3749 = vpop.f32.mrf.mxu0
    %v3750 = vadd.f32 %v3730, %v3749
    %3751 = vdwg.mxu0
    %3752 = vmatpush.msra.mxu0 %v1670
    %3753 = vmatpush.msra.mxu0 %v1659
    %3754 = vmatpush.msra.mxu0 %v1648
    %3755 = vmatpush.msra.mxu0 %v1637
    %3756 = vmatpush.msra.mxu0 %v1626
    %3757 = vmatpush.msra.mxu0 %v1615
    %3758 = vmatpush.msra.mxu0 %v1604
    %3759 = vmatpush.msra.mxu0 %v1593
    %3760 = vmatpush.msra.mxu0 %v1582
    %3761 = vmatpush.msra.mxu0 %v1571
    %3762 = vmatpush.msra.mxu0 %v1560
    %3763 = vmatpush.msra.mxu0 %v1549
    %3764 = vmatpush.msra.mxu0 %v1538
    %3765 = vmatpush.msra.mxu0 %v1527
    %3766 = vmatpush.msra.mxu0 %v1516
    %3767 = vmatpush.msra.mxu0 %v1505
    %3768 = vmatmul.f32.gmra.mxu0 %v87
    %v3769 = vpop.f32.mrf.mxu0
    %v3770 = vadd.f32 %v3750, %v3769
    %3771 = vdwg.mxu0
    %3772 = vmatpush.msra.mxu0 %v1846
    %3773 = vmatpush.msra.mxu0 %v1835
    %3774 = vmatpush.msra.mxu0 %v1824
    %3775 = vmatpush.msra.mxu0 %v1813
    %3776 = vmatpush.msra.mxu0 %v1802
    %3777 = vmatpush.msra.mxu0 %v1791
    %3778 = vmatpush.msra.mxu0 %v1780
    %3779 = vmatpush.msra.mxu0 %v1769
    %3780 = vmatpush.msra.mxu0 %v1758
    %3781 = vmatpush.msra.mxu0 %v1747
    %3782 = vmatpush.msra.mxu0 %v1736
    %3783 = vmatpush.msra.mxu0 %v1725
    %3784 = vmatpush.msra.mxu0 %v1714
    %3785 = vmatpush.msra.mxu0 %v1703
    %3786 = vmatpush.msra.mxu0 %v1692
    %3787 = vmatpush.msra.mxu0 %v1681
    %3788 = vmatmul.f32.gmra.mxu0 %v88
    %v3789 = vpop.f32.mrf.mxu0
    %v3790 = vadd.f32 %v3770, %v3789
    %3791 = vdwg.mxu0
    %3792 = vmatpush.msra.mxu0 %v2022
    %3793 = vmatpush.msra.mxu0 %v2011
    %3794 = vmatpush.msra.mxu0 %v2000
    %3795 = vmatpush.msra.mxu0 %v1989
    %3796 = vmatpush.msra.mxu0 %v1978
    %3797 = vmatpush.msra.mxu0 %v1967
    %3798 = vmatpush.msra.mxu0 %v1956
    %3799 = vmatpush.msra.mxu0 %v1945
    %3800 = vmatpush.msra.mxu0 %v1934
    %3801 = vmatpush.msra.mxu0 %v1923
    %3802 = vmatpush.msra.mxu0 %v1912
    %3803 = vmatpush.msra.mxu0 %v1901
    %3804 = vmatpush.msra.mxu0 %v1890
    %3805 = vmatpush.msra.mxu0 %v1879
    %3806 = vmatpush.msra.mxu0 %v1868
    %3807 = vmatpush.msra.mxu0 %v1857
    %3808 = vmatmul.f32.gmra.mxu0 %v89
    %v3809 = vpop.f32.mrf.mxu0
    %v3810 = vadd.f32 %v3790, %v3809
    %3811 = vdwg.mxu0
    %3812 = vmatpush.msra.mxu0 %v263
    %3813 = vmatpush.msra.mxu0 %v252
    %3814 = vmatpush.msra.mxu0 %v241
    %3815 = vmatpush.msra.mxu0 %v230
    %3816 = vmatpush.msra.mxu0 %v219
    %3817 = vmatpush.msra.mxu0 %v208
    %3818 = vmatpush.msra.mxu0 %v197
    %3819 = vmatpush.msra.mxu0 %v186
    %3820 = vmatpush.msra.mxu0 %v175
    %3821 = vmatpush.msra.mxu0 %v164
    %3822 = vmatpush.msra.mxu0 %v153
    %3823 = vmatpush.msra.mxu0 %v142
    %3824 = vmatpush.msra.mxu0 %v131
    %3825 = vmatpush.msra.mxu0 %v120
    %3826 = vmatpush.msra.mxu0 %v109
    %3827 = vmatpush.msra.mxu0 %v98
    %3828 = vmatmul.f32.gmra.mxu0 %v79
    %v3829 = vpop.f32.mrf.mxu0
    %v3830 = vadd.f32 %v2038, %v3829
    %3831 = vdwg.mxu0
    %3832 = vmatpush.msra.mxu0 %v439
    %3833 = vmatpush.msra.mxu0 %v428
    %3834 = vmatpush.msra.mxu0 %v417
    %3835 = vmatpush.msra.mxu0 %v406
    %3836 = vmatpush.msra.mxu0 %v395
    %3837 = vmatpush.msra.mxu0 %v384
    %3838 = vmatpush.msra.mxu0 %v373
    %3839 = vmatpush.msra.mxu0 %v362
    %3840 = vmatpush.msra.mxu0 %v351
    %3841 = vmatpush.msra.mxu0 %v340
    %3842 = vmatpush.msra.mxu0 %v329
    %3843 = vmatpush.msra.mxu0 %v318
    %3844 = vmatpush.msra.mxu0 %v307
    %3845 = vmatpush.msra.mxu0 %v296
    %3846 = vmatpush.msra.mxu0 %v285
    %3847 = vmatpush.msra.mxu0 %v274
    %3848 = vmatmul.f32.gmra.mxu0 %v80
    %v3849 = vpop.f32.mrf.mxu0
    %v3850 = vadd.f32 %v3830, %v3849
    %3851 = vdwg.mxu0
    %3852 = vmatpush.msra.mxu0 %v615
    %3853 = vmatpush.msra.mxu0 %v604
    %3854 = vmatpush.msra.mxu0 %v593
    %3855 = vmatpush.msra.mxu0 %v582
    %3856 = vmatpush.msra.mxu0 %v571
    %3857 = vmatpush.msra.mxu0 %v560
    %3858 = vmatpush.msra.mxu0 %v549
    %3859 = vmatpush.msra.mxu0 %v538
    %3860 = vmatpush.msra.mxu0 %v527
    %3861 = vmatpush.msra.mxu0 %v516
    %3862 = vmatpush.msra.mxu0 %v505
    %3863 = vmatpush.msra.mxu0 %v494
    %3864 = vmatpush.msra.mxu0 %v483
    %3865 = vmatpush.msra.mxu0 %v472
    %3866 = vmatpush.msra.mxu0 %v461
    %3867 = vmatpush.msra.mxu0 %v450
    %3868 = vmatmul.f32.gmra.mxu0 %v81
    %v3869 = vpop.f32.mrf.mxu0
    %v3870 = vadd.f32 %v3850, %v3869
    %3871 = vdwg.mxu0
    %3872 = vmatpush.msra.mxu0 %v791
    %3873 = vmatpush.msra.mxu0 %v780
    %3874 = vmatpush.msra.mxu0 %v769
    %3875 = vmatpush.msra.mxu0 %v758
    %3876 = vmatpush.msra.mxu0 %v747
    %3877 = vmatpush.msra.mxu0 %v736
    %3878 = vmatpush.msra.mxu0 %v725
    %3879 = vmatpush.msra.mxu0 %v714
    %3880 = vmatpush.msra.mxu0 %v703
    %3881 = vmatpush.msra.mxu0 %v692
    %3882 = vmatpush.msra.mxu0 %v681
    %3883 = vmatpush.msra.mxu0 %v670
    %3884 = vmatpush.msra.mxu0 %v659
    %3885 = vmatpush.msra.mxu0 %v648
    %3886 = vmatpush.msra.mxu0 %v637
    %3887 = vmatpush.msra.mxu0 %v626
    %3888 = vmatmul.f32.gmra.mxu0 %v82
    %v3889 = vpop.f32.mrf.mxu0
    %v3890 = vadd.f32 %v3870, %v3889
    %3891 = vdwg.mxu0
    %3892 = vmatpush.msra.mxu0 %v967
    %3893 = vmatpush.msra.mxu0 %v956
    %3894 = vmatpush.msra.mxu0 %v945
    %3895 = vmatpush.msra.mxu0 %v934
    %3896 = vmatpush.msra.mxu0 %v923
    %3897 = vmatpush.msra.mxu0 %v912
    %3898 = vmatpush.msra.mxu0 %v901
    %3899 = vmatpush.msra.mxu0 %v890
    %3900 = vmatpush.msra.mxu0 %v879
    %3901 = vmatpush.msra.mxu0 %v868
    %3902 = vmatpush.msra.mxu0 %v857
    %3903 = vmatpush.msra.mxu0 %v846
    %3904 = vmatpush.msra.mxu0 %v835
    %3905 = vmatpush.msra.mxu0 %v824
    %3906 = vmatpush.msra.mxu0 %v813
    %3907 = vmatpush.msra.mxu0 %v802
    %3908 = vmatmul.f32.gmra.mxu0 %v83
    %v3909 = vpop.f32.mrf.mxu0
    %v3910 = vadd.f32 %v3890, %v3909
    %3911 = vdwg.mxu0
    %3912 = vmatpush.msra.mxu0 %v1143
    %3913 = vmatpush.msra.mxu0 %v1132
    %3914 = vmatpush.msra.mxu0 %v1121
    %3915 = vmatpush.msra.mxu0 %v1110
    %3916 = vmatpush.msra.mxu0 %v1099
    %3917 = vmatpush.msra.mxu0 %v1088
    %3918 = vmatpush.msra.mxu0 %v1077
    %3919 = vmatpush.msra.mxu0 %v1066
    %3920 = vmatpush.msra.mxu0 %v1055
    %3921 = vmatpush.msra.mxu0 %v1044
    %3922 = vmatpush.msra.mxu0 %v1033
    %3923 = vmatpush.msra.mxu0 %v1022
    %3924 = vmatpush.msra.mxu0 %v1011
    %3925 = vmatpush.msra.mxu0 %v1000
    %3926 = vmatpush.msra.mxu0 %v989
    %3927 = vmatpush.msra.mxu0 %v978
    %3928 = vmatmul.f32.gmra.mxu0 %v84
    %v3929 = vpop.f32.mrf.mxu0
    %v3930 = vadd.f32 %v3910, %v3929
    %3931 = vdwg.mxu0
    %3932 = vmatpush.msra.mxu0 %v1319
    %3933 = vmatpush.msra.mxu0 %v1308
    %3934 = vmatpush.msra.mxu0 %v1297
    %3935 = vmatpush.msra.mxu0 %v1286
    %3936 = vmatpush.msra.mxu0 %v1275
    %3937 = vmatpush.msra.mxu0 %v1264
    %3938 = vmatpush.msra.mxu0 %v1253
    %3939 = vmatpush.msra.mxu0 %v1242
    %3940 = vmatpush.msra.mxu0 %v1231
    %3941 = vmatpush.msra.mxu0 %v1220
    %3942 = vmatpush.msra.mxu0 %v1209
    %3943 = vmatpush.msra.mxu0 %v1198
    %3944 = vmatpush.msra.mxu0 %v1187
    %3945 = vmatpush.msra.mxu0 %v1176
    %3946 = vmatpush.msra.mxu0 %v1165
    %3947 = vmatpush.msra.mxu0 %v1154
    %3948 = vmatmul.f32.gmra.mxu0 %v85
    %v3949 = vpop.f32.mrf.mxu0
    %v3950 = vadd.f32 %v3930, %v3949
    %3951 = vdwg.mxu0
    %3952 = vmatpush.msra.mxu0 %v1495
    %3953 = vmatpush.msra.mxu0 %v1484
    %3954 = vmatpush.msra.mxu0 %v1473
    %3955 = vmatpush.msra.mxu0 %v1462
    %3956 = vmatpush.msra.mxu0 %v1451
    %3957 = vmatpush.msra.mxu0 %v1440
    %3958 = vmatpush.msra.mxu0 %v1429
    %3959 = vmatpush.msra.mxu0 %v1418
    %3960 = vmatpush.msra.mxu0 %v1407
    %3961 = vmatpush.msra.mxu0 %v1396
    %3962 = vmatpush.msra.mxu0 %v1385
    %3963 = vmatpush.msra.mxu0 %v1374
    %3964 = vmatpush.msra.mxu0 %v1363
    %3965 = vmatpush.msra.mxu0 %v1352
    %3966 = vmatpush.msra.mxu0 %v1341
    %3967 = vmatpush.msra.mxu0 %v1330
    %3968 = vmatmul.f32.gmra.mxu0 %v86
    %v3969 = vpop.f32.mrf.mxu0
    %v3970 = vadd.f32 %v3950, %v3969
    %3971 = vdwg.mxu0
    %3972 = vmatpush.msra.mxu0 %v1671
    %3973 = vmatpush.msra.mxu0 %v1660
    %3974 = vmatpush.msra.mxu0 %v1649
    %3975 = vmatpush.msra.mxu0 %v1638
    %3976 = vmatpush.msra.mxu0 %v1627
    %3977 = vmatpush.msra.mxu0 %v1616
    %3978 = vmatpush.msra.mxu0 %v1605
    %3979 = vmatpush.msra.mxu0 %v1594
    %3980 = vmatpush.msra.mxu0 %v1583
    %3981 = vmatpush.msra.mxu0 %v1572
    %3982 = vmatpush.msra.mxu0 %v1561
    %3983 = vmatpush.msra.mxu0 %v1550
    %3984 = vmatpush.msra.mxu0 %v1539
    %3985 = vmatpush.msra.mxu0 %v1528
    %3986 = vmatpush.msra.mxu0 %v1517
    %3987 = vmatpush.msra.mxu0 %v1506
    %3988 = vmatmul.f32.gmra.mxu0 %v87
    %v3989 = vpop.f32.mrf.mxu0
    %v3990 = vadd.f32 %v3970, %v3989
    %3991 = vdwg.mxu0
    %3992 = vmatpush.msra.mxu0 %v1847
    %3993 = vmatpush.msra.mxu0 %v1836
    %3994 = vmatpush.msra.mxu0 %v1825
    %3995 = vmatpush.msra.mxu0 %v1814
    %3996 = vmatpush.msra.mxu0 %v1803
    %3997 = vmatpush.msra.mxu0 %v1792
    %3998 = vmatpush.msra.mxu0 %v1781
    %3999 = vmatpush.msra.mxu0 %v1770
    %4000 = vmatpush.msra.mxu0 %v1759
    %4001 = vmatpush.msra.mxu0 %v1748
    %4002 = vmatpush.msra.mxu0 %v1737
    %4003 = vmatpush.msra.mxu0 %v1726
    %4004 = vmatpush.msra.mxu0 %v1715
    %4005 = vmatpush.msra.mxu0 %v1704
    %4006 = vmatpush.msra.mxu0 %v1693
    %4007 = vmatpush.msra.mxu0 %v1682
    %4008 = vmatmul.f32.gmra.mxu0 %v88
    %v4009 = vpop.f32.mrf.mxu0
    %v4010 = vadd.f32 %v3990, %v4009
    %4011 = vdwg.mxu0
    %4012 = vmatpush.msra.mxu0 %v2023
    %4013 = vmatpush.msra.mxu0 %v2012
    %4014 = vmatpush.msra.mxu0 %v2001
    %4015 = vmatpush.msra.mxu0 %v1990
    %4016 = vmatpush.msra.mxu0 %v1979
    %4017 = vmatpush.msra.mxu0 %v1968
    %4018 = vmatpush.msra.mxu0 %v1957
    %4019 = vmatpush.msra.mxu0 %v1946
    %4020 = vmatpush.msra.mxu0 %v1935
    %4021 = vmatpush.msra.mxu0 %v1924
    %4022 = vmatpush.msra.mxu0 %v1913
    %4023 = vmatpush.msra.mxu0 %v1902
    %4024 = vmatpush.msra.mxu0 %v1891
    %4025 = vmatpush.msra.mxu0 %v1880
    %4026 = vmatpush.msra.mxu0 %v1869
    %4027 = vmatpush.msra.mxu0 %v1858
    %4028 = vmatmul.f32.gmra.mxu0 %v89
    %v4029 = vpop.f32.mrf.mxu0
    %v4030 = vadd.f32 %v4010, %v4029
    %4031 = vdwg.mxu0
    %4032 = vmatpush.msra.mxu0 %v264
    %4033 = vmatpush.msra.mxu0 %v253
    %4034 = vmatpush.msra.mxu0 %v242
    %4035 = vmatpush.msra.mxu0 %v231
    %4036 = vmatpush.msra.mxu0 %v220
    %4037 = vmatpush.msra.mxu0 %v209
    %4038 = vmatpush.msra.mxu0 %v198
    %4039 = vmatpush.msra.mxu0 %v187
    %4040 = vmatpush.msra.mxu0 %v176
    %4041 = vmatpush.msra.mxu0 %v165
    %4042 = vmatpush.msra.mxu0 %v154
    %4043 = vmatpush.msra.mxu0 %v143
    %4044 = vmatpush.msra.mxu0 %v132
    %4045 = vmatpush.msra.mxu0 %v121
    %4046 = vmatpush.msra.mxu0 %v110
    %4047 = vmatpush.msra.mxu0 %v99
    %4048 = vmatmul.f32.gmra.mxu0 %v79
    %v4049 = vpop.f32.mrf.mxu0
    %v4050 = vadd.f32 %v2039, %v4049
    %4051 = vdwg.mxu0
    %4052 = vmatpush.msra.mxu0 %v440
    %4053 = vmatpush.msra.mxu0 %v429
    %4054 = vmatpush.msra.mxu0 %v418
    %4055 = vmatpush.msra.mxu0 %v407
    %4056 = vmatpush.msra.mxu0 %v396
    %4057 = vmatpush.msra.mxu0 %v385
    %4058 = vmatpush.msra.mxu0 %v374
    %4059 = vmatpush.msra.mxu0 %v363
    %4060 = vmatpush.msra.mxu0 %v352
    %4061 = vmatpush.msra.mxu0 %v341
    %4062 = vmatpush.msra.mxu0 %v330
    %4063 = vmatpush.msra.mxu0 %v319
    %4064 = vmatpush.msra.mxu0 %v308
    %4065 = vmatpush.msra.mxu0 %v297
    %4066 = vmatpush.msra.mxu0 %v286
    %4067 = vmatpush.msra.mxu0 %v275
    %4068 = vmatmul.f32.gmra.mxu0 %v80
    %v4069 = vpop.f32.mrf.mxu0
    %v4070 = vadd.f32 %v4050, %v4069
    %4071 = vdwg.mxu0
    %4072 = vmatpush.msra.mxu0 %v616
    %4073 = vmatpush.msra.mxu0 %v605
    %4074 = vmatpush.msra.mxu0 %v594
    %4075 = vmatpush.msra.mxu0 %v583
    %4076 = vmatpush.msra.mxu0 %v572
    %4077 = vmatpush.msra.mxu0 %v561
    %4078 = vmatpush.msra.mxu0 %v550
    %4079 = vmatpush.msra.mxu0 %v539
    %4080 = vmatpush.msra.mxu0 %v528
    %4081 = vmatpush.msra.mxu0 %v517
    %4082 = vmatpush.msra.mxu0 %v506
    %4083 = vmatpush.msra.mxu0 %v495
    %4084 = vmatpush.msra.mxu0 %v484
    %4085 = vmatpush.msra.mxu0 %v473
    %4086 = vmatpush.msra.mxu0 %v462
    %4087 = vmatpush.msra.mxu0 %v451
    %4088 = vmatmul.f32.gmra.mxu0 %v81
    %v4089 = vpop.f32.mrf.mxu0
    %v4090 = vadd.f32 %v4070, %v4089
    %4091 = vdwg.mxu0
    %4092 = vmatpush.msra.mxu0 %v792
    %4093 = vmatpush.msra.mxu0 %v781
    %4094 = vmatpush.msra.mxu0 %v770
    %4095 = vmatpush.msra.mxu0 %v759
    %4096 = vmatpush.msra.mxu0 %v748
    %4097 = vmatpush.msra.mxu0 %v737
    %4098 = vmatpush.msra.mxu0 %v726
    %4099 = vmatpush.msra.mxu0 %v715
    %4100 = vmatpush.msra.mxu0 %v704
    %4101 = vmatpush.msra.mxu0 %v693
    %4102 = vmatpush.msra.mxu0 %v682
    %4103 = vmatpush.msra.mxu0 %v671
    %4104 = vmatpush.msra.mxu0 %v660
    %4105 = vmatpush.msra.mxu0 %v649
    %4106 = vmatpush.msra.mxu0 %v638
    %4107 = vmatpush.msra.mxu0 %v627
    %4108 = vmatmul.f32.gmra.mxu0 %v82
    %v4109 = vpop.f32.mrf.mxu0
    %v4110 = vadd.f32 %v4090, %v4109
    %4111 = vdwg.mxu0
    %4112 = vmatpush.msra.mxu0 %v968
    %4113 = vmatpush.msra.mxu0 %v957
    %4114 = vmatpush.msra.mxu0 %v946
    %4115 = vmatpush.msra.mxu0 %v935
    %4116 = vmatpush.msra.mxu0 %v924
    %4117 = vmatpush.msra.mxu0 %v913
    %4118 = vmatpush.msra.mxu0 %v902
    %4119 = vmatpush.msra.mxu0 %v891
    %4120 = vmatpush.msra.mxu0 %v880
    %4121 = vmatpush.msra.mxu0 %v869
    %4122 = vmatpush.msra.mxu0 %v858
    %4123 = vmatpush.msra.mxu0 %v847
    %4124 = vmatpush.msra.mxu0 %v836
    %4125 = vmatpush.msra.mxu0 %v825
    %4126 = vmatpush.msra.mxu0 %v814
    %4127 = vmatpush.msra.mxu0 %v803
    %4128 = vmatmul.f32.gmra.mxu0 %v83
    %v4129 = vpop.f32.mrf.mxu0
    %v4130 = vadd.f32 %v4110, %v4129
    %4131 = vdwg.mxu0
    %4132 = vmatpush.msra.mxu0 %v1144
    %4133 = vmatpush.msra.mxu0 %v1133
    %4134 = vmatpush.msra.mxu0 %v1122
    %4135 = vmatpush.msra.mxu0 %v1111
    %4136 = vmatpush.msra.mxu0 %v1100
    %4137 = vmatpush.msra.mxu0 %v1089
    %4138 = vmatpush.msra.mxu0 %v1078
    %4139 = vmatpush.msra.mxu0 %v1067
    %4140 = vmatpush.msra.mxu0 %v1056
    %4141 = vmatpush.msra.mxu0 %v1045
    %4142 = vmatpush.msra.mxu0 %v1034
    %4143 = vmatpush.msra.mxu0 %v1023
    %4144 = vmatpush.msra.mxu0 %v1012
    %4145 = vmatpush.msra.mxu0 %v1001
    %4146 = vmatpush.msra.mxu0 %v990
    %4147 = vmatpush.msra.mxu0 %v979
    %4148 = vmatmul.f32.gmra.mxu0 %v84
    %v4149 = vpop.f32.mrf.mxu0
    %v4150 = vadd.f32 %v4130, %v4149
    %4151 = vdwg.mxu0
    %4152 = vmatpush.msra.mxu0 %v1320
    %4153 = vmatpush.msra.mxu0 %v1309
    %4154 = vmatpush.msra.mxu0 %v1298
    %4155 = vmatpush.msra.mxu0 %v1287
    %4156 = vmatpush.msra.mxu0 %v1276
    %4157 = vmatpush.msra.mxu0 %v1265
    %4158 = vmatpush.msra.mxu0 %v1254
    %4159 = vmatpush.msra.mxu0 %v1243
    %4160 = vmatpush.msra.mxu0 %v1232
    %4161 = vmatpush.msra.mxu0 %v1221
    %4162 = vmatpush.msra.mxu0 %v1210
    %4163 = vmatpush.msra.mxu0 %v1199
    %4164 = vmatpush.msra.mxu0 %v1188
    %4165 = vmatpush.msra.mxu0 %v1177
    %4166 = vmatpush.msra.mxu0 %v1166
    %4167 = vmatpush.msra.mxu0 %v1155
    %4168 = vmatmul.f32.gmra.mxu0 %v85
    %v4169 = vpop.f32.mrf.mxu0
    %v4170 = vadd.f32 %v4150, %v4169
    %4171 = vdwg.mxu0
    %4172 = vmatpush.msra.mxu0 %v1496
    %4173 = vmatpush.msra.mxu0 %v1485
    %4174 = vmatpush.msra.mxu0 %v1474
    %4175 = vmatpush.msra.mxu0 %v1463
    %4176 = vmatpush.msra.mxu0 %v1452
    %4177 = vmatpush.msra.mxu0 %v1441
    %4178 = vmatpush.msra.mxu0 %v1430
    %4179 = vmatpush.msra.mxu0 %v1419
    %4180 = vmatpush.msra.mxu0 %v1408
    %4181 = vmatpush.msra.mxu0 %v1397
    %4182 = vmatpush.msra.mxu0 %v1386
    %4183 = vmatpush.msra.mxu0 %v1375
    %4184 = vmatpush.msra.mxu0 %v1364
    %4185 = vmatpush.msra.mxu0 %v1353
    %4186 = vmatpush.msra.mxu0 %v1342
    %4187 = vmatpush.msra.mxu0 %v1331
    %4188 = vmatmul.f32.gmra.mxu0 %v86
    %v4189 = vpop.f32.mrf.mxu0
    %v4190 = vadd.f32 %v4170, %v4189
    %4191 = vdwg.mxu0
    %4192 = vmatpush.msra.mxu0 %v1672
    %4193 = vmatpush.msra.mxu0 %v1661
    %4194 = vmatpush.msra.mxu0 %v1650
    %4195 = vmatpush.msra.mxu0 %v1639
    %4196 = vmatpush.msra.mxu0 %v1628
    %4197 = vmatpush.msra.mxu0 %v1617
    %4198 = vmatpush.msra.mxu0 %v1606
    %4199 = vmatpush.msra.mxu0 %v1595
    %4200 = vmatpush.msra.mxu0 %v1584
    %4201 = vmatpush.msra.mxu0 %v1573
    %4202 = vmatpush.msra.mxu0 %v1562
    %4203 = vmatpush.msra.mxu0 %v1551
    %4204 = vmatpush.msra.mxu0 %v1540
    %4205 = vmatpush.msra.mxu0 %v1529
    %4206 = vmatpush.msra.mxu0 %v1518
    %4207 = vmatpush.msra.mxu0 %v1507
    %4208 = vmatmul.f32.gmra.mxu0 %v87
    %v4209 = vpop.f32.mrf.mxu0
    %v4210 = vadd.f32 %v4190, %v4209
    %4211 = vdwg.mxu0
    %4212 = vmatpush.msra.mxu0 %v1848
    %4213 = vmatpush.msra.mxu0 %v1837
    %4214 = vmatpush.msra.mxu0 %v1826
    %4215 = vmatpush.msra.mxu0 %v1815
    %4216 = vmatpush.msra.mxu0 %v1804
    %4217 = vmatpush.msra.mxu0 %v1793
    %4218 = vmatpush.msra.mxu0 %v1782
    %4219 = vmatpush.msra.mxu0 %v1771
    %4220 = vmatpush.msra.mxu0 %v1760
    %4221 = vmatpush.msra.mxu0 %v1749
    %4222 = vmatpush.msra.mxu0 %v1738
    %4223 = vmatpush.msra.mxu0 %v1727
    %4224 = vmatpush.msra.mxu0 %v1716
    %4225 = vmatpush.msra.mxu0 %v1705
    %4226 = vmatpush.msra.mxu0 %v1694
    %4227 = vmatpush.msra.mxu0 %v1683
    %4228 = vmatmul.f32.gmra.mxu0 %v88
    %v4229 = vpop.f32.mrf.mxu0
    %v4230 = vadd.f32 %v4210, %v4229
    %4231 = vdwg.mxu0
    %4232 = vmatpush.msra.mxu0 %v2024
    %4233 = vmatpush.msra.mxu0 %v2013
    %4234 = vmatpush.msra.mxu0 %v2002
    %4235 = vmatpush.msra.mxu0 %v1991
    %4236 = vmatpush.msra.mxu0 %v1980
    %4237 = vmatpush.msra.mxu0 %v1969
    %4238 = vmatpush.msra.mxu0 %v1958
    %4239 = vmatpush.msra.mxu0 %v1947
    %4240 = vmatpush.msra.mxu0 %v1936
    %4241 = vmatpush.msra.mxu0 %v1925
    %4242 = vmatpush.msra.mxu0 %v1914
    %4243 = vmatpush.msra.mxu0 %v1903
    %4244 = vmatpush.msra.mxu0 %v1892
    %4245 = vmatpush.msra.mxu0 %v1881
    %4246 = vmatpush.msra.mxu0 %v1870
    %4247 = vmatpush.msra.mxu0 %v1859
    %4248 = vmatmul.f32.gmra.mxu0 %v89
    %v4249 = vpop.f32.mrf.mxu0
    %v4250 = vadd.f32 %v4230, %v4249
    %4251 = vdwg.mxu0
    %4252 = vmatpush.msra.mxu0 %v265
    %4253 = vmatpush.msra.mxu0 %v254
    %4254 = vmatpush.msra.mxu0 %v243
    %4255 = vmatpush.msra.mxu0 %v232
    %4256 = vmatpush.msra.mxu0 %v221
    %4257 = vmatpush.msra.mxu0 %v210
    %4258 = vmatpush.msra.mxu0 %v199
    %4259 = vmatpush.msra.mxu0 %v188
    %4260 = vmatpush.msra.mxu0 %v177
    %4261 = vmatpush.msra.mxu0 %v166
    %4262 = vmatpush.msra.mxu0 %v155
    %4263 = vmatpush.msra.mxu0 %v144
    %4264 = vmatpush.msra.mxu0 %v133
    %4265 = vmatpush.msra.mxu0 %v122
    %4266 = vmatpush.msra.mxu0 %v111
    %4267 = vmatpush.msra.mxu0 %v100
    %4268 = vmatmul.f32.gmra.mxu0 %v79
    %v4269 = vpop.f32.mrf.mxu0
    %v4270 = vadd.f32 %v2040, %v4269
    %4271 = vdwg.mxu0
    %4272 = vmatpush.msra.mxu0 %v441
    %4273 = vmatpush.msra.mxu0 %v430
    %4274 = vmatpush.msra.mxu0 %v419
    %4275 = vmatpush.msra.mxu0 %v408
    %4276 = vmatpush.msra.mxu0 %v397
    %4277 = vmatpush.msra.mxu0 %v386
    %4278 = vmatpush.msra.mxu0 %v375
    %4279 = vmatpush.msra.mxu0 %v364
    %4280 = vmatpush.msra.mxu0 %v353
    %4281 = vmatpush.msra.mxu0 %v342
    %4282 = vmatpush.msra.mxu0 %v331
    %4283 = vmatpush.msra.mxu0 %v320
    %4284 = vmatpush.msra.mxu0 %v309
    %4285 = vmatpush.msra.mxu0 %v298
    %4286 = vmatpush.msra.mxu0 %v287
    %4287 = vmatpush.msra.mxu0 %v276
    %4288 = vmatmul.f32.gmra.mxu0 %v80
    %v4289 = vpop.f32.mrf.mxu0
    %v4290 = vadd.f32 %v4270, %v4289
    %4291 = vdwg.mxu0
    %4292 = vmatpush.msra.mxu0 %v617
    %4293 = vmatpush.msra.mxu0 %v606
    %4294 = vmatpush.msra.mxu0 %v595
    %4295 = vmatpush.msra.mxu0 %v584
    %4296 = vmatpush.msra.mxu0 %v573
    %4297 = vmatpush.msra.mxu0 %v562
    %4298 = vmatpush.msra.mxu0 %v551
    %4299 = vmatpush.msra.mxu0 %v540
    %4300 = vmatpush.msra.mxu0 %v529
    %4301 = vmatpush.msra.mxu0 %v518
    %4302 = vmatpush.msra.mxu0 %v507
    %4303 = vmatpush.msra.mxu0 %v496
    %4304 = vmatpush.msra.mxu0 %v485
    %4305 = vmatpush.msra.mxu0 %v474
    %4306 = vmatpush.msra.mxu0 %v463
    %4307 = vmatpush.msra.mxu0 %v452
    %4308 = vmatmul.f32.gmra.mxu0 %v81
    %v4309 = vpop.f32.mrf.mxu0
    %v4310 = vadd.f32 %v4290, %v4309
    %4311 = vdwg.mxu0
    %4312 = vmatpush.msra.mxu0 %v793
    %4313 = vmatpush.msra.mxu0 %v782
    %4314 = vmatpush.msra.mxu0 %v771
    %4315 = vmatpush.msra.mxu0 %v760
    %4316 = vmatpush.msra.mxu0 %v749
    %4317 = vmatpush.msra.mxu0 %v738
    %4318 = vmatpush.msra.mxu0 %v727
    %4319 = vmatpush.msra.mxu0 %v716
    %4320 = vmatpush.msra.mxu0 %v705
    %4321 = vmatpush.msra.mxu0 %v694
    %4322 = vmatpush.msra.mxu0 %v683
    %4323 = vmatpush.msra.mxu0 %v672
    %4324 = vmatpush.msra.mxu0 %v661
    %4325 = vmatpush.msra.mxu0 %v650
    %4326 = vmatpush.msra.mxu0 %v639
    %4327 = vmatpush.msra.mxu0 %v628
    %4328 = vmatmul.f32.gmra.mxu0 %v82
    %v4329 = vpop.f32.mrf.mxu0
    %v4330 = vadd.f32 %v4310, %v4329
    %4331 = vdwg.mxu0
    %4332 = vmatpush.msra.mxu0 %v969
    %4333 = vmatpush.msra.mxu0 %v958
    %4334 = vmatpush.msra.mxu0 %v947
    %4335 = vmatpush.msra.mxu0 %v936
    %4336 = vmatpush.msra.mxu0 %v925
    %4337 = vmatpush.msra.mxu0 %v914
    %4338 = vmatpush.msra.mxu0 %v903
    %4339 = vmatpush.msra.mxu0 %v892
    %4340 = vmatpush.msra.mxu0 %v881
    %4341 = vmatpush.msra.mxu0 %v870
    %4342 = vmatpush.msra.mxu0 %v859
    %4343 = vmatpush.msra.mxu0 %v848
    %4344 = vmatpush.msra.mxu0 %v837
    %4345 = vmatpush.msra.mxu0 %v826
    %4346 = vmatpush.msra.mxu0 %v815
    %4347 = vmatpush.msra.mxu0 %v804
    %4348 = vmatmul.f32.gmra.mxu0 %v83
    %v4349 = vpop.f32.mrf.mxu0
    %v4350 = vadd.f32 %v4330, %v4349
    %4351 = vdwg.mxu0
    %4352 = vmatpush.msra.mxu0 %v1145
    %4353 = vmatpush.msra.mxu0 %v1134
    %4354 = vmatpush.msra.mxu0 %v1123
    %4355 = vmatpush.msra.mxu0 %v1112
    %4356 = vmatpush.msra.mxu0 %v1101
    %4357 = vmatpush.msra.mxu0 %v1090
    %4358 = vmatpush.msra.mxu0 %v1079
    %4359 = vmatpush.msra.mxu0 %v1068
    %4360 = vmatpush.msra.mxu0 %v1057
    %4361 = vmatpush.msra.mxu0 %v1046
    %4362 = vmatpush.msra.mxu0 %v1035
    %4363 = vmatpush.msra.mxu0 %v1024
    %4364 = vmatpush.msra.mxu0 %v1013
    %4365 = vmatpush.msra.mxu0 %v1002
    %4366 = vmatpush.msra.mxu0 %v991
    %4367 = vmatpush.msra.mxu0 %v980
    %4368 = vmatmul.f32.gmra.mxu0 %v84
    %v4369 = vpop.f32.mrf.mxu0
    %v4370 = vadd.f32 %v4350, %v4369
    %4371 = vdwg.mxu0
    %4372 = vmatpush.msra.mxu0 %v1321
    %4373 = vmatpush.msra.mxu0 %v1310
    %4374 = vmatpush.msra.mxu0 %v1299
    %4375 = vmatpush.msra.mxu0 %v1288
    %4376 = vmatpush.msra.mxu0 %v1277
    %4377 = vmatpush.msra.mxu0 %v1266
    %4378 = vmatpush.msra.mxu0 %v1255
    %4379 = vmatpush.msra.mxu0 %v1244
    %4380 = vmatpush.msra.mxu0 %v1233
    %4381 = vmatpush.msra.mxu0 %v1222
    %4382 = vmatpush.msra.mxu0 %v1211
    %4383 = vmatpush.msra.mxu0 %v1200
    %4384 = vmatpush.msra.mxu0 %v1189
    %4385 = vmatpush.msra.mxu0 %v1178
    %4386 = vmatpush.msra.mxu0 %v1167
    %4387 = vmatpush.msra.mxu0 %v1156
    %4388 = vmatmul.f32.gmra.mxu0 %v85
    %v4389 = vpop.f32.mrf.mxu0
    %v4390 = vadd.f32 %v4370, %v4389
    %4391 = vdwg.mxu0
    %4392 = vmatpush.msra.mxu0 %v1497
    %4393 = vmatpush.msra.mxu0 %v1486
    %4394 = vmatpush.msra.mxu0 %v1475
    %4395 = vmatpush.msra.mxu0 %v1464
    %4396 = vmatpush.msra.mxu0 %v1453
    %4397 = vmatpush.msra.mxu0 %v1442
    %4398 = vmatpush.msra.mxu0 %v1431
    %4399 = vmatpush.msra.mxu0 %v1420
    %4400 = vmatpush.msra.mxu0 %v1409
    %4401 = vmatpush.msra.mxu0 %v1398
    %4402 = vmatpush.msra.mxu0 %v1387
    %4403 = vmatpush.msra.mxu0 %v1376
    %4404 = vmatpush.msra.mxu0 %v1365
    %4405 = vmatpush.msra.mxu0 %v1354
    %4406 = vmatpush.msra.mxu0 %v1343
    %4407 = vmatpush.msra.mxu0 %v1332
    %4408 = vmatmul.f32.gmra.mxu0 %v86
    %v4409 = vpop.f32.mrf.mxu0
    %v4410 = vadd.f32 %v4390, %v4409
    %4411 = vdwg.mxu0
    %4412 = vmatpush.msra.mxu0 %v1673
    %4413 = vmatpush.msra.mxu0 %v1662
    %4414 = vmatpush.msra.mxu0 %v1651
    %4415 = vmatpush.msra.mxu0 %v1640
    %4416 = vmatpush.msra.mxu0 %v1629
    %4417 = vmatpush.msra.mxu0 %v1618
    %4418 = vmatpush.msra.mxu0 %v1607
    %4419 = vmatpush.msra.mxu0 %v1596
    %4420 = vmatpush.msra.mxu0 %v1585
    %4421 = vmatpush.msra.mxu0 %v1574
    %4422 = vmatpush.msra.mxu0 %v1563
    %4423 = vmatpush.msra.mxu0 %v1552
    %4424 = vmatpush.msra.mxu0 %v1541
    %4425 = vmatpush.msra.mxu0 %v1530
    %4426 = vmatpush.msra.mxu0 %v1519
    %4427 = vmatpush.msra.mxu0 %v1508
    %4428 = vmatmul.f32.gmra.mxu0 %v87
    %v4429 = vpop.f32.mrf.mxu0
    %v4430 = vadd.f32 %v4410, %v4429
    %4431 = vdwg.mxu0
    %4432 = vmatpush.msra.mxu0 %v1849
    %4433 = vmatpush.msra.mxu0 %v1838
    %4434 = vmatpush.msra.mxu0 %v1827
    %4435 = vmatpush.msra.mxu0 %v1816
    %4436 = vmatpush.msra.mxu0 %v1805
    %4437 = vmatpush.msra.mxu0 %v1794
    %4438 = vmatpush.msra.mxu0 %v1783
    %4439 = vmatpush.msra.mxu0 %v1772
    %4440 = vmatpush.msra.mxu0 %v1761
    %4441 = vmatpush.msra.mxu0 %v1750
    %4442 = vmatpush.msra.mxu0 %v1739
    %4443 = vmatpush.msra.mxu0 %v1728
    %4444 = vmatpush.msra.mxu0 %v1717
    %4445 = vmatpush.msra.mxu0 %v1706
    %4446 = vmatpush.msra.mxu0 %v1695
    %4447 = vmatpush.msra.mxu0 %v1684
    %4448 = vmatmul.f32.gmra.mxu0 %v88
    %v4449 = vpop.f32.mrf.mxu0
    %v4450 = vadd.f32 %v4430, %v4449
    %4451 = vdwg.mxu0
    %4452 = vmatpush.msra.mxu0 %v2025
    %4453 = vmatpush.msra.mxu0 %v2014
    %4454 = vmatpush.msra.mxu0 %v2003
    %4455 = vmatpush.msra.mxu0 %v1992
    %4456 = vmatpush.msra.mxu0 %v1981
    %4457 = vmatpush.msra.mxu0 %v1970
    %4458 = vmatpush.msra.mxu0 %v1959
    %4459 = vmatpush.msra.mxu0 %v1948
    %4460 = vmatpush.msra.mxu0 %v1937
    %4461 = vmatpush.msra.mxu0 %v1926
    %4462 = vmatpush.msra.mxu0 %v1915
    %4463 = vmatpush.msra.mxu0 %v1904
    %4464 = vmatpush.msra.mxu0 %v1893
    %4465 = vmatpush.msra.mxu0 %v1882
    %4466 = vmatpush.msra.mxu0 %v1871
    %4467 = vmatpush.msra.mxu0 %v1860
    %4468 = vmatmul.f32.gmra.mxu0 %v89
    %v4469 = vpop.f32.mrf.mxu0
    %v4470 = vadd.f32 %v4450, %v4469
    %4471 = vdwg.mxu0
    %vm4472 = vcmp.ge.f32.partialorder %v2270, 0.0
    %vm4473 = vcmp.ge.f32.partialorder %v2490, 0.0
    %vm4474 = vcmp.ge.f32.partialorder %v2710, 0.0
    %vm4475 = vcmp.ge.f32.partialorder %v2930, 0.0
    %vm4476 = vcmp.ge.f32.partialorder %v3150, 0.0
    %vm4477 = vcmp.ge.f32.partialorder %v3370, 0.0
    %vm4478 = vcmp.ge.f32.partialorder %v3590, 0.0
    %vm4479 = vcmp.ge.f32.partialorder %v3810, 0.0
    %vm4480 = vcmp.ge.f32.partialorder %v4030, 0.0
    %vm4481 = vcmp.ge.f32.partialorder %v4250, 0.0
    %vm4482 = vcmp.ge.f32.partialorder %v4470, 0.0
    %v4483 = vmul.f32 %v2270, 0.01
    %v4484 = vmul.f32 %v2490, 0.01
    %v4485 = vmul.f32 %v2710, 0.01
    %v4486 = vmul.f32 %v2930, 0.01
    %v4487 = vmul.f32 %v3150, 0.01
    %v4488 = vmul.f32 %v3370, 0.01
    %v4489 = vmul.f32 %v3590, 0.01
    %v4490 = vmul.f32 %v3810, 0.01
    %v4491 = vmul.f32 %v4030, 0.01
    %v4492 = vmul.f32 %v4250, 0.01
    %v4493 = vmul.f32 %v4470, 0.01
    %v4494 = vsel %vm4472, %v2270, %v4483
    %v4495 = vsel %vm4473, %v2490, %v4484
    %v4496 = vsel %vm4474, %v2710, %v4485
    %v4497 = vsel %vm4475, %v2930, %v4486
    %v4498 = vsel %vm4476, %v3150, %v4487
    %v4499 = vsel %vm4477, %v3370, %v4488
    %v4500 = vsel %vm4478, %v3590, %v4489
    %v4501 = vsel %vm4479, %v3810, %v4490
    %v4502 = vsel %vm4480, %v4030, %v4491
    %v4503 = vsel %vm4481, %v4250, %v4492
    %v4504 = vsel %vm4482, %v4470, %v4493
    %v4505 = vld [vmem:[#allocation6] sm:$0xff]
    %v4506 = vld [vmem:[#allocation6 + $0x8] sm:$0xff]
    %v4507 = vld [vmem:[#allocation6 + $0x10] sm:$0xff]
    %v4508 = vld [vmem:[#allocation6 + $0x18] sm:$0xff]
    %v4509 = vld [vmem:[#allocation6 + $0x20] sm:$0xff]
    %v4510 = vld [vmem:[#allocation6 + $0x28] sm:$0xff]
    %v4511 = vld [vmem:[#allocation6 + $0x30] sm:$0xff]
    %v4512 = vld [vmem:[#allocation6 + $0x38] sm:$0xff]
    %v4513 = vld [vmem:[#allocation6 + $0x40] sm:$0xff]
    %v4514 = vld [vmem:[#allocation6 + $0x48] sm:$0xff]
    %v4515 = vld [vmem:[#allocation6 + $0x50] sm:$0xff]
    %v4516 = vld [vmem:[#allocation6 + $0x58] sm:$0xff]
    %v4517 = vld [vmem:[#allocation6 + $0x60] sm:$0xff]
    %v4518 = vld [vmem:[#allocation6 + $0x68] sm:$0xff]
    %v4519 = vld [vmem:[#allocation6 + $0x70] sm:$0xff]
    %v4520 = vld [vmem:[#allocation6 + $0x78] sm:$0xff]
    %v4521 = vld [vmem:[#allocation6 + $0x80] sm:$0xff]
    %v4522 = vld [vmem:[#allocation6 + $0x88] sm:$0xff]
    %v4523 = vld [vmem:[#allocation6 + $0x90] sm:$0xff]
    %v4524 = vld [vmem:[#allocation6 + $0x98] sm:$0xff]
    %v4525 = vld [vmem:[#allocation6 + $0xa0] sm:$0xff]
    %v4526 = vld [vmem:[#allocation6 + $0xa8] sm:$0xff]
    %v4527 = vld [vmem:[#allocation6 + $0xb0] sm:$0xff]
    %v4528 = vld [vmem:[#allocation6 + $0xb8] sm:$0xff]
    %v4529 = vld [vmem:[#allocation6 + $0xc0] sm:$0xff]
    %v4530 = vld [vmem:[#allocation6 + $0xc8] sm:$0xff]
    %v4531 = vld [vmem:[#allocation6 + $0xd0] sm:$0xff]
    %v4532 = vld [vmem:[#allocation6 + $0xd8] sm:$0xff]
    %v4533 = vld [vmem:[#allocation6 + $0xe0] sm:$0xff]
    %v4534 = vld [vmem:[#allocation6 + $0xe8] sm:$0xff]
    %v4535 = vld [vmem:[#allocation6 + $0xf0] sm:$0xff]
    %v4536 = vld [vmem:[#allocation6 + $0xf8] sm:$0xff]
    %v4537 = vld [vmem:[#allocation6 + $0x100] sm:$0xff]
    %v4538 = vld [vmem:[#allocation6 + $0x108] sm:$0xff]
    %v4539 = vld [vmem:[#allocation6 + $0x110] sm:$0xff]
    %v4540 = vld [vmem:[#allocation6 + $0x118] sm:$0xff]
    %v4541 = vld [vmem:[#allocation6 + $0x120] sm:$0xff]
    %v4542 = vld [vmem:[#allocation6 + $0x128] sm:$0xff]
    %v4543 = vld [vmem:[#allocation6 + $0x130] sm:$0xff]
    %v4544 = vld [vmem:[#allocation6 + $0x138] sm:$0xff]
    %v4545 = vld [vmem:[#allocation6 + $0x140] sm:$0xff]
    %v4546 = vld [vmem:[#allocation6 + $0x148] sm:$0xff]
    %v4547 = vld [vmem:[#allocation6 + $0x150] sm:$0xff]
    %v4548 = vld [vmem:[#allocation6 + $0x158] sm:$0xff]
    %v4549 = vld [vmem:[#allocation6 + $0x160] sm:$0xff]
    %v4550 = vld [vmem:[#allocation6 + $0x168] sm:$0xff]
    %v4551 = vld [vmem:[#allocation6 + $0x170] sm:$0xff]
    %v4552 = vld [vmem:[#allocation6 + $0x178] sm:$0xff]
    %v4553 = vld [vmem:[#allocation6 + $0x180] sm:$0xff]
    %v4554 = vld [vmem:[#allocation6 + $0x188] sm:$0xff]
    %v4555 = vld [vmem:[#allocation6 + $0x190] sm:$0xff]
    %v4556 = vld [vmem:[#allocation6 + $0x198] sm:$0xff]
    %v4557 = vld [vmem:[#allocation6 + $0x1a0] sm:$0xff]
    %v4558 = vld [vmem:[#allocation6 + $0x1a8] sm:$0xff]
    %v4559 = vld [vmem:[#allocation6 + $0x1b0] sm:$0xff]
    %v4560 = vld [vmem:[#allocation6 + $0x1b8] sm:$0xff]
    %v4561 = vld [vmem:[#allocation6 + $0x1c0] sm:$0xff]
    %v4562 = vld [vmem:[#allocation6 + $0x1c8] sm:$0xff]
    %v4563 = vld [vmem:[#allocation6 + $0x1d0] sm:$0xff]
    %v4564 = vld [vmem:[#allocation6 + $0x1d8] sm:$0xff]
    %v4565 = vld [vmem:[#allocation6 + $0x1e0] sm:$0xff]
    %v4566 = vld [vmem:[#allocation6 + $0x1e8] sm:$0xff]
    %v4567 = vld [vmem:[#allocation6 + $0x1f0] sm:$0xff]
    %v4568 = vld [vmem:[#allocation6 + $0x1f8] sm:$0xff]
    %v4569 = vld [vmem:[#allocation6 + $0x200] sm:$0xff]
    %v4570 = vld [vmem:[#allocation6 + $0x208] sm:$0xff]
    %v4571 = vld [vmem:[#allocation6 + $0x210] sm:$0xff]
    %v4572 = vld [vmem:[#allocation6 + $0x218] sm:$0xff]
    %v4573 = vld [vmem:[#allocation6 + $0x220] sm:$0xff]
    %v4574 = vld [vmem:[#allocation6 + $0x228] sm:$0xff]
    %v4575 = vld [vmem:[#allocation6 + $0x230] sm:$0xff]
    %v4576 = vld [vmem:[#allocation6 + $0x238] sm:$0xff]
    %v4577 = vld [vmem:[#allocation6 + $0x240] sm:$0xff]
    %v4578 = vld [vmem:[#allocation6 + $0x248] sm:$0xff]
    %v4579 = vld [vmem:[#allocation6 + $0x250] sm:$0xff]
    %v4580 = vld [vmem:[#allocation6 + $0x258] sm:$0xff]
    %v4581 = vld [vmem:[#allocation6 + $0x260] sm:$0xff]
    %v4582 = vld [vmem:[#allocation6 + $0x268] sm:$0xff]
    %v4583 = vld [vmem:[#allocation6 + $0x270] sm:$0xff]
    %v4584 = vld [vmem:[#allocation6 + $0x278] sm:$0xff]
    %v4585 = vld [vmem:[#allocation6 + $0x280] sm:$0xff]
    %v4586 = vld [vmem:[#allocation6 + $0x288] sm:$0xff]
    %v4587 = vld [vmem:[#allocation6 + $0x290] sm:$0xff]
    %v4588 = vld [vmem:[#allocation6 + $0x298] sm:$0xff]
    %v4589 = vld [vmem:[#allocation6 + $0x2a0] sm:$0xff]
    %v4590 = vld [vmem:[#allocation6 + $0x2a8] sm:$0xff]
    %v4591 = vld [vmem:[#allocation6 + $0x2b0] sm:$0xff]
    %v4592 = vld [vmem:[#allocation6 + $0x2b8] sm:$0xff]
    %v4593 = vld [vmem:[#allocation6 + $0x2c0] sm:$0xff]
    %v4594 = vld [vmem:[#allocation6 + $0x2c8] sm:$0xff]
    %v4595 = vld [vmem:[#allocation6 + $0x2d0] sm:$0xff]
    %v4596 = vld [vmem:[#allocation6 + $0x2d8] sm:$0xff]
    %v4597 = vld [vmem:[#allocation6 + $0x2e0] sm:$0xff]
    %v4598 = vld [vmem:[#allocation6 + $0x2e8] sm:$0xff]
    %v4599 = vld [vmem:[#allocation6 + $0x2f0] sm:$0xff]
    %v4600 = vld [vmem:[#allocation6 + $0x2f8] sm:$0xff]
    %v4601 = vld [vmem:[#allocation6 + $0x300] sm:$0xff]
    %v4602 = vld [vmem:[#allocation6 + $0x308] sm:$0xff]
    %v4603 = vld [vmem:[#allocation6 + $0x310] sm:$0xff]
    %v4604 = vld [vmem:[#allocation6 + $0x318] sm:$0xff]
    %v4605 = vld [vmem:[#allocation6 + $0x320] sm:$0xff]
    %v4606 = vld [vmem:[#allocation6 + $0x328] sm:$0xff]
    %v4607 = vld [vmem:[#allocation6 + $0x330] sm:$0xff]
    %v4608 = vld [vmem:[#allocation6 + $0x338] sm:$0xff]
    %v4609 = vld [vmem:[#allocation6 + $0x340] sm:$0xff]
    %v4610 = vld [vmem:[#allocation6 + $0x348] sm:$0xff]
    %v4611 = vld [vmem:[#allocation6 + $0x350] sm:$0xff]
    %v4612 = vld [vmem:[#allocation6 + $0x358] sm:$0xff]
    %v4613 = vld [vmem:[#allocation6 + $0x360] sm:$0xff]
    %v4614 = vld [vmem:[#allocation6 + $0x368] sm:$0xff]
    %v4615 = vld [vmem:[#allocation6 + $0x370] sm:$0xff]
    %v4616 = vld [vmem:[#allocation6 + $0x378] sm:$0xff]
    %v4617 = vld [vmem:[#allocation6 + $0x380] sm:$0xff]
    %v4618 = vld [vmem:[#allocation6 + $0x388] sm:$0xff]
    %v4619 = vld [vmem:[#allocation6 + $0x390] sm:$0xff]
    %v4620 = vld [vmem:[#allocation6 + $0x398] sm:$0xff]
    %v4621 = vld [vmem:[#allocation6 + $0x3a0] sm:$0xff]
    %v4622 = vld [vmem:[#allocation6 + $0x3a8] sm:$0xff]
    %v4623 = vld [vmem:[#allocation6 + $0x3b0] sm:$0xff]
    %v4624 = vld [vmem:[#allocation6 + $0x3b8] sm:$0xff]
    %v4625 = vld [vmem:[#allocation6 + $0x3c0] sm:$0xff]
    %v4626 = vld [vmem:[#allocation6 + $0x3c8] sm:$0xff]
    %v4627 = vld [vmem:[#allocation6 + $0x3d0] sm:$0xff]
    %v4628 = vld [vmem:[#allocation6 + $0x3d8] sm:$0xff]
    %v4629 = vld [vmem:[#allocation6 + $0x3e0] sm:$0xff]
    %v4630 = vld [vmem:[#allocation6 + $0x3e8] sm:$0xff]
    %v4631 = vld [vmem:[#allocation6 + $0x3f0] sm:$0xff]
    %v4632 = vld [vmem:[#allocation6 + $0x3f8] sm:$0xff]
    %v4633 = vld [vmem:[#allocation6 + $0x400] sm:$0xff]
    %v4634 = vld [vmem:[#allocation6 + $0x408] sm:$0xff]
    %v4635 = vld [vmem:[#allocation6 + $0x410] sm:$0xff]
    %v4636 = vld [vmem:[#allocation6 + $0x418] sm:$0xff]
    %v4637 = vld [vmem:[#allocation6 + $0x420] sm:$0xff]
    %v4638 = vld [vmem:[#allocation6 + $0x428] sm:$0xff]
    %v4639 = vld [vmem:[#allocation6 + $0x430] sm:$0xff]
    %v4640 = vld [vmem:[#allocation6 + $0x438] sm:$0xff]
    %v4641 = vld [vmem:[#allocation6 + $0x440] sm:$0xff]
    %v4642 = vld [vmem:[#allocation6 + $0x448] sm:$0xff]
    %v4643 = vld [vmem:[#allocation6 + $0x450] sm:$0xff]
    %v4644 = vld [vmem:[#allocation6 + $0x458] sm:$0xff]
    %v4645 = vld [vmem:[#allocation6 + $0x460] sm:$0xff]
    %v4646 = vld [vmem:[#allocation6 + $0x468] sm:$0xff]
    %v4647 = vld [vmem:[#allocation6 + $0x470] sm:$0xff]
    %v4648 = vld [vmem:[#allocation6 + $0x478] sm:$0xff]
    %v4649 = vld [vmem:[#allocation6 + $0x480] sm:$0xff]
    %v4650 = vld [vmem:[#allocation6 + $0x488] sm:$0xff]
    %v4651 = vld [vmem:[#allocation6 + $0x490] sm:$0xff]
    %v4652 = vld [vmem:[#allocation6 + $0x498] sm:$0xff]
    %v4653 = vld [vmem:[#allocation6 + $0x4a0] sm:$0xff]
    %v4654 = vld [vmem:[#allocation6 + $0x4a8] sm:$0xff]
    %v4655 = vld [vmem:[#allocation6 + $0x4b0] sm:$0xff]
    %v4656 = vld [vmem:[#allocation6 + $0x4b8] sm:$0xff]
    %v4657 = vld [vmem:[#allocation6 + $0x4c0] sm:$0xff]
    %v4658 = vld [vmem:[#allocation6 + $0x4c8] sm:$0xff]
    %v4659 = vld [vmem:[#allocation6 + $0x4d0] sm:$0xff]
    %v4660 = vld [vmem:[#allocation6 + $0x4d8] sm:$0xff]
    %v4661 = vld [vmem:[#allocation6 + $0x4e0] sm:$0xff]
    %v4662 = vld [vmem:[#allocation6 + $0x4e8] sm:$0xff]
    %v4663 = vld [vmem:[#allocation6 + $0x4f0] sm:$0xff]
    %v4664 = vld [vmem:[#allocation6 + $0x4f8] sm:$0xff]
    %v4665 = vld [vmem:[#allocation6 + $0x500] sm:$0xff]
    %v4666 = vld [vmem:[#allocation6 + $0x508] sm:$0xff]
    %v4667 = vld [vmem:[#allocation6 + $0x510] sm:$0xff]
    %v4668 = vld [vmem:[#allocation6 + $0x518] sm:$0xff]
    %v4669 = vld [vmem:[#allocation6 + $0x520] sm:$0xff]
    %v4670 = vld [vmem:[#allocation6 + $0x528] sm:$0xff]
    %v4671 = vld [vmem:[#allocation6 + $0x530] sm:$0xff]
    %v4672 = vld [vmem:[#allocation6 + $0x538] sm:$0xff]
    %v4673 = vld [vmem:[#allocation6 + $0x540] sm:$0xff]
    %v4674 = vld [vmem:[#allocation6 + $0x548] sm:$0xff]
    %v4675 = vld [vmem:[#allocation6 + $0x550] sm:$0xff]
    %v4676 = vld [vmem:[#allocation6 + $0x558] sm:$0xff]
    %v4677 = vld [vmem:[#allocation6 + $0x560] sm:$0xff]
    %v4678 = vld [vmem:[#allocation6 + $0x568] sm:$0xff]
    %v4679 = vld [vmem:[#allocation6 + $0x570] sm:$0xff]
    %v4680 = vld [vmem:[#allocation6 + $0x578] sm:$0xff]
    %v4681 = vld [vmem:[#allocation7] sm:$0x1]
    %v4683 = vperm.slane %v4681, 0
    %4685 = vmatpush.msra.mxu0 %v4520
    %4686 = vmatpush.msra.mxu0 %v4519
    %4687 = vmatpush.msra.mxu0 %v4518
    %4688 = vmatpush.msra.mxu0 %v4517
    %4689 = vmatpush.msra.mxu0 %v4516
    %4690 = vmatpush.msra.mxu0 %v4515
    %4691 = vmatpush.msra.mxu0 %v4514
    %4692 = vmatpush.msra.mxu0 %v4513
    %4693 = vmatpush.msra.mxu0 %v4512
    %4694 = vmatpush.msra.mxu0 %v4511
    %4695 = vmatpush.msra.mxu0 %v4510
    %4696 = vmatpush.msra.mxu0 %v4509
    %4697 = vmatpush.msra.mxu0 %v4508
    %4698 = vmatpush.msra.mxu0 %v4507
    %4699 = vmatpush.msra.mxu0 %v4506
    %4700 = vmatpush.msra.mxu0 %v4505
    %4701 = vmatmul.f32.gmra.mxu0 %v4494
    %v4702 = vpop.f32.mrf.mxu0
    %v4703 = vadd.f32 %v4683, %v4702
    %4704 = vdwg.mxu0
    %4705 = vmatpush.msra.mxu0 %v4536
    %4706 = vmatpush.msra.mxu0 %v4535
    %4707 = vmatpush.msra.mxu0 %v4534
    %4708 = vmatpush.msra.mxu0 %v4533
    %4709 = vmatpush.msra.mxu0 %v4532
    %4710 = vmatpush.msra.mxu0 %v4531
    %4711 = vmatpush.msra.mxu0 %v4530
    %4712 = vmatpush.msra.mxu0 %v4529
    %4713 = vmatpush.msra.mxu0 %v4528
    %4714 = vmatpush.msra.mxu0 %v4527
    %4715 = vmatpush.msra.mxu0 %v4526
    %4716 = vmatpush.msra.mxu0 %v4525
    %4717 = vmatpush.msra.mxu0 %v4524
    %4718 = vmatpush.msra.mxu0 %v4523
    %4719 = vmatpush.msra.mxu0 %v4522
    %4720 = vmatpush.msra.mxu0 %v4521
    %4721 = vmatmul.f32.gmra.mxu0 %v4495
    %v4722 = vpop.f32.mrf.mxu0
    %v4723 = vadd.f32 %v4703, %v4722
    %4724 = vdwg.mxu0
    %4725 = vmatpush.msra.mxu0 %v4552
    %4726 = vmatpush.msra.mxu0 %v4551
    %4727 = vmatpush.msra.mxu0 %v4550
    %4728 = vmatpush.msra.mxu0 %v4549
    %4729 = vmatpush.msra.mxu0 %v4548
    %4730 = vmatpush.msra.mxu0 %v4547
    %4731 = vmatpush.msra.mxu0 %v4546
    %4732 = vmatpush.msra.mxu0 %v4545
    %4733 = vmatpush.msra.mxu0 %v4544
    %4734 = vmatpush.msra.mxu0 %v4543
    %4735 = vmatpush.msra.mxu0 %v4542
    %4736 = vmatpush.msra.mxu0 %v4541
    %4737 = vmatpush.msra.mxu0 %v4540
    %4738 = vmatpush.msra.mxu0 %v4539
    %4739 = vmatpush.msra.mxu0 %v4538
    %4740 = vmatpush.msra.mxu0 %v4537
    %4741 = vmatmul.f32.gmra.mxu0 %v4496
    %v4742 = vpop.f32.mrf.mxu0
    %v4743 = vadd.f32 %v4723, %v4742
    %4744 = vdwg.mxu0
    %4745 = vmatpush.msra.mxu0 %v4568
    %4746 = vmatpush.msra.mxu0 %v4567
    %4747 = vmatpush.msra.mxu0 %v4566
    %4748 = vmatpush.msra.mxu0 %v4565
    %4749 = vmatpush.msra.mxu0 %v4564
    %4750 = vmatpush.msra.mxu0 %v4563
    %4751 = vmatpush.msra.mxu0 %v4562
    %4752 = vmatpush.msra.mxu0 %v4561
    %4753 = vmatpush.msra.mxu0 %v4560
    %4754 = vmatpush.msra.mxu0 %v4559
    %4755 = vmatpush.msra.mxu0 %v4558
    %4756 = vmatpush.msra.mxu0 %v4557
    %4757 = vmatpush.msra.mxu0 %v4556
    %4758 = vmatpush.msra.mxu0 %v4555
    %4759 = vmatpush.msra.mxu0 %v4554
    %4760 = vmatpush.msra.mxu0 %v4553
    %4761 = vmatmul.f32.gmra.mxu0 %v4497
    %v4762 = vpop.f32.mrf.mxu0
    %v4763 = vadd.f32 %v4743, %v4762
    %4764 = vdwg.mxu0
    %4765 = vmatpush.msra.mxu0 %v4584
    %4766 = vmatpush.msra.mxu0 %v4583
    %4767 = vmatpush.msra.mxu0 %v4582
    %4768 = vmatpush.msra.mxu0 %v4581
    %4769 = vmatpush.msra.mxu0 %v4580
    %4770 = vmatpush.msra.mxu0 %v4579
    %4771 = vmatpush.msra.mxu0 %v4578
    %4772 = vmatpush.msra.mxu0 %v4577
    %4773 = vmatpush.msra.mxu0 %v4576
    %4774 = vmatpush.msra.mxu0 %v4575
    %4775 = vmatpush.msra.mxu0 %v4574
    %4776 = vmatpush.msra.mxu0 %v4573
    %4777 = vmatpush.msra.mxu0 %v4572
    %4778 = vmatpush.msra.mxu0 %v4571
    %4779 = vmatpush.msra.mxu0 %v4570
    %4780 = vmatpush.msra.mxu0 %v4569
    %4781 = vmatmul.f32.gmra.mxu0 %v4498
    %v4782 = vpop.f32.mrf.mxu0
    %v4783 = vadd.f32 %v4763, %v4782
    %4784 = vdwg.mxu0
    %4785 = vmatpush.msra.mxu0 %v4600
    %4786 = vmatpush.msra.mxu0 %v4599
    %4787 = vmatpush.msra.mxu0 %v4598
    %4788 = vmatpush.msra.mxu0 %v4597
    %4789 = vmatpush.msra.mxu0 %v4596
    %4790 = vmatpush.msra.mxu0 %v4595
    %4791 = vmatpush.msra.mxu0 %v4594
    %4792 = vmatpush.msra.mxu0 %v4593
    %4793 = vmatpush.msra.mxu0 %v4592
    %4794 = vmatpush.msra.mxu0 %v4591
    %4795 = vmatpush.msra.mxu0 %v4590
    %4796 = vmatpush.msra.mxu0 %v4589
    %4797 = vmatpush.msra.mxu0 %v4588
    %4798 = vmatpush.msra.mxu0 %v4587
    %4799 = vmatpush.msra.mxu0 %v4586
    %4800 = vmatpush.msra.mxu0 %v4585
    %4801 = vmatmul.f32.gmra.mxu0 %v4499
    %v4802 = vpop.f32.mrf.mxu0
    %v4803 = vadd.f32 %v4783, %v4802
    %4804 = vdwg.mxu0
    %4805 = vmatpush.msra.mxu0 %v4616
    %4806 = vmatpush.msra.mxu0 %v4615
    %4807 = vmatpush.msra.mxu0 %v4614
    %4808 = vmatpush.msra.mxu0 %v4613
    %4809 = vmatpush.msra.mxu0 %v4612
    %4810 = vmatpush.msra.mxu0 %v4611
    %4811 = vmatpush.msra.mxu0 %v4610
    %4812 = vmatpush.msra.mxu0 %v4609
    %4813 = vmatpush.msra.mxu0 %v4608
    %4814 = vmatpush.msra.mxu0 %v4607
    %4815 = vmatpush.msra.mxu0 %v4606
    %4816 = vmatpush.msra.mxu0 %v4605
    %4817 = vmatpush.msra.mxu0 %v4604
    %4818 = vmatpush.msra.mxu0 %v4603
    %4819 = vmatpush.msra.mxu0 %v4602
    %4820 = vmatpush.msra.mxu0 %v4601
    %4821 = vmatmul.f32.gmra.mxu0 %v4500
    %v4822 = vpop.f32.mrf.mxu0
    %v4823 = vadd.f32 %v4803, %v4822
    %4824 = vdwg.mxu0
    %4825 = vmatpush.msra.mxu0 %v4632
    %4826 = vmatpush.msra.mxu0 %v4631
    %4827 = vmatpush.msra.mxu0 %v4630
    %4828 = vmatpush.msra.mxu0 %v4629
    %4829 = vmatpush.msra.mxu0 %v4628
    %4830 = vmatpush.msra.mxu0 %v4627
    %4831 = vmatpush.msra.mxu0 %v4626
    %4832 = vmatpush.msra.mxu0 %v4625
    %4833 = vmatpush.msra.mxu0 %v4624
    %4834 = vmatpush.msra.mxu0 %v4623
    %4835 = vmatpush.msra.mxu0 %v4622
    %4836 = vmatpush.msra.mxu0 %v4621
    %4837 = vmatpush.msra.mxu0 %v4620
    %4838 = vmatpush.msra.mxu0 %v4619
    %4839 = vmatpush.msra.mxu0 %v4618
    %4840 = vmatpush.msra.mxu0 %v4617
    %4841 = vmatmul.f32.gmra.mxu0 %v4501
    %v4842 = vpop.f32.mrf.mxu0
    %v4843 = vadd.f32 %v4823, %v4842
    %4844 = vdwg.mxu0
    %4845 = vmatpush.msra.mxu0 %v4648
    %4846 = vmatpush.msra.mxu0 %v4647
    %4847 = vmatpush.msra.mxu0 %v4646
    %4848 = vmatpush.msra.mxu0 %v4645
    %4849 = vmatpush.msra.mxu0 %v4644
    %4850 = vmatpush.msra.mxu0 %v4643
    %4851 = vmatpush.msra.mxu0 %v4642
    %4852 = vmatpush.msra.mxu0 %v4641
    %4853 = vmatpush.msra.mxu0 %v4640
    %4854 = vmatpush.msra.mxu0 %v4639
    %4855 = vmatpush.msra.mxu0 %v4638
    %4856 = vmatpush.msra.mxu0 %v4637
    %4857 = vmatpush.msra.mxu0 %v4636
    %4858 = vmatpush.msra.mxu0 %v4635
    %4859 = vmatpush.msra.mxu0 %v4634
    %4860 = vmatpush.msra.mxu0 %v4633
    %4861 = vmatmul.f32.gmra.mxu0 %v4502
    %v4862 = vpop.f32.mrf.mxu0
    %v4863 = vadd.f32 %v4843, %v4862
    %4864 = vdwg.mxu0
    %4865 = vmatpush.msra.mxu0 %v4664
    %4866 = vmatpush.msra.mxu0 %v4663
    %4867 = vmatpush.msra.mxu0 %v4662
    %4868 = vmatpush.msra.mxu0 %v4661
    %4869 = vmatpush.msra.mxu0 %v4660
    %4870 = vmatpush.msra.mxu0 %v4659
    %4871 = vmatpush.msra.mxu0 %v4658
    %4872 = vmatpush.msra.mxu0 %v4657
    %4873 = vmatpush.msra.mxu0 %v4656
    %4874 = vmatpush.msra.mxu0 %v4655
    %4875 = vmatpush.msra.mxu0 %v4654
    %4876 = vmatpush.msra.mxu0 %v4653
    %4877 = vmatpush.msra.mxu0 %v4652
    %4878 = vmatpush.msra.mxu0 %v4651
    %4879 = vmatpush.msra.mxu0 %v4650
    %4880 = vmatpush.msra.mxu0 %v4649
    %4881 = vmatmul.f32.gmra.mxu0 %v4503
    %v4882 = vpop.f32.mrf.mxu0
    %v4883 = vadd.f32 %v4863, %v4882
    %4884 = vdwg.mxu0
    %4885 = vmatpush.msra.mxu0 %v4680
    %4886 = vmatpush.msra.mxu0 %v4679
    %4887 = vmatpush.msra.mxu0 %v4678
    %4888 = vmatpush.msra.mxu0 %v4677
    %4889 = vmatpush.msra.mxu0 %v4676
    %4890 = vmatpush.msra.mxu0 %v4675
    %4891 = vmatpush.msra.mxu0 %v4674
    %4892 = vmatpush.msra.mxu0 %v4673
    %4893 = vmatpush.msra.mxu0 %v4672
    %4894 = vmatpush.msra.mxu0 %v4671
    %4895 = vmatpush.msra.mxu0 %v4670
    %4896 = vmatpush.msra.mxu0 %v4669
    %4897 = vmatpush.msra.mxu0 %v4668
    %4898 = vmatpush.msra.mxu0 %v4667
    %4899 = vmatpush.msra.mxu0 %v4666
    %4900 = vmatpush.msra.mxu0 %v4665
    %4901 = vmatmul.f32.gmra.mxu0 %v4504
    %v4902 = vpop.f32.mrf.mxu0
    %v4903 = vadd.f32 %v4883, %v4902
    %4904 = vdwg.mxu0
    %v4905 = vtanh.pop %v4903
    %4906 = vst [vmem:[%s5] sm:$0xff] %v4905
    // Predicated region
    $region38: #{valence_arousal.1} parent=1 // pred_check
      _
    $region39: #{valence_arousal.1} parent=1 // pred_check_branch
      %4908 = sbr.rel (0) target = $region41
    $region40: #{valence_arousal.1} parent=1 // pred_region
      _
    $region41: #{valence_arousal.1} parent=1 // pred_fallthru
      _
    // Predicated region
    $region42: #{valence_arousal.1} parent=1 // pred_check
      _
    $region43: #{valence_arousal.1} parent=1 // pred_check_branch
      %4910 = sbr.rel (0) target = $region45
    $region44: #{valence_arousal.1} parent=1 // pred_region
      _
    $region45: #{valence_arousal.1} parent=1 // pred_fallthru
      _
    %4911 = vsyncpa [#allocation3], 1
    %4912 = vsyncpa [#allocation5], 1
    %4913 = vsyncpa [#allocation8], 1

</llo_original>
